<compile_context>
chip_gen: v7x
topology: tpu7x:2x2x1
jax: 0.10.0
libtpu: 0.0.40
codegen_flags: <defaults>
</compile_context>

<pallas_src>
import functools

import jax
import jax.numpy as jnp
from jax import lax
from jax.experimental import pallas as pl
from jax.experimental.pallas import tpu as pltpu

# ----------------------------- model sizes (small, synthetic) -----------------------------
B, T, F_DIM = 2, 8, 64   # batch, #frames, frame-feature dim
H = 32                   # GRU hidden size (encoder & decoder)
DE = 32                  # token embedding dim
V = 48                   # vocab size
L = 6                    # decode length
BOS = 1                  # <BOS> token id

H3 = 3 * H

# -------- packed parameter buffer layout (rows of the [R96, 3H] f32 pack) --------
_R_W_EFF = 0                      # [F, 3H]   Wc @ Wih               (encoder input proj)
_R_WHH_E = _R_W_EFF + F_DIM       # [H, 3H]   encoder W_hh
_R_EMB   = _R_WHH_E + H           # [V, 3H]   E @ W_ie + b_ih_dec    (token gate weights)
_R_WIC   = _R_EMB + V             # [H, 3H]   decoder W_ih (context part)
_R_WHH_D = _R_WIC + H             # [H, 3H]   decoder W_hh
_R_B_EFF = _R_WHH_D + H           # [1, 3H]   bc @ Wih + b_ih_enc    (8-row aligned slot)
_R_BHH_E = _R_B_EFF + 8           # [1, 3H]   encoder b_hh
_R_BHH_D = _R_BHH_E + 8           # [1, 3H]   decoder b_hh
_R96 = _R_BHH_D + 8               # 232 rows total
_RWV = H + 8                      # second pack: rows 0..H-1 = W_out, row H = b_out


# ------------------------------ fused encoder+decoder kernel ------------------------------
def seq2seq_kernel(feats_ref, pack_ref, wv_ref, *rest, teacher_forcing):
    if teacher_forcing:
        tgt_ref, logp_ref, pred_ref, enc_scr = rest
    else:
        logp_ref, pred_ref, enc_scr = rest
    f32 = jnp.float32

    # ------------------------- unpack precomputed parameters -------------------------
    w_eff  = pack_ref[_R_W_EFF:_R_W_EFF + F_DIM, :]    # [F, 3H]
    whh_e  = pack_ref[_R_WHH_E:_R_WHH_E + H, :]        # [H, 3H]
    emb_gw = pack_ref[_R_EMB:_R_EMB + V, :]            # [V, 3H]  (E@W_ie + b_ih_dec folded)
    wic    = pack_ref[_R_WIC:_R_WIC + H, :]            # [H, 3H]
    whh_d  = pack_ref[_R_WHH_D:_R_WHH_D + H, :]        # [H, 3H]
    b_eff  = pack_ref[_R_B_EFF:_R_B_EFF + 1, :]        # [1, 3H]
    bhh_e  = pack_ref[_R_BHH_E:_R_BHH_E + 1, :]        # [1, 3H]
    bhh_d  = pack_ref[_R_BHH_D:_R_BHH_D + 1, :]        # [1, 3H]
    wout   = wv_ref[0:H, :]                            # [H, V]
    bout   = wv_ref[H:H + 1, :]                        # [1, V]

    # ---------------------------------- encoder ----------------------------------
    feats = feats_ref[0]                                                   # [T, F]
    # all T input-gate rows in one matmul (compression folded into W_ih)
    gi_all = jnp.dot(feats, w_eff, preferred_element_type=f32) + b_eff     # [T, 3H]

    h = jnp.zeros((1, H), f32)
    for t in range(T):                                                     # unrolled
        gi_t = gi_all[t:t + 1, :]
        gh = jnp.dot(h, whh_e, preferred_element_type=f32) + bhh_e
        r = jax.nn.sigmoid(gi_t[:, :H] + gh[:, :H])
        z = jax.nn.sigmoid(gi_t[:, H:2 * H] + gh[:, H:2 * H])
        n = jnp.tanh(gi_t[:, 2 * H:] + r * gh[:, 2 * H:])
        h = (1.0 - z) * n + z * h
        enc_scr[t:t + 1, :] = h                                            # off the chain

    # ----------------------- decoder prep (off the per-step chain) -----------------------
    enc = enc_scr[...]                                                     # [T, H]
    enc_wic = jnp.dot(enc, wic, preferred_element_type=f32)                # [T, 3H]  ctx fold
    # fused per-step weight: one h @ w_big gives GRU hidden gates, previous-step logits,
    # and this step's attention scores
    w_big = jnp.concatenate([whh_d, wout, jnp.transpose(enc)], axis=1)     # [H, 3H+V+T]

    tok_iota = lax.broadcasted_iota(jnp.int32, (1, V), 1)
    lane_L = lax.broadcasted_iota(jnp.int32, (1, L), 1)
    row_LV = lax.broadcasted_iota(jnp.int32, (L, V), 0)

    if teacher_forcing:
        # fed tokens known up front: BOS, tgt[0], ..., tgt[L-2]  -> one matmul for all steps
        tgt = tgt_ref[0]                                                   # [1, L] int32
        fed_rows = [(tok_iota == BOS).astype(f32)]
        for l in range(1, L):
            fed_rows.append((tok_iota == tgt[:, l - 1:l]).astype(f32))
        fed_oh = jnp.concatenate(fed_rows, axis=0)                         # [L, V]
        gi_tok_all = jnp.dot(fed_oh, emb_gw, preferred_element_type=f32)   # [L, 3H] (bias folded)
    else:
        prev_oh = (tok_iota == BOS).astype(f32)                            # <BOS> one-hot

    lp_all = jnp.zeros((L, V), f32)
    pred_acc = jnp.zeros((1, L), jnp.int32)

    def emit(step, logits, lp_all, pred_acc):
        """log_softmax + greedy argmax for one decode step (register accumulation)."""
        lmax = jnp.max(logits, axis=-1, keepdims=True)
        lse = lmax + jnp.log(jnp.sum(jnp.exp(logits - lmax), axis=-1, keepdims=True))
        lp_all = jnp.where(row_LV == step, logits - lse, lp_all)
        # greedy argmax (min index attaining the max, PyTorch-style tie-break)
        pred = jnp.min(jnp.where(logits == lmax, tok_iota, V), axis=-1, keepdims=True)
        pred_acc = jnp.where(lane_L == step, pred, pred_acc)
        return lp_all, pred_acc, pred

    # ---------------------------------- decode loop ----------------------------------
    for l in range(L):                                                     # unrolled
        big = jnp.dot(h, w_big, preferred_element_type=f32)               # [1, 3H+V+T]
        gh = big[:, :H3] + bhh_d                                           # GRU hidden gates
        scores = big[:, H3 + V:]                                           # [1, T] attention

        if l > 0:                                                          # previous step's logits
            logits_prev = big[:, H3:H3 + V] + bout
            lp_all, pred_acc, pred_prev = emit(l - 1, logits_prev, lp_all, pred_acc)
            if not teacher_forcing:
                prev_oh = (tok_iota == pred_prev).astype(f32)

        # attention with deferred normalization (EUP reciprocal overlaps the MXU matmul)
        m = jnp.max(scores, axis=-1, keepdims=True)
        ew = jnp.exp(scores - m)
        inv = pl.reciprocal(jnp.sum(ew, axis=-1, keepdims=True), approx=True)
        gi_attn = jnp.dot(ew, enc_wic, preferred_element_type=f32) * inv   # [1, 3H]

        if teacher_forcing:
            gi = gi_tok_all[l:l + 1, :] + gi_attn
        else:
            gi = jnp.dot(prev_oh, emb_gw, preferred_element_type=f32) + gi_attn

        r = jax.nn.sigmoid(gi[:, :H] + gh[:, :H])
        z = jax.nn.sigmoid(gi[:, H:2 * H] + gh[:, H:2 * H])
        n = jnp.tanh(gi[:, 2 * H:] + r * gh[:, 2 * H:])
        h = (1.0 - z) * n + z * h

    # last step's logits (one extra matmul after the loop)
    logits_last = jnp.dot(h, wout, preferred_element_type=f32) + bout
    lp_all, pred_acc, _ = emit(L - 1, logits_last, lp_all, pred_acc)

    # single dense stores
    logp_ref[0] = lp_all                                                   # [L, V]
    pred_ref[0] = pred_acc                                                 # [1, L]


# ----------------------------------- wrapper ---------------------------------------
def run_models(feats, packed_params, targets=None):
    """One pallas_call, grid over the (independent) batch rows."""
    pack96, wout_pack = packed_params
    teacher_forcing = targets is not None

    inputs = [feats.astype(jnp.float32), pack96, wout_pack]
    in_specs = [
        pl.BlockSpec((1, T, F_DIM), lambda b: (b, 0, 0)),
        pl.BlockSpec((_R96, H3), lambda b: (0, 0)),
        pl.BlockSpec((_RWV, V), lambda b: (0, 0)),
    ]
    if teacher_forcing:
        inputs.append(targets.astype(jnp.int32).reshape(B, 1, L))
        in_specs.append(pl.BlockSpec((1, 1, L), lambda b: (b, 0, 0)))

    kernel = functools.partial(seq2seq_kernel, teacher_forcing=teacher_forcing)
    logp, preds = pl.pallas_call(
        kernel,
        grid=(B,),
        in_specs=in_specs,
        out_specs=(pl.BlockSpec((1, L, V), lambda b: (b, 0, 0)),
                   pl.BlockSpec((1, 1, L), lambda b: (b, 0, 0))),
        out_shape=(jax.ShapeDtypeStruct((B, L, V), jnp.float32),   # seq_logProb  [B, L, V]
                   jax.ShapeDtypeStruct((B, 1, L), jnp.int32)),    # predictions
        scratch_shapes=[pltpu.VMEM((T, H), jnp.float32)],          # encoder outputs
        compiler_params=pltpu.CompilerParams(dimension_semantics=("parallel",)),
    )(*inputs)
    return logp, preds.reshape(B, L)


def prepare_params(enc_params, dec_params):
    """Parameter-only fusions, done ONCE at init, packed into two lane-friendly buffers."""
    wc, bc, wih, bih_e, whh_e, bhh_e = enc_params
    emb, wie, wic, bih_d, whh_d, bhh_d, wout, bout = dec_params

    w_eff = jnp.dot(wc, wih)                       # [F, 3H]  compression folded into W_ih
    b_eff = jnp.dot(bc, wih) + bih_e               # [1, 3H]
    emb_gate_wb = jnp.dot(emb, wie) + bih_d        # [V, 3H]  embedding + b_ih folded (one-hot rows)

    def pad_rows(x, rows):
        return jnp.pad(x, ((0, rows - x.shape[0]), (0, 0)))

    pack96 = jnp.concatenate([
        w_eff,                     # rows   0- 63
        whh_e,                     # rows  64- 95
        emb_gate_wb,               # rows  96-143
        wic,                       # rows 144-175
        whh_d,                     # rows 176-207
        pad_rows(b_eff, 8),        # rows 208-215
        pad_rows(bhh_e, 8),        # rows 216-223
        pad_rows(bhh_d, 8),        # rows 224-231
    ], axis=0).astype(jnp.float32)                                   # [232, 96]
    wout_pack = jnp.concatenate([wout, pad_rows(bout, 8)], axis=0).astype(jnp.float32)  # [40, 48]
    return pack96, wout_pack


class Models:
    def __init__(self, enc_params, dec_params):
        self.packed_params = prepare_params(enc_params, dec_params)

    def forward(self, feats, mode, target_sentences=None, tr_steps=None):
        if mode == 'train':
            return run_models(feats, self.packed_params, targets=target_sentences)
        if mode == 'inference':
            return run_models(feats, self.packed_params, targets=None)
        raise ValueError(mode)


def init_params(key):
    ks = jax.random.split(key, 14)
    s = 0.1
    enc = (
        jax.random.normal(ks[0], (F_DIM, H), jnp.float32) * s,    # compress W
        jax.random.normal(ks[1], (1, H), jnp.float32) * s,        # compress b
        jax.random.normal(ks[2], (H, 3 * H), jnp.float32) * s,    # GRU W_ih
        jax.random.normal(ks[3], (1, 3 * H), jnp.float32) * s,    # GRU b_ih
        jax.random.normal(ks[4], (H, 3 * H), jnp.float32) * s,    # GRU W_hh
        jax.random.normal(ks[5], (1, 3 * H), jnp.float32) * s,    # GRU b_hh
    )
    dec = (
        jax.random.normal(ks[6], (V, DE), jnp.float32) * s,       # embedding table
        jax.random.normal(ks[7], (DE, 3 * H), jnp.float32) * s,   # W_ih (embedding part)
        jax.random.normal(ks[8], (H, 3 * H), jnp.float32) * s,    # W_ih (context part)
        jax.random.normal(ks[9], (1, 3 * H), jnp.float32) * s,    # b_ih
        jax.random.normal(ks[10], (H, 3 * H), jnp.float32) * s,   # W_hh
        jax.random.normal(ks[11], (1, 3 * H), jnp.float32) * s,   # b_hh
        jax.random.normal(ks[12], (H, V), jnp.float32) * s,       # output proj W
        jax.random.normal(ks[13], (1, V), jnp.float32) * s,       # output proj b
    )
    return enc, dec


if __name__ == "__main__":
    key = jax.random.PRNGKey(0)
    pkey, fkey, tkey = jax.random.split(key, 3)

    enc_params, dec_params = init_params(pkey)
    model = Models(enc_params, dec_params)

    feats = jax.random.normal(fkey, (B, T, F_DIM), jnp.float32)

    # inference mode (greedy decoding)
    logp_inf, preds_inf = model.forward(feats, 'inference')
    jax.block_until_ready((logp_inf, preds_inf))
    assert logp_inf.shape == (B, L, V) and preds_inf.shape == (B, L)

    # train mode (teacher forcing)
    targets = jax.random.randint(tkey, (B, L), 0, V)
    logp_tr, preds_tr = model.forward(feats, 'train', target_sentences=targets)
    jax.block_until_ready((logp_tr, preds_tr))
    assert logp_tr.shape == (B, L, V) and preds_tr.shape == (B, L)

    print("KERNEL_OK")
</pallas_src>

<mosaic_0001>
module attributes {stable_mosaic.version = 11 : i64} {
  func.func @seq2seq_kernel(%arg0: i32, %arg1: memref<1x8x64xf32, #tpu.memory_space<vmem>>, %arg2: memref<232x96xf32, #tpu.memory_space<vmem>>, %arg3: memref<40x48xf32, #tpu.memory_space<vmem>>, %arg4: memref<1x6x48xf32, #tpu.memory_space<vmem>>, %arg5: memref<1x1x6xi32, #tpu.memory_space<vmem>>, %arg6: memref<8x32xf32, #tpu.memory_space<vmem>>) attributes {dimension_semantics = [#tpu.dimension_semantics<parallel>], iteration_bounds = array<i64: 2>, scalar_prefetch = 0 : i64, scratch_operands = 1 : i64, tpu.core_type = #tpu.core_type<tc>, window_params = [{transform_indices = @transform_0, window_bounds = array<i64: 1, 8, 64>}, {pipeline_mode = #tpu.pipeline_mode<synchronous>, transform_indices = @transform_1, window_bounds = array<i64: 232, 96>}, {pipeline_mode = #tpu.pipeline_mode<synchronous>, transform_indices = @transform_2, window_bounds = array<i64: 40, 48>}, {transform_indices = @transform_3, window_bounds = array<i64: 1, 6, 48>}, {transform_indices = @transform_4, window_bounds = array<i64: 1, 1, 6>}]} {
    %c0 = arith.constant 0 : index
    %c0_0 = arith.constant 0 : index
    %0 = vector.load %arg2[%c0, %c0_0] : memref<232x96xf32, #tpu.memory_space<vmem>>, vector<64x96xf32>
    %c64 = arith.constant 64 : index
    %c0_1 = arith.constant 0 : index
    %1 = vector.load %arg2[%c64, %c0_1] : memref<232x96xf32, #tpu.memory_space<vmem>>, vector<32x96xf32>
    %c96 = arith.constant 96 : index
    %c0_2 = arith.constant 0 : index
    %2 = vector.load %arg2[%c96, %c0_2] : memref<232x96xf32, #tpu.memory_space<vmem>>, vector<48x96xf32>
    %c144 = arith.constant 144 : index
    %c0_3 = arith.constant 0 : index
    %3 = vector.load %arg2[%c144, %c0_3] : memref<232x96xf32, #tpu.memory_space<vmem>>, vector<32x96xf32>
    %c176 = arith.constant 176 : index
    %c0_4 = arith.constant 0 : index
    %4 = vector.load %arg2[%c176, %c0_4] : memref<232x96xf32, #tpu.memory_space<vmem>>, vector<32x96xf32>
    %c208 = arith.constant 208 : index
    %c0_5 = arith.constant 0 : index
    %5 = vector.load %arg2[%c208, %c0_5] : memref<232x96xf32, #tpu.memory_space<vmem>>, vector<1x96xf32>
    %c216 = arith.constant 216 : index
    %c0_6 = arith.constant 0 : index
    %6 = vector.load %arg2[%c216, %c0_6] : memref<232x96xf32, #tpu.memory_space<vmem>>, vector<1x96xf32>
    %c224 = arith.constant 224 : index
    %c0_7 = arith.constant 0 : index
    %7 = vector.load %arg2[%c224, %c0_7] : memref<232x96xf32, #tpu.memory_space<vmem>>, vector<1x96xf32>
    %c0_8 = arith.constant 0 : index
    %c0_9 = arith.constant 0 : index
    %8 = vector.load %arg3[%c0_8, %c0_9] : memref<40x48xf32, #tpu.memory_space<vmem>>, vector<32x48xf32>
    %c32 = arith.constant 32 : index
    %c0_10 = arith.constant 0 : index
    %9 = vector.load %arg3[%c32, %c0_10] : memref<40x48xf32, #tpu.memory_space<vmem>>, vector<1x48xf32>
    %c0_11 = arith.constant 0 : index
    %c0_12 = arith.constant 0 : index
    %c0_13 = arith.constant 0 : index
    %10 = vector.load %arg1[%c0_11, %c0_12, %c0_13] : memref<1x8x64xf32, #tpu.memory_space<vmem>>, vector<1x8x64xf32>
    %11 = vector.shape_cast %10 : vector<1x8x64xf32> to vector<8x64xf32>
    %cst = arith.constant dense<0.000000e+00> : vector<8x96xf32>
    %12 = tpu.matmul %11, %0, %cst {dimension_numbers = #tpu.dot_dimension_numbers<[1], [0], [0], [1], [0, 0, 1, 1], [], []>} : vector<8x64xf32>, vector<64x96xf32>, vector<8x96xf32> -> vector<8x96xf32>
    %13 = vector.broadcast %5 : vector<1x96xf32> to vector<8x96xf32>
    %14 = arith.addf %12, %13 : vector<8x96xf32>
    %cst_14 = arith.constant 0.000000e+00 : f32
    %15 = vector.broadcast %cst_14 : f32 to vector<1x32xf32>
    %16 = vector.extract_strided_slice %14 {offsets = [0, 0], sizes = [1, 96], strides = [1, 1]} : vector<8x96xf32> to vector<1x96xf32>
    %cst_15 = arith.constant dense<0.000000e+00> : vector<1x96xf32>
    %17 = tpu.matmul %15, %1, %cst_15 {dimension_numbers = #tpu.dot_dimension_numbers<[1], [0], [0], [1], [0, 0, 1, 1], [], []>} : vector<1x32xf32>, vector<32x96xf32>, vector<1x96xf32> -> vector<1x96xf32>
    %18 = arith.addf %17, %6 : vector<1x96xf32>
    %19 = vector.extract_strided_slice %16 {offsets = [0, 0], sizes = [1, 32], strides = [1, 1]} : vector<1x96xf32> to vector<1x32xf32>
    %20 = vector.extract_strided_slice %18 {offsets = [0, 0], sizes = [1, 32], strides = [1, 1]} : vector<1x96xf32> to vector<1x32xf32>
    %21 = arith.addf %19, %20 : vector<1x32xf32>
    %22 = arith.negf %21 : vector<1x32xf32>
    %23 = math.exp %22 : vector<1x32xf32>
    %cst_16 = arith.constant 1.000000e+00 : f32
    %24 = vector.broadcast %cst_16 : f32 to vector<1x32xf32>
    %25 = arith.addf %24, %23 : vector<1x32xf32>
    %26 = arith.divf %24, %25 : vector<1x32xf32>
    %27 = vector.extract_strided_slice %16 {offsets = [0, 32], sizes = [1, 32], strides = [1, 1]} : vector<1x96xf32> to vector<1x32xf32>
    %28 = vector.extract_strided_slice %18 {offsets = [0, 32], sizes = [1, 32], strides = [1, 1]} : vector<1x96xf32> to vector<1x32xf32>
    %29 = arith.addf %27, %28 : vector<1x32xf32>
    %30 = arith.negf %29 : vector<1x32xf32>
    %31 = math.exp %30 : vector<1x32xf32>
    %cst_17 = arith.constant 1.000000e+00 : f32
    %32 = vector.broadcast %cst_17 : f32 to vector<1x32xf32>
    %33 = arith.addf %32, %31 : vector<1x32xf32>
    %34 = arith.divf %32, %33 : vector<1x32xf32>
    %35 = vector.extract_strided_slice %16 {offsets = [0, 64], sizes = [1, 32], strides = [1, 1]} : vector<1x96xf32> to vector<1x32xf32>
    %36 = vector.extract_strided_slice %18 {offsets = [0, 64], sizes = [1, 32], strides = [1, 1]} : vector<1x96xf32> to vector<1x32xf32>
    %37 = arith.mulf %26, %36 : vector<1x32xf32>
    %38 = arith.addf %35, %37 : vector<1x32xf32>
    %39 = math.tanh %38 : vector<1x32xf32>
    %cst_18 = arith.constant 1.000000e+00 : f32
    %40 = vector.broadcast %cst_18 : f32 to vector<1x32xf32>
    %41 = arith.subf %40, %34 : vector<1x32xf32>
    %42 = arith.mulf %41, %39 : vector<1x32xf32>
    %43 = arith.mulf %34, %15 : vector<1x32xf32>
    %44 = arith.addf %42, %43 : vector<1x32xf32>
    %c0_19 = arith.constant 0 : index
    %c0_20 = arith.constant 0 : index
    %45 = vector.load %arg6[%c0_19, %c0_20] : memref<8x32xf32, #tpu.memory_space<vmem>>, vector<1x32xf32>
    tpu.vector_store %arg6[%c0_19, %c0_20], %44 {strides = array<i32>} : memref<8x32xf32, #tpu.memory_space<vmem>>, vector<1x32xf32>,
    %46 = vector.extract_strided_slice %14 {offsets = [1, 0], sizes = [1, 96], strides = [1, 1]} : vector<8x96xf32> to vector<1x96xf32>
    %cst_21 = arith.constant dense<0.000000e+00> : vector<1x96xf32>
    %47 = tpu.matmul %44, %1, %cst_21 {dimension_numbers = #tpu.dot_dimension_numbers<[1], [0], [0], [1], [0, 0, 1, 1], [], []>} : vector<1x32xf32>, vector<32x96xf32>, vector<1x96xf32> -> vector<1x96xf32>
    %48 = arith.addf %47, %6 : vector<1x96xf32>
    %49 = vector.extract_strided_slice %46 {offsets = [0, 0], sizes = [1, 32], strides = [1, 1]} : vector<1x96xf32> to vector<1x32xf32>
    %50 = vector.extract_strided_slice %48 {offsets = [0, 0], sizes = [1, 32], strides = [1, 1]} : vector<1x96xf32> to vector<1x32xf32>
    %51 = arith.addf %49, %50 : vector<1x32xf32>
    %52 = arith.negf %51 : vector<1x32xf32>
    %53 = math.exp %52 : vector<1x32xf32>
    %cst_22 = arith.constant 1.000000e+00 : f32
    %54 = vector.broadcast %cst_22 : f32 to vector<1x32xf32>
    %55 = arith.addf %54, %53 : vector<1x32xf32>
    %56 = arith.divf %54, %55 : vector<1x32xf32>
    %57 = vector.extract_strided_slice %46 {offsets = [0, 32], sizes = [1, 32], strides = [1, 1]} : vector<1x96xf32> to vector<1x32xf32>
    %58 = vector.extract_strided_slice %48 {offsets = [0, 32], sizes = [1, 32], strides = [1, 1]} : vector<1x96xf32> to vector<1x32xf32>
    %59 = arith.addf %57, %58 : vector<1x32xf32>
    %60 = arith.negf %59 : vector<1x32xf32>
    %61 = math.exp %60 : vector<1x32xf32>
    %cst_23 = arith.constant 1.000000e+00 : f32
    %62 = vector.broadcast %cst_23 : f32 to vector<1x32xf32>
    %63 = arith.addf %62, %61 : vector<1x32xf32>
    %64 = arith.divf %62, %63 : vector<1x32xf32>
    %65 = vector.extract_strided_slice %46 {offsets = [0, 64], sizes = [1, 32], strides = [1, 1]} : vector<1x96xf32> to vector<1x32xf32>
    %66 = vector.extract_strided_slice %48 {offsets = [0, 64], sizes = [1, 32], strides = [1, 1]} : vector<1x96xf32> to vector<1x32xf32>
    %67 = arith.mulf %56, %66 : vector<1x32xf32>
    %68 = arith.addf %65, %67 : vector<1x32xf32>
    %69 = math.tanh %68 : vector<1x32xf32>
    %cst_24 = arith.constant 1.000000e+00 : f32
    %70 = vector.broadcast %cst_24 : f32 to vector<1x32xf32>
    %71 = arith.subf %70, %64 : vector<1x32xf32>
    %72 = arith.mulf %71, %69 : vector<1x32xf32>
    %73 = arith.mulf %64, %44 : vector<1x32xf32>
    %74 = arith.addf %72, %73 : vector<1x32xf32>
    %c1 = arith.constant 1 : index
    %c0_25 = arith.constant 0 : index
    %75 = vector.load %arg6[%c1, %c0_25] : memref<8x32xf32, #tpu.memory_space<vmem>>, vector<1x32xf32>
    tpu.vector_store %arg6[%c1, %c0_25], %74 {strides = array<i32>} : memref<8x32xf32, #tpu.memory_space<vmem>>, vector<1x32xf32>,
    %76 = vector.extract_strided_slice %14 {offsets = [2, 0], sizes = [1, 96], strides = [1, 1]} : vector<8x96xf32> to vector<1x96xf32>
    %cst_26 = arith.constant dense<0.000000e+00> : vector<1x96xf32>
    %77 = tpu.matmul %74, %1, %cst_26 {dimension_numbers = #tpu.dot_dimension_numbers<[1], [0], [0], [1], [0, 0, 1, 1], [], []>} : vector<1x32xf32>, vector<32x96xf32>, vector<1x96xf32> -> vector<1x96xf32>
    %78 = arith.addf %77, %6 : vector<1x96xf32>
    %79 = vector.extract_strided_slice %76 {offsets = [0, 0], sizes = [1, 32], strides = [1, 1]} : vector<1x96xf32> to vector<1x32xf32>
    %80 = vector.extract_strided_slice %78 {offsets = [0, 0], sizes = [1, 32], strides = [1, 1]} : vector<1x96xf32> to vector<1x32xf32>
    %81 = arith.addf %79, %80 : vector<1x32xf32>
    %82 = arith.negf %81 : vector<1x32xf32>
    %83 = math.exp %82 : vector<1x32xf32>
    %cst_27 = arith.constant 1.000000e+00 : f32
    %84 = vector.broadcast %cst_27 : f32 to vector<1x32xf32>
    %85 = arith.addf %84, %83 : vector<1x32xf32>
    %86 = arith.divf %84, %85 : vector<1x32xf32>
    %87 = vector.extract_strided_slice %76 {offsets = [0, 32], sizes = [1, 32], strides = [1, 1]} : vector<1x96xf32> to vector<1x32xf32>
    %88 = vector.extract_strided_slice %78 {offsets = [0, 32], sizes = [1, 32], strides = [1, 1]} : vector<1x96xf32> to vector<1x32xf32>
    %89 = arith.addf %87, %88 : vector<1x32xf32>
    %90 = arith.negf %89 : vector<1x32xf32>
    %91 = math.exp %90 : vector<1x32xf32>
    %cst_28 = arith.constant 1.000000e+00 : f32
    %92 = vector.broadcast %cst_28 : f32 to vector<1x32xf32>
    %93 = arith.addf %92, %91 : vector<1x32xf32>
    %94 = arith.divf %92, %93 : vector<1x32xf32>
    %95 = vector.extract_strided_slice %76 {offsets = [0, 64], sizes = [1, 32], strides = [1, 1]} : vector<1x96xf32> to vector<1x32xf32>
    %96 = vector.extract_strided_slice %78 {offsets = [0, 64], sizes = [1, 32], strides = [1, 1]} : vector<1x96xf32> to vector<1x32xf32>
    %97 = arith.mulf %86, %96 : vector<1x32xf32>
    %98 = arith.addf %95, %97 : vector<1x32xf32>
    %99 = math.tanh %98 : vector<1x32xf32>
    %cst_29 = arith.constant 1.000000e+00 : f32
    %100 = vector.broadcast %cst_29 : f32 to vector<1x32xf32>
    %101 = arith.subf %100, %94 : vector<1x32xf32>
    %102 = arith.mulf %101, %99 : vector<1x32xf32>
    %103 = arith.mulf %94, %74 : vector<1x32xf32>
    %104 = arith.addf %102, %103 : vector<1x32xf32>
    %c2 = arith.constant 2 : index
    %c0_30 = arith.constant 0 : index
    %105 = vector.load %arg6[%c2, %c0_30] : memref<8x32xf32, #tpu.memory_space<vmem>>, vector<1x32xf32>
    tpu.vector_store %arg6[%c2, %c0_30], %104 {strides = array<i32>} : memref<8x32xf32, #tpu.memory_space<vmem>>, vector<1x32xf32>,
    %106 = vector.extract_strided_slice %14 {offsets = [3, 0], sizes = [1, 96], strides = [1, 1]} : vector<8x96xf32> to vector<1x96xf32>
    %cst_31 = arith.constant dense<0.000000e+00> : vector<1x96xf32>
    %107 = tpu.matmul %104, %1, %cst_31 {dimension_numbers = #tpu.dot_dimension_numbers<[1], [0], [0], [1], [0, 0, 1, 1], [], []>} : vector<1x32xf32>, vector<32x96xf32>, vector<1x96xf32> -> vector<1x96xf32>
    %108 = arith.addf %107, %6 : vector<1x96xf32>
    %109 = vector.extract_strided_slice %106 {offsets = [0, 0], sizes = [1, 32], strides = [1, 1]} : vector<1x96xf32> to vector<1x32xf32>
    %110 = vector.extract_strided_slice %108 {offsets = [0, 0], sizes = [1, 32], strides = [1, 1]} : vector<1x96xf32> to vector<1x32xf32>
    %111 = arith.addf %109, %110 : vector<1x32xf32>
    %112 = arith.negf %111 : vector<1x32xf32>
    %113 = math.exp %112 : vector<1x32xf32>
    %cst_32 = arith.constant 1.000000e+00 : f32
    %114 = vector.broadcast %cst_32 : f32 to vector<1x32xf32>
    %115 = arith.addf %114, %113 : vector<1x32xf32>
    %116 = arith.divf %114, %115 : vector<1x32xf32>
    %117 = vector.extract_strided_slice %106 {offsets = [0, 32], sizes = [1, 32], strides = [1, 1]} : vector<1x96xf32> to vector<1x32xf32>
    %118 = vector.extract_strided_slice %108 {offsets = [0, 32], sizes = [1, 32], strides = [1, 1]} : vector<1x96xf32> to vector<1x32xf32>
    %119 = arith.addf %117, %118 : vector<1x32xf32>
    %120 = arith.negf %119 : vector<1x32xf32>
    %121 = math.exp %120 : vector<1x32xf32>
    %cst_33 = arith.constant 1.000000e+00 : f32
    %122 = vector.broadcast %cst_33 : f32 to vector<1x32xf32>
    %123 = arith.addf %122, %121 : vector<1x32xf32>
    %124 = arith.divf %122, %123 : vector<1x32xf32>
    %125 = vector.extract_strided_slice %106 {offsets = [0, 64], sizes = [1, 32], strides = [1, 1]} : vector<1x96xf32> to vector<1x32xf32>
    %126 = vector.extract_strided_slice %108 {offsets = [0, 64], sizes = [1, 32], strides = [1, 1]} : vector<1x96xf32> to vector<1x32xf32>
    %127 = arith.mulf %116, %126 : vector<1x32xf32>
    %128 = arith.addf %125, %127 : vector<1x32xf32>
    %129 = math.tanh %128 : vector<1x32xf32>
    %cst_34 = arith.constant 1.000000e+00 : f32
    %130 = vector.broadcast %cst_34 : f32 to vector<1x32xf32>
    %131 = arith.subf %130, %124 : vector<1x32xf32>
    %132 = arith.mulf %131, %129 : vector<1x32xf32>
    %133 = arith.mulf %124, %104 : vector<1x32xf32>
    %134 = arith.addf %132, %133 : vector<1x32xf32>
    %c3 = arith.constant 3 : index
    %c0_35 = arith.constant 0 : index
    %135 = vector.load %arg6[%c3, %c0_35] : memref<8x32xf32, #tpu.memory_space<vmem>>, vector<1x32xf32>
    tpu.vector_store %arg6[%c3, %c0_35], %134 {strides = array<i32>} : memref<8x32xf32, #tpu.memory_space<vmem>>, vector<1x32xf32>,
    %136 = vector.extract_strided_slice %14 {offsets = [4, 0], sizes = [1, 96], strides = [1, 1]} : vector<8x96xf32> to vector<1x96xf32>
    %cst_36 = arith.constant dense<0.000000e+00> : vector<1x96xf32>
    %137 = tpu.matmul %134, %1, %cst_36 {dimension_numbers = #tpu.dot_dimension_numbers<[1], [0], [0], [1], [0, 0, 1, 1], [], []>} : vector<1x32xf32>, vector<32x96xf32>, vector<1x96xf32> -> vector<1x96xf32>
    %138 = arith.addf %137, %6 : vector<1x96xf32>
    %139 = vector.extract_strided_slice %136 {offsets = [0, 0], sizes = [1, 32], strides = [1, 1]} : vector<1x96xf32> to vector<1x32xf32>
    %140 = vector.extract_strided_slice %138 {offsets = [0, 0], sizes = [1, 32], strides = [1, 1]} : vector<1x96xf32> to vector<1x32xf32>
    %141 = arith.addf %139, %140 : vector<1x32xf32>
    %142 = arith.negf %141 : vector<1x32xf32>
    %143 = math.exp %142 : vector<1x32xf32>
    %cst_37 = arith.constant 1.000000e+00 : f32
    %144 = vector.broadcast %cst_37 : f32 to vector<1x32xf32>
    %145 = arith.addf %144, %143 : vector<1x32xf32>
    %146 = arith.divf %144, %145 : vector<1x32xf32>
    %147 = vector.extract_strided_slice %136 {offsets = [0, 32], sizes = [1, 32], strides = [1, 1]} : vector<1x96xf32> to vector<1x32xf32>
    %148 = vector.extract_strided_slice %138 {offsets = [0, 32], sizes = [1, 32], strides = [1, 1]} : vector<1x96xf32> to vector<1x32xf32>
    %149 = arith.addf %147, %148 : vector<1x32xf32>
    %150 = arith.negf %149 : vector<1x32xf32>
    %151 = math.exp %150 : vector<1x32xf32>
    %cst_38 = arith.constant 1.000000e+00 : f32
    %152 = vector.broadcast %cst_38 : f32 to vector<1x32xf32>
    %153 = arith.addf %152, %151 : vector<1x32xf32>
    %154 = arith.divf %152, %153 : vector<1x32xf32>
    %155 = vector.extract_strided_slice %136 {offsets = [0, 64], sizes = [1, 32], strides = [1, 1]} : vector<1x96xf32> to vector<1x32xf32>
    %156 = vector.extract_strided_slice %138 {offsets = [0, 64], sizes = [1, 32], strides = [1, 1]} : vector<1x96xf32> to vector<1x32xf32>
    %157 = arith.mulf %146, %156 : vector<1x32xf32>
    %158 = arith.addf %155, %157 : vector<1x32xf32>
    %159 = math.tanh %158 : vector<1x32xf32>
    %cst_39 = arith.constant 1.000000e+00 : f32
    %160 = vector.broadcast %cst_39 : f32 to vector<1x32xf32>
    %161 = arith.subf %160, %154 : vector<1x32xf32>
    %162 = arith.mulf %161, %159 : vector<1x32xf32>
    %163 = arith.mulf %154, %134 : vector<1x32xf32>
    %164 = arith.addf %162, %163 : vector<1x32xf32>
    %c4 = arith.constant 4 : index
    %c0_40 = arith.constant 0 : index
    %165 = vector.load %arg6[%c4, %c0_40] : memref<8x32xf32, #tpu.memory_space<vmem>>, vector<1x32xf32>
    tpu.vector_store %arg6[%c4, %c0_40], %164 {strides = array<i32>} : memref<8x32xf32, #tpu.memory_space<vmem>>, vector<1x32xf32>,
    %166 = vector.extract_strided_slice %14 {offsets = [5, 0], sizes = [1, 96], strides = [1, 1]} : vector<8x96xf32> to vector<1x96xf32>
    %cst_41 = arith.constant dense<0.000000e+00> : vector<1x96xf32>
    %167 = tpu.matmul %164, %1, %cst_41 {dimension_numbers = #tpu.dot_dimension_numbers<[1], [0], [0], [1], [0, 0, 1, 1], [], []>} : vector<1x32xf32>, vector<32x96xf32>, vector<1x96xf32> -> vector<1x96xf32>
    %168 = arith.addf %167, %6 : vector<1x96xf32>
    %169 = vector.extract_strided_slice %166 {offsets = [0, 0], sizes = [1, 32], strides = [1, 1]} : vector<1x96xf32> to vector<1x32xf32>
    %170 = vector.extract_strided_slice %168 {offsets = [0, 0], sizes = [1, 32], strides = [1, 1]} : vector<1x96xf32> to vector<1x32xf32>
    %171 = arith.addf %169, %170 : vector<1x32xf32>
    %172 = arith.negf %171 : vector<1x32xf32>
    %173 = math.exp %172 : vector<1x32xf32>
    %cst_42 = arith.constant 1.000000e+00 : f32
    %174 = vector.broadcast %cst_42 : f32 to vector<1x32xf32>
    %175 = arith.addf %174, %173 : vector<1x32xf32>
    %176 = arith.divf %174, %175 : vector<1x32xf32>
    %177 = vector.extract_strided_slice %166 {offsets = [0, 32], sizes = [1, 32], strides = [1, 1]} : vector<1x96xf32> to vector<1x32xf32>
    %178 = vector.extract_strided_slice %168 {offsets = [0, 32], sizes = [1, 32], strides = [1, 1]} : vector<1x96xf32> to vector<1x32xf32>
    %179 = arith.addf %177, %178 : vector<1x32xf32>
    %180 = arith.negf %179 : vector<1x32xf32>
    %181 = math.exp %180 : vector<1x32xf32>
    %cst_43 = arith.constant 1.000000e+00 : f32
    %182 = vector.broadcast %cst_43 : f32 to vector<1x32xf32>
    %183 = arith.addf %182, %181 : vector<1x32xf32>
    %184 = arith.divf %182, %183 : vector<1x32xf32>
    %185 = vector.extract_strided_slice %166 {offsets = [0, 64], sizes = [1, 32], strides = [1, 1]} : vector<1x96xf32> to vector<1x32xf32>
    %186 = vector.extract_strided_slice %168 {offsets = [0, 64], sizes = [1, 32], strides = [1, 1]} : vector<1x96xf32> to vector<1x32xf32>
    %187 = arith.mulf %176, %186 : vector<1x32xf32>
    %188 = arith.addf %185, %187 : vector<1x32xf32>
    %189 = math.tanh %188 : vector<1x32xf32>
    %cst_44 = arith.constant 1.000000e+00 : f32
    %190 = vector.broadcast %cst_44 : f32 to vector<1x32xf32>
    %191 = arith.subf %190, %184 : vector<1x32xf32>
    %192 = arith.mulf %191, %189 : vector<1x32xf32>
    %193 = arith.mulf %184, %164 : vector<1x32xf32>
    %194 = arith.addf %192, %193 : vector<1x32xf32>
    %c5 = arith.constant 5 : index
    %c0_45 = arith.constant 0 : index
    %195 = vector.load %arg6[%c5, %c0_45] : memref<8x32xf32, #tpu.memory_space<vmem>>, vector<1x32xf32>
    tpu.vector_store %arg6[%c5, %c0_45], %194 {strides = array<i32>} : memref<8x32xf32, #tpu.memory_space<vmem>>, vector<1x32xf32>,
    %196 = vector.extract_strided_slice %14 {offsets = [6, 0], sizes = [1, 96], strides = [1, 1]} : vector<8x96xf32> to vector<1x96xf32>
    %cst_46 = arith.constant dense<0.000000e+00> : vector<1x96xf32>
    %197 = tpu.matmul %194, %1, %cst_46 {dimension_numbers = #tpu.dot_dimension_numbers<[1], [0], [0], [1], [0, 0, 1, 1], [], []>} : vector<1x32xf32>, vector<32x96xf32>, vector<1x96xf32> -> vector<1x96xf32>
    %198 = arith.addf %197, %6 : vector<1x96xf32>
    %199 = vector.extract_strided_slice %196 {offsets = [0, 0], sizes = [1, 32], strides = [1, 1]} : vector<1x96xf32> to vector<1x32xf32>
    %200 = vector.extract_strided_slice %198 {offsets = [0, 0], sizes = [1, 32], strides = [1, 1]} : vector<1x96xf32> to vector<1x32xf32>
    %201 = arith.addf %199, %200 : vector<1x32xf32>
    %202 = arith.negf %201 : vector<1x32xf32>
    %203 = math.exp %202 : vector<1x32xf32>
    %cst_47 = arith.constant 1.000000e+00 : f32
    %204 = vector.broadcast %cst_47 : f32 to vector<1x32xf32>
    %205 = arith.addf %204, %203 : vector<1x32xf32>
    %206 = arith.divf %204, %205 : vector<1x32xf32>
    %207 = vector.extract_strided_slice %196 {offsets = [0, 32], sizes = [1, 32], strides = [1, 1]} : vector<1x96xf32> to vector<1x32xf32>
    %208 = vector.extract_strided_slice %198 {offsets = [0, 32], sizes = [1, 32], strides = [1, 1]} : vector<1x96xf32> to vector<1x32xf32>
    %209 = arith.addf %207, %208 : vector<1x32xf32>
    %210 = arith.negf %209 : vector<1x32xf32>
    %211 = math.exp %210 : vector<1x32xf32>
    %cst_48 = arith.constant 1.000000e+00 : f32
    %212 = vector.broadcast %cst_48 : f32 to vector<1x32xf32>
    %213 = arith.addf %212, %211 : vector<1x32xf32>
    %214 = arith.divf %212, %213 : vector<1x32xf32>
    %215 = vector.extract_strided_slice %196 {offsets = [0, 64], sizes = [1, 32], strides = [1, 1]} : vector<1x96xf32> to vector<1x32xf32>
    %216 = vector.extract_strided_slice %198 {offsets = [0, 64], sizes = [1, 32], strides = [1, 1]} : vector<1x96xf32> to vector<1x32xf32>
    %217 = arith.mulf %206, %216 : vector<1x32xf32>
    %218 = arith.addf %215, %217 : vector<1x32xf32>
    %219 = math.tanh %218 : vector<1x32xf32>
    %cst_49 = arith.constant 1.000000e+00 : f32
    %220 = vector.broadcast %cst_49 : f32 to vector<1x32xf32>
    %221 = arith.subf %220, %214 : vector<1x32xf32>
    %222 = arith.mulf %221, %219 : vector<1x32xf32>
    %223 = arith.mulf %214, %194 : vector<1x32xf32>
    %224 = arith.addf %222, %223 : vector<1x32xf32>
    %c6 = arith.constant 6 : index
    %c0_50 = arith.constant 0 : index
    %225 = vector.load %arg6[%c6, %c0_50] : memref<8x32xf32, #tpu.memory_space<vmem>>, vector<1x32xf32>
    tpu.vector_store %arg6[%c6, %c0_50], %224 {strides = array<i32>} : memref<8x32xf32, #tpu.memory_space<vmem>>, vector<1x32xf32>,
    %226 = vector.extract_strided_slice %14 {offsets = [7, 0], sizes = [1, 96], strides = [1, 1]} : vector<8x96xf32> to vector<1x96xf32>
    %cst_51 = arith.constant dense<0.000000e+00> : vector<1x96xf32>
    %227 = tpu.matmul %224, %1, %cst_51 {dimension_numbers = #tpu.dot_dimension_numbers<[1], [0], [0], [1], [0, 0, 1, 1], [], []>} : vector<1x32xf32>, vector<32x96xf32>, vector<1x96xf32> -> vector<1x96xf32>
    %228 = arith.addf %227, %6 : vector<1x96xf32>
    %229 = vector.extract_strided_slice %226 {offsets = [0, 0], sizes = [1, 32], strides = [1, 1]} : vector<1x96xf32> to vector<1x32xf32>
    %230 = vector.extract_strided_slice %228 {offsets = [0, 0], sizes = [1, 32], strides = [1, 1]} : vector<1x96xf32> to vector<1x32xf32>
    %231 = arith.addf %229, %230 : vector<1x32xf32>
    %232 = arith.negf %231 : vector<1x32xf32>
    %233 = math.exp %232 : vector<1x32xf32>
    %cst_52 = arith.constant 1.000000e+00 : f32
    %234 = vector.broadcast %cst_52 : f32 to vector<1x32xf32>
    %235 = arith.addf %234, %233 : vector<1x32xf32>
    %236 = arith.divf %234, %235 : vector<1x32xf32>
    %237 = vector.extract_strided_slice %226 {offsets = [0, 32], sizes = [1, 32], strides = [1, 1]} : vector<1x96xf32> to vector<1x32xf32>
    %238 = vector.extract_strided_slice %228 {offsets = [0, 32], sizes = [1, 32], strides = [1, 1]} : vector<1x96xf32> to vector<1x32xf32>
    %239 = arith.addf %237, %238 : vector<1x32xf32>
    %240 = arith.negf %239 : vector<1x32xf32>
    %241 = math.exp %240 : vector<1x32xf32>
    %cst_53 = arith.constant 1.000000e+00 : f32
    %242 = vector.broadcast %cst_53 : f32 to vector<1x32xf32>
    %243 = arith.addf %242, %241 : vector<1x32xf32>
    %244 = arith.divf %242, %243 : vector<1x32xf32>
    %245 = vector.extract_strided_slice %226 {offsets = [0, 64], sizes = [1, 32], strides = [1, 1]} : vector<1x96xf32> to vector<1x32xf32>
    %246 = vector.extract_strided_slice %228 {offsets = [0, 64], sizes = [1, 32], strides = [1, 1]} : vector<1x96xf32> to vector<1x32xf32>
    %247 = arith.mulf %236, %246 : vector<1x32xf32>
    %248 = arith.addf %245, %247 : vector<1x32xf32>
    %249 = math.tanh %248 : vector<1x32xf32>
    %cst_54 = arith.constant 1.000000e+00 : f32
    %250 = vector.broadcast %cst_54 : f32 to vector<1x32xf32>
    %251 = arith.subf %250, %244 : vector<1x32xf32>
    %252 = arith.mulf %251, %249 : vector<1x32xf32>
    %253 = arith.mulf %244, %224 : vector<1x32xf32>
    %254 = arith.addf %252, %253 : vector<1x32xf32>
    %c7 = arith.constant 7 : index
    %c0_55 = arith.constant 0 : index
    %255 = vector.load %arg6[%c7, %c0_55] : memref<8x32xf32, #tpu.memory_space<vmem>>, vector<1x32xf32>
    tpu.vector_store %arg6[%c7, %c0_55], %254 {strides = array<i32>} : memref<8x32xf32, #tpu.memory_space<vmem>>, vector<1x32xf32>,
    %c0_56 = arith.constant 0 : index
    %c0_57 = arith.constant 0 : index
    %256 = vector.load %arg6[%c0_56, %c0_57] : memref<8x32xf32, #tpu.memory_space<vmem>>, vector<8x32xf32>
    %cst_58 = arith.constant dense<0.000000e+00> : vector<8x96xf32>
    %257 = tpu.matmul %256, %3, %cst_58 {dimension_numbers = #tpu.dot_dimension_numbers<[1], [0], [0], [1], [0, 0, 1, 1], [], []>} : vector<8x32xf32>, vector<32x96xf32>, vector<8x96xf32> -> vector<8x96xf32>
    %258 = tpu.transpose %256, [1, 0] : vector<8x32xf32> -> vector<32x8xf32>
    %259 = tpu.concatenate %4, %8, %258 in 1 : vector<32x96xf32>, vector<32x48xf32>, vector<32x8xf32> -> vector<32x152xf32>
    %260 = tpu.iota {dimensions = array<i32: 1>} : vector<1x48xi32>
    %261 = tpu.iota {dimensions = array<i32: 1>} : vector<1x6xi32>
    %262 = tpu.iota {dimensions = array<i32: 0>} : vector<6x48xi32>
    %c1_i32 = arith.constant 1 : i32
    %263 = vector.broadcast %c1_i32 : i32 to vector<1x48xi32>
    %264 = arith.cmpi eq, %260, %263 : vector<1x48xi32>
    %265 = arith.extui %264 : vector<1x48xi1> to vector<1x48xi32>
    %266 = arith.sitofp %265 : vector<1x48xi32> to vector<1x48xf32>
    %cst_59 = arith.constant 0.000000e+00 : f32
    %267 = vector.broadcast %cst_59 : f32 to vector<6x48xf32>
    %c0_i32 = arith.constant 0 : i32
    %268 = vector.broadcast %c0_i32 : i32 to vector<1x6xi32>
    %cst_60 = arith.constant dense<0.000000e+00> : vector<1x152xf32>
    %269 = tpu.matmul %254, %259, %cst_60 {dimension_numbers = #tpu.dot_dimension_numbers<[1], [0], [0], [1], [0, 0, 1, 1], [], []>} : vector<1x32xf32>, vector<32x152xf32>, vector<1x152xf32> -> vector<1x152xf32>
    %270 = vector.extract_strided_slice %269 {offsets = [0, 0], sizes = [1, 96], strides = [1, 1]} : vector<1x152xf32> to vector<1x96xf32>
    %271 = arith.addf %270, %7 : vector<1x96xf32>
    %272 = vector.extract_strided_slice %269 {offsets = [0, 144], sizes = [1, 8], strides = [1, 1]} : vector<1x152xf32> to vector<1x8xf32>
    %cst_61 = arith.constant dense<0xFF800000> : vector<1xf32>
    %273 = vector.multi_reduction <maximumf>, %272, %cst_61 [1] : vector<1x8xf32> to vector<1xf32>
    %274 = vector.shape_cast %273 : vector<1xf32> to vector<1x1xf32>
    %275 = vector.broadcast %274 : vector<1x1xf32> to vector<1x8xf32>
    %276 = arith.subf %272, %275 : vector<1x8xf32>
    %277 = math.exp %276 : vector<1x8xf32>
    %cst_62 = arith.constant dense<0.000000e+00> : vector<1xf32>
    %278 = vector.multi_reduction <add>, %277, %cst_62 [1] : vector<1x8xf32> to vector<1xf32>
    %279 = vector.shape_cast %278 : vector<1xf32> to vector<1x1xf32>
    %280 = tpu.reciprocal %279 {approx = true} : vector<1x1xf32> -> vector<1x1xf32>
    %cst_63 = arith.constant dense<0.000000e+00> : vector<1x96xf32>
    %281 = tpu.matmul %277, %257, %cst_63 {dimension_numbers = #tpu.dot_dimension_numbers<[1], [0], [0], [1], [0, 0, 1, 1], [], []>} : vector<1x8xf32>, vector<8x96xf32>, vector<1x96xf32> -> vector<1x96xf32>
    %282 = vector.broadcast %280 : vector<1x1xf32> to vector<1x96xf32>
    %283 = arith.mulf %281, %282 : vector<1x96xf32>
    %cst_64 = arith.constant dense<0.000000e+00> : vector<1x96xf32>
    %284 = tpu.matmul %266, %2, %cst_64 {dimension_numbers = #tpu.dot_dimension_numbers<[1], [0], [0], [1], [0, 0, 1, 1], [], []>} : vector<1x48xf32>, vector<48x96xf32>, vector<1x96xf32> -> vector<1x96xf32>
    %285 = arith.addf %284, %283 : vector<1x96xf32>
    %286 = vector.extract_strided_slice %285 {offsets = [0, 0], sizes = [1, 32], strides = [1, 1]} : vector<1x96xf32> to vector<1x32xf32>
    %287 = vector.extract_strided_slice %271 {offsets = [0, 0], sizes = [1, 32], strides = [1, 1]} : vector<1x96xf32> to vector<1x32xf32>
    %288 = arith.addf %286, %287 : vector<1x32xf32>
    %289 = arith.negf %288 : vector<1x32xf32>
    %290 = math.exp %289 : vector<1x32xf32>
    %cst_65 = arith.constant 1.000000e+00 : f32
    %291 = vector.broadcast %cst_65 : f32 to vector<1x32xf32>
    %292 = arith.addf %291, %290 : vector<1x32xf32>
    %293 = arith.divf %291, %292 : vector<1x32xf32>
    %294 = vector.extract_strided_slice %285 {offsets = [0, 32], sizes = [1, 32], strides = [1, 1]} : vector<1x96xf32> to vector<1x32xf32>
    %295 = vector.extract_strided_slice %271 {offsets = [0, 32], sizes = [1, 32], strides = [1, 1]} : vector<1x96xf32> to vector<1x32xf32>
    %296 = arith.addf %294, %295 : vector<1x32xf32>
    %297 = arith.negf %296 : vector<1x32xf32>
    %298 = math.exp %297 : vector<1x32xf32>
    %cst_66 = arith.constant 1.000000e+00 : f32
    %299 = vector.broadcast %cst_66 : f32 to vector<1x32xf32>
    %300 = arith.addf %299, %298 : vector<1x32xf32>
    %301 = arith.divf %299, %300 : vector<1x32xf32>
    %302 = vector.extract_strided_slice %285 {offsets = [0, 64], sizes = [1, 32], strides = [1, 1]} : vector<1x96xf32> to vector<1x32xf32>
    %303 = vector.extract_strided_slice %271 {offsets = [0, 64], sizes = [1, 32], strides = [1, 1]} : vector<1x96xf32> to vector<1x32xf32>
    %304 = arith.mulf %293, %303 : vector<1x32xf32>
    %305 = arith.addf %302, %304 : vector<1x32xf32>
    %306 = math.tanh %305 : vector<1x32xf32>
    %cst_67 = arith.constant 1.000000e+00 : f32
    %307 = vector.broadcast %cst_67 : f32 to vector<1x32xf32>
    %308 = arith.subf %307, %301 : vector<1x32xf32>
    %309 = arith.mulf %308, %306 : vector<1x32xf32>
    %310 = arith.mulf %301, %254 : vector<1x32xf32>
    %311 = arith.addf %309, %310 : vector<1x32xf32>
    %cst_68 = arith.constant dense<0.000000e+00> : vector<1x152xf32>
    %312 = tpu.matmul %311, %259, %cst_68 {dimension_numbers = #tpu.dot_dimension_numbers<[1], [0], [0], [1], [0, 0, 1, 1], [], []>} : vector<1x32xf32>, vector<32x152xf32>, vector<1x152xf32> -> vector<1x152xf32>
    %313 = vector.extract_strided_slice %312 {offsets = [0, 0], sizes = [1, 96], strides = [1, 1]} : vector<1x152xf32> to vector<1x96xf32>
    %314 = arith.addf %313, %7 : vector<1x96xf32>
    %315 = vector.extract_strided_slice %312 {offsets = [0, 144], sizes = [1, 8], strides = [1, 1]} : vector<1x152xf32> to vector<1x8xf32>
    %316 = vector.extract_strided_slice %312 {offsets = [0, 96], sizes = [1, 48], strides = [1, 1]} : vector<1x152xf32> to vector<1x48xf32>
    %317 = arith.addf %316, %9 : vector<1x48xf32>
    %cst_69 = arith.constant dense<0xFF800000> : vector<1xf32>
    %318 = vector.multi_reduction <maximumf>, %317, %cst_69 [1] : vector<1x48xf32> to vector<1xf32>
    %319 = vector.shape_cast %318 : vector<1xf32> to vector<1x1xf32>
    %320 = vector.broadcast %319 : vector<1x1xf32> to vector<1x48xf32>
    %321 = arith.subf %317, %320 : vector<1x48xf32>
    %322 = math.exp %321 : vector<1x48xf32>
    %cst_70 = arith.constant dense<0.000000e+00> : vector<1xf32>
    %323 = vector.multi_reduction <add>, %322, %cst_70 [1] : vector<1x48xf32> to vector<1xf32>
    %324 = vector.shape_cast %323 : vector<1xf32> to vector<1x1xf32>
    %325 = math.log %324 : vector<1x1xf32>
    %326 = arith.addf %319, %325 : vector<1x1xf32>
    %c0_i32_71 = arith.constant 0 : i32
    %327 = vector.broadcast %c0_i32_71 : i32 to vector<6x48xi32>
    %328 = arith.cmpi eq, %262, %327 : vector<6x48xi32>
    %329 = vector.broadcast %326 : vector<1x1xf32> to vector<1x48xf32>
    %330 = arith.subf %317, %329 : vector<1x48xf32>
    %331 = vector.shape_cast %330 : vector<1x48xf32> to vector<1x48xf32>
    %332 = vector.broadcast %331 : vector<1x48xf32> to vector<6x48xf32>
    %333 = arith.select %328, %332, %267 : vector<6x48xi1>, vector<6x48xf32>
    %334 = vector.broadcast %319 : vector<1x1xf32> to vector<1x48xf32>
    %335 = arith.cmpf oeq, %317, %334 : vector<1x48xf32>
    %c48_i32 = arith.constant 48 : i32
    %336 = vector.broadcast %c48_i32 : i32 to vector<1x48xi32>
    %337 = arith.select %335, %260, %336 : vector<1x48xi1>, vector<1x48xi32>
    %cst_72 = arith.constant dense<2147483647> : vector<1xi32>
    %338 = vector.multi_reduction <minsi>, %337, %cst_72 [1] : vector<1x48xi32> to vector<1xi32>
    %339 = vector.shape_cast %338 : vector<1xi32> to vector<1x1xi32>
    %c0_i32_73 = arith.constant 0 : i32
    %340 = vector.broadcast %c0_i32_73 : i32 to vector<1x6xi32>
    %341 = arith.cmpi eq, %261, %340 : vector<1x6xi32>
    %342 = vector.shape_cast %339 : vector<1x1xi32> to vector<1x1xi32>
    %343 = vector.broadcast %342 : vector<1x1xi32> to vector<1x6xi32>
    %344 = arith.select %341, %343, %268 : vector<1x6xi1>, vector<1x6xi32>
    %345 = vector.broadcast %339 : vector<1x1xi32> to vector<1x48xi32>
    %346 = arith.cmpi eq, %260, %345 : vector<1x48xi32>
    %347 = arith.extui %346 : vector<1x48xi1> to vector<1x48xi32>
    %348 = arith.sitofp %347 : vector<1x48xi32> to vector<1x48xf32>
    %cst_74 = arith.constant dense<0xFF800000> : vector<1xf32>
    %349 = vector.multi_reduction <maximumf>, %315, %cst_74 [1] : vector<1x8xf32> to vector<1xf32>
    %350 = vector.shape_cast %349 : vector<1xf32> to vector<1x1xf32>
    %351 = vector.broadcast %350 : vector<1x1xf32> to vector<1x8xf32>
    %352 = arith.subf %315, %351 : vector<1x8xf32>
    %353 = math.exp %352 : vector<1x8xf32>
    %cst_75 = arith.constant dense<0.000000e+00> : vector<1xf32>
    %354 = vector.multi_reduction <add>, %353, %cst_75 [1] : vector<1x8xf32> to vector<1xf32>
    %355 = vector.shape_cast %354 : vector<1xf32> to vector<1x1xf32>
    %356 = tpu.reciprocal %355 {approx = true} : vector<1x1xf32> -> vector<1x1xf32>
    %cst_76 = arith.constant dense<0.000000e+00> : vector<1x96xf32>
    %357 = tpu.matmul %353, %257, %cst_76 {dimension_numbers = #tpu.dot_dimension_numbers<[1], [0], [0], [1], [0, 0, 1, 1], [], []>} : vector<1x8xf32>, vector<8x96xf32>, vector<1x96xf32> -> vector<1x96xf32>
    %358 = vector.broadcast %356 : vector<1x1xf32> to vector<1x96xf32>
    %359 = arith.mulf %357, %358 : vector<1x96xf32>
    %cst_77 = arith.constant dense<0.000000e+00> : vector<1x96xf32>
    %360 = tpu.matmul %348, %2, %cst_77 {dimension_numbers = #tpu.dot_dimension_numbers<[1], [0], [0], [1], [0, 0, 1, 1], [], []>} : vector<1x48xf32>, vector<48x96xf32>, vector<1x96xf32> -> vector<1x96xf32>
    %361 = arith.addf %360, %359 : vector<1x96xf32>
    %362 = vector.extract_strided_slice %361 {offsets = [0, 0], sizes = [1, 32], strides = [1, 1]} : vector<1x96xf32> to vector<1x32xf32>
    %363 = vector.extract_strided_slice %314 {offsets = [0, 0], sizes = [1, 32], strides = [1, 1]} : vector<1x96xf32> to vector<1x32xf32>
    %364 = arith.addf %362, %363 : vector<1x32xf32>
    %365 = arith.negf %364 : vector<1x32xf32>
    %366 = math.exp %365 : vector<1x32xf32>
    %cst_78 = arith.constant 1.000000e+00 : f32
    %367 = vector.broadcast %cst_78 : f32 to vector<1x32xf32>
    %368 = arith.addf %367, %366 : vector<1x32xf32>
    %369 = arith.divf %367, %368 : vector<1x32xf32>
    %370 = vector.extract_strided_slice %361 {offsets = [0, 32], sizes = [1, 32], strides = [1, 1]} : vector<1x96xf32> to vector<1x32xf32>
    %371 = vector.extract_strided_slice %314 {offsets = [0, 32], sizes = [1, 32], strides = [1, 1]} : vector<1x96xf32> to vector<1x32xf32>
    %372 = arith.addf %370, %371 : vector<1x32xf32>
    %373 = arith.negf %372 : vector<1x32xf32>
    %374 = math.exp %373 : vector<1x32xf32>
    %cst_79 = arith.constant 1.000000e+00 : f32
    %375 = vector.broadcast %cst_79 : f32 to vector<1x32xf32>
    %376 = arith.addf %375, %374 : vector<1x32xf32>
    %377 = arith.divf %375, %376 : vector<1x32xf32>
    %378 = vector.extract_strided_slice %361 {offsets = [0, 64], sizes = [1, 32], strides = [1, 1]} : vector<1x96xf32> to vector<1x32xf32>
    %379 = vector.extract_strided_slice %314 {offsets = [0, 64], sizes = [1, 32], strides = [1, 1]} : vector<1x96xf32> to vector<1x32xf32>
    %380 = arith.mulf %369, %379 : vector<1x32xf32>
    %381 = arith.addf %378, %380 : vector<1x32xf32>
    %382 = math.tanh %381 : vector<1x32xf32>
    %cst_80 = arith.constant 1.000000e+00 : f32
    %383 = vector.broadcast %cst_80 : f32 to vector<1x32xf32>
    %384 = arith.subf %383, %377 : vector<1x32xf32>
    %385 = arith.mulf %384, %382 : vector<1x32xf32>
    %386 = arith.mulf %377, %311 : vector<1x32xf32>
    %387 = arith.addf %385, %386 : vector<1x32xf32>
    %cst_81 = arith.constant dense<0.000000e+00> : vector<1x152xf32>
    %388 = tpu.matmul %387, %259, %cst_81 {dimension_numbers = #tpu.dot_dimension_numbers<[1], [0], [0], [1], [0, 0, 1, 1], [], []>} : vector<1x32xf32>, vector<32x152xf32>, vector<1x152xf32> -> vector<1x152xf32>
    %389 = vector.extract_strided_slice %388 {offsets = [0, 0], sizes = [1, 96], strides = [1, 1]} : vector<1x152xf32> to vector<1x96xf32>
    %390 = arith.addf %389, %7 : vector<1x96xf32>
    %391 = vector.extract_strided_slice %388 {offsets = [0, 144], sizes = [1, 8], strides = [1, 1]} : vector<1x152xf32> to vector<1x8xf32>
    %392 = vector.extract_strided_slice %388 {offsets = [0, 96], sizes = [1, 48], strides = [1, 1]} : vector<1x152xf32> to vector<1x48xf32>
    %393 = arith.addf %392, %9 : vector<1x48xf32>
    %cst_82 = arith.constant dense<0xFF800000> : vector<1xf32>
    %394 = vector.multi_reduction <maximumf>, %393, %cst_82 [1] : vector<1x48xf32> to vector<1xf32>
    %395 = vector.shape_cast %394 : vector<1xf32> to vector<1x1xf32>
    %396 = vector.broadcast %395 : vector<1x1xf32> to vector<1x48xf32>
    %397 = arith.subf %393, %396 : vector<1x48xf32>
    %398 = math.exp %397 : vector<1x48xf32>
    %cst_83 = arith.constant dense<0.000000e+00> : vector<1xf32>
    %399 = vector.multi_reduction <add>, %398, %cst_83 [1] : vector<1x48xf32> to vector<1xf32>
    %400 = vector.shape_cast %399 : vector<1xf32> to vector<1x1xf32>
    %401 = math.log %400 : vector<1x1xf32>
    %402 = arith.addf %395, %401 : vector<1x1xf32>
    %c1_i32_84 = arith.constant 1 : i32
    %403 = vector.broadcast %c1_i32_84 : i32 to vector<6x48xi32>
    %404 = arith.cmpi eq, %262, %403 : vector<6x48xi32>
    %405 = vector.broadcast %402 : vector<1x1xf32> to vector<1x48xf32>
    %406 = arith.subf %393, %405 : vector<1x48xf32>
    %407 = vector.shape_cast %406 : vector<1x48xf32> to vector<1x48xf32>
    %408 = vector.broadcast %407 : vector<1x48xf32> to vector<6x48xf32>
    %409 = arith.select %404, %408, %333 : vector<6x48xi1>, vector<6x48xf32>
    %410 = vector.broadcast %395 : vector<1x1xf32> to vector<1x48xf32>
    %411 = arith.cmpf oeq, %393, %410 : vector<1x48xf32>
    %c48_i32_85 = arith.constant 48 : i32
    %412 = vector.broadcast %c48_i32_85 : i32 to vector<1x48xi32>
    %413 = arith.select %411, %260, %412 : vector<1x48xi1>, vector<1x48xi32>
    %cst_86 = arith.constant dense<2147483647> : vector<1xi32>
    %414 = vector.multi_reduction <minsi>, %413, %cst_86 [1] : vector<1x48xi32> to vector<1xi32>
    %415 = vector.shape_cast %414 : vector<1xi32> to vector<1x1xi32>
    %c1_i32_87 = arith.constant 1 : i32
    %416 = vector.broadcast %c1_i32_87 : i32 to vector<1x6xi32>
    %417 = arith.cmpi eq, %261, %416 : vector<1x6xi32>
    %418 = vector.shape_cast %415 : vector<1x1xi32> to vector<1x1xi32>
    %419 = vector.broadcast %418 : vector<1x1xi32> to vector<1x6xi32>
    %420 = arith.select %417, %419, %344 : vector<1x6xi1>, vector<1x6xi32>
    %421 = vector.broadcast %415 : vector<1x1xi32> to vector<1x48xi32>
    %422 = arith.cmpi eq, %260, %421 : vector<1x48xi32>
    %423 = arith.extui %422 : vector<1x48xi1> to vector<1x48xi32>
    %424 = arith.sitofp %423 : vector<1x48xi32> to vector<1x48xf32>
    %cst_88 = arith.constant dense<0xFF800000> : vector<1xf32>
    %425 = vector.multi_reduction <maximumf>, %391, %cst_88 [1] : vector<1x8xf32> to vector<1xf32>
    %426 = vector.shape_cast %425 : vector<1xf32> to vector<1x1xf32>
    %427 = vector.broadcast %426 : vector<1x1xf32> to vector<1x8xf32>
    %428 = arith.subf %391, %427 : vector<1x8xf32>
    %429 = math.exp %428 : vector<1x8xf32>
    %cst_89 = arith.constant dense<0.000000e+00> : vector<1xf32>
    %430 = vector.multi_reduction <add>, %429, %cst_89 [1] : vector<1x8xf32> to vector<1xf32>
    %431 = vector.shape_cast %430 : vector<1xf32> to vector<1x1xf32>
    %432 = tpu.reciprocal %431 {approx = true} : vector<1x1xf32> -> vector<1x1xf32>
    %cst_90 = arith.constant dense<0.000000e+00> : vector<1x96xf32>
    %433 = tpu.matmul %429, %257, %cst_90 {dimension_numbers = #tpu.dot_dimension_numbers<[1], [0], [0], [1], [0, 0, 1, 1], [], []>} : vector<1x8xf32>, vector<8x96xf32>, vector<1x96xf32> -> vector<1x96xf32>
    %434 = vector.broadcast %432 : vector<1x1xf32> to vector<1x96xf32>
    %435 = arith.mulf %433, %434 : vector<1x96xf32>
    %cst_91 = arith.constant dense<0.000000e+00> : vector<1x96xf32>
    %436 = tpu.matmul %424, %2, %cst_91 {dimension_numbers = #tpu.dot_dimension_numbers<[1], [0], [0], [1], [0, 0, 1, 1], [], []>} : vector<1x48xf32>, vector<48x96xf32>, vector<1x96xf32> -> vector<1x96xf32>
    %437 = arith.addf %436, %435 : vector<1x96xf32>
    %438 = vector.extract_strided_slice %437 {offsets = [0, 0], sizes = [1, 32], strides = [1, 1]} : vector<1x96xf32> to vector<1x32xf32>
    %439 = vector.extract_strided_slice %390 {offsets = [0, 0], sizes = [1, 32], strides = [1, 1]} : vector<1x96xf32> to vector<1x32xf32>
    %440 = arith.addf %438, %439 : vector<1x32xf32>
    %441 = arith.negf %440 : vector<1x32xf32>
    %442 = math.exp %441 : vector<1x32xf32>
    %cst_92 = arith.constant 1.000000e+00 : f32
    %443 = vector.broadcast %cst_92 : f32 to vector<1x32xf32>
    %444 = arith.addf %443, %442 : vector<1x32xf32>
    %445 = arith.divf %443, %444 : vector<1x32xf32>
    %446 = vector.extract_strided_slice %437 {offsets = [0, 32], sizes = [1, 32], strides = [1, 1]} : vector<1x96xf32> to vector<1x32xf32>
    %447 = vector.extract_strided_slice %390 {offsets = [0, 32], sizes = [1, 32], strides = [1, 1]} : vector<1x96xf32> to vector<1x32xf32>
    %448 = arith.addf %446, %447 : vector<1x32xf32>
    %449 = arith.negf %448 : vector<1x32xf32>
    %450 = math.exp %449 : vector<1x32xf32>
    %cst_93 = arith.constant 1.000000e+00 : f32
    %451 = vector.broadcast %cst_93 : f32 to vector<1x32xf32>
    %452 = arith.addf %451, %450 : vector<1x32xf32>
    %453 = arith.divf %451, %452 : vector<1x32xf32>
    %454 = vector.extract_strided_slice %437 {offsets = [0, 64], sizes = [1, 32], strides = [1, 1]} : vector<1x96xf32> to vector<1x32xf32>
    %455 = vector.extract_strided_slice %390 {offsets = [0, 64], sizes = [1, 32], strides = [1, 1]} : vector<1x96xf32> to vector<1x32xf32>
    %456 = arith.mulf %445, %455 : vector<1x32xf32>
    %457 = arith.addf %454, %456 : vector<1x32xf32>
    %458 = math.tanh %457 : vector<1x32xf32>
    %cst_94 = arith.constant 1.000000e+00 : f32
    %459 = vector.broadcast %cst_94 : f32 to vector<1x32xf32>
    %460 = arith.subf %459, %453 : vector<1x32xf32>
    %461 = arith.mulf %460, %458 : vector<1x32xf32>
    %462 = arith.mulf %453, %387 : vector<1x32xf32>
    %463 = arith.addf %461, %462 : vector<1x32xf32>
    %cst_95 = arith.constant dense<0.000000e+00> : vector<1x152xf32>
    %464 = tpu.matmul %463, %259, %cst_95 {dimension_numbers = #tpu.dot_dimension_numbers<[1], [0], [0], [1], [0, 0, 1, 1], [], []>} : vector<1x32xf32>, vector<32x152xf32>, vector<1x152xf32> -> vector<1x152xf32>
    %465 = vector.extract_strided_slice %464 {offsets = [0, 0], sizes = [1, 96], strides = [1, 1]} : vector<1x152xf32> to vector<1x96xf32>
    %466 = arith.addf %465, %7 : vector<1x96xf32>
    %467 = vector.extract_strided_slice %464 {offsets = [0, 144], sizes = [1, 8], strides = [1, 1]} : vector<1x152xf32> to vector<1x8xf32>
    %468 = vector.extract_strided_slice %464 {offsets = [0, 96], sizes = [1, 48], strides = [1, 1]} : vector<1x152xf32> to vector<1x48xf32>
    %469 = arith.addf %468, %9 : vector<1x48xf32>
    %cst_96 = arith.constant dense<0xFF800000> : vector<1xf32>
    %470 = vector.multi_reduction <maximumf>, %469, %cst_96 [1] : vector<1x48xf32> to vector<1xf32>
    %471 = vector.shape_cast %470 : vector<1xf32> to vector<1x1xf32>
    %472 = vector.broadcast %471 : vector<1x1xf32> to vector<1x48xf32>
    %473 = arith.subf %469, %472 : vector<1x48xf32>
    %474 = math.exp %473 : vector<1x48xf32>
    %cst_97 = arith.constant dense<0.000000e+00> : vector<1xf32>
    %475 = vector.multi_reduction <add>, %474, %cst_97 [1] : vector<1x48xf32> to vector<1xf32>
    %476 = vector.shape_cast %475 : vector<1xf32> to vector<1x1xf32>
    %477 = math.log %476 : vector<1x1xf32>
    %478 = arith.addf %471, %477 : vector<1x1xf32>
    %c2_i32 = arith.constant 2 : i32
    %479 = vector.broadcast %c2_i32 : i32 to vector<6x48xi32>
    %480 = arith.cmpi eq, %262, %479 : vector<6x48xi32>
    %481 = vector.broadcast %478 : vector<1x1xf32> to vector<1x48xf32>
    %482 = arith.subf %469, %481 : vector<1x48xf32>
    %483 = vector.shape_cast %482 : vector<1x48xf32> to vector<1x48xf32>
    %484 = vector.broadcast %483 : vector<1x48xf32> to vector<6x48xf32>
    %485 = arith.select %480, %484, %409 : vector<6x48xi1>, vector<6x48xf32>
    %486 = vector.broadcast %471 : vector<1x1xf32> to vector<1x48xf32>
    %487 = arith.cmpf oeq, %469, %486 : vector<1x48xf32>
    %c48_i32_98 = arith.constant 48 : i32
    %488 = vector.broadcast %c48_i32_98 : i32 to vector<1x48xi32>
    %489 = arith.select %487, %260, %488 : vector<1x48xi1>, vector<1x48xi32>
    %cst_99 = arith.constant dense<2147483647> : vector<1xi32>
    %490 = vector.multi_reduction <minsi>, %489, %cst_99 [1] : vector<1x48xi32> to vector<1xi32>
    %491 = vector.shape_cast %490 : vector<1xi32> to vector<1x1xi32>
    %c2_i32_100 = arith.constant 2 : i32
    %492 = vector.broadcast %c2_i32_100 : i32 to vector<1x6xi32>
    %493 = arith.cmpi eq, %261, %492 : vector<1x6xi32>
    %494 = vector.shape_cast %491 : vector<1x1xi32> to vector<1x1xi32>
    %495 = vector.broadcast %494 : vector<1x1xi32> to vector<1x6xi32>
    %496 = arith.select %493, %495, %420 : vector<1x6xi1>, vector<1x6xi32>
    %497 = vector.broadcast %491 : vector<1x1xi32> to vector<1x48xi32>
    %498 = arith.cmpi eq, %260, %497 : vector<1x48xi32>
    %499 = arith.extui %498 : vector<1x48xi1> to vector<1x48xi32>
    %500 = arith.sitofp %499 : vector<1x48xi32> to vector<1x48xf32>
    %cst_101 = arith.constant dense<0xFF800000> : vector<1xf32>
    %501 = vector.multi_reduction <maximumf>, %467, %cst_101 [1] : vector<1x8xf32> to vector<1xf32>
    %502 = vector.shape_cast %501 : vector<1xf32> to vector<1x1xf32>
    %503 = vector.broadcast %502 : vector<1x1xf32> to vector<1x8xf32>
    %504 = arith.subf %467, %503 : vector<1x8xf32>
    %505 = math.exp %504 : vector<1x8xf32>
    %cst_102 = arith.constant dense<0.000000e+00> : vector<1xf32>
    %506 = vector.multi_reduction <add>, %505, %cst_102 [1] : vector<1x8xf32> to vector<1xf32>
    %507 = vector.shape_cast %506 : vector<1xf32> to vector<1x1xf32>
    %508 = tpu.reciprocal %507 {approx = true} : vector<1x1xf32> -> vector<1x1xf32>
    %cst_103 = arith.constant dense<0.000000e+00> : vector<1x96xf32>
    %509 = tpu.matmul %505, %257, %cst_103 {dimension_numbers = #tpu.dot_dimension_numbers<[1], [0], [0], [1], [0, 0, 1, 1], [], []>} : vector<1x8xf32>, vector<8x96xf32>, vector<1x96xf32> -> vector<1x96xf32>
    %510 = vector.broadcast %508 : vector<1x1xf32> to vector<1x96xf32>
    %511 = arith.mulf %509, %510 : vector<1x96xf32>
    %cst_104 = arith.constant dense<0.000000e+00> : vector<1x96xf32>
    %512 = tpu.matmul %500, %2, %cst_104 {dimension_numbers = #tpu.dot_dimension_numbers<[1], [0], [0], [1], [0, 0, 1, 1], [], []>} : vector<1x48xf32>, vector<48x96xf32>, vector<1x96xf32> -> vector<1x96xf32>
    %513 = arith.addf %512, %511 : vector<1x96xf32>
    %514 = vector.extract_strided_slice %513 {offsets = [0, 0], sizes = [1, 32], strides = [1, 1]} : vector<1x96xf32> to vector<1x32xf32>
    %515 = vector.extract_strided_slice %466 {offsets = [0, 0], sizes = [1, 32], strides = [1, 1]} : vector<1x96xf32> to vector<1x32xf32>
    %516 = arith.addf %514, %515 : vector<1x32xf32>
    %517 = arith.negf %516 : vector<1x32xf32>
    %518 = math.exp %517 : vector<1x32xf32>
    %cst_105 = arith.constant 1.000000e+00 : f32
    %519 = vector.broadcast %cst_105 : f32 to vector<1x32xf32>
    %520 = arith.addf %519, %518 : vector<1x32xf32>
    %521 = arith.divf %519, %520 : vector<1x32xf32>
    %522 = vector.extract_strided_slice %513 {offsets = [0, 32], sizes = [1, 32], strides = [1, 1]} : vector<1x96xf32> to vector<1x32xf32>
    %523 = vector.extract_strided_slice %466 {offsets = [0, 32], sizes = [1, 32], strides = [1, 1]} : vector<1x96xf32> to vector<1x32xf32>
    %524 = arith.addf %522, %523 : vector<1x32xf32>
    %525 = arith.negf %524 : vector<1x32xf32>
    %526 = math.exp %525 : vector<1x32xf32>
    %cst_106 = arith.constant 1.000000e+00 : f32
    %527 = vector.broadcast %cst_106 : f32 to vector<1x32xf32>
    %528 = arith.addf %527, %526 : vector<1x32xf32>
    %529 = arith.divf %527, %528 : vector<1x32xf32>
    %530 = vector.extract_strided_slice %513 {offsets = [0, 64], sizes = [1, 32], strides = [1, 1]} : vector<1x96xf32> to vector<1x32xf32>
    %531 = vector.extract_strided_slice %466 {offsets = [0, 64], sizes = [1, 32], strides = [1, 1]} : vector<1x96xf32> to vector<1x32xf32>
    %532 = arith.mulf %521, %531 : vector<1x32xf32>
    %533 = arith.addf %530, %532 : vector<1x32xf32>
    %534 = math.tanh %533 : vector<1x32xf32>
    %cst_107 = arith.constant 1.000000e+00 : f32
    %535 = vector.broadcast %cst_107 : f32 to vector<1x32xf32>
    %536 = arith.subf %535, %529 : vector<1x32xf32>
    %537 = arith.mulf %536, %534 : vector<1x32xf32>
    %538 = arith.mulf %529, %463 : vector<1x32xf32>
    %539 = arith.addf %537, %538 : vector<1x32xf32>
    %cst_108 = arith.constant dense<0.000000e+00> : vector<1x152xf32>
    %540 = tpu.matmul %539, %259, %cst_108 {dimension_numbers = #tpu.dot_dimension_numbers<[1], [0], [0], [1], [0, 0, 1, 1], [], []>} : vector<1x32xf32>, vector<32x152xf32>, vector<1x152xf32> -> vector<1x152xf32>
    %541 = vector.extract_strided_slice %540 {offsets = [0, 0], sizes = [1, 96], strides = [1, 1]} : vector<1x152xf32> to vector<1x96xf32>
    %542 = arith.addf %541, %7 : vector<1x96xf32>
    %543 = vector.extract_strided_slice %540 {offsets = [0, 144], sizes = [1, 8], strides = [1, 1]} : vector<1x152xf32> to vector<1x8xf32>
    %544 = vector.extract_strided_slice %540 {offsets = [0, 96], sizes = [1, 48], strides = [1, 1]} : vector<1x152xf32> to vector<1x48xf32>
    %545 = arith.addf %544, %9 : vector<1x48xf32>
    %cst_109 = arith.constant dense<0xFF800000> : vector<1xf32>
    %546 = vector.multi_reduction <maximumf>, %545, %cst_109 [1] : vector<1x48xf32> to vector<1xf32>
    %547 = vector.shape_cast %546 : vector<1xf32> to vector<1x1xf32>
    %548 = vector.broadcast %547 : vector<1x1xf32> to vector<1x48xf32>
    %549 = arith.subf %545, %548 : vector<1x48xf32>
    %550 = math.exp %549 : vector<1x48xf32>
    %cst_110 = arith.constant dense<0.000000e+00> : vector<1xf32>
    %551 = vector.multi_reduction <add>, %550, %cst_110 [1] : vector<1x48xf32> to vector<1xf32>
    %552 = vector.shape_cast %551 : vector<1xf32> to vector<1x1xf32>
    %553 = math.log %552 : vector<1x1xf32>
    %554 = arith.addf %547, %553 : vector<1x1xf32>
    %c3_i32 = arith.constant 3 : i32
    %555 = vector.broadcast %c3_i32 : i32 to vector<6x48xi32>
    %556 = arith.cmpi eq, %262, %555 : vector<6x48xi32>
    %557 = vector.broadcast %554 : vector<1x1xf32> to vector<1x48xf32>
    %558 = arith.subf %545, %557 : vector<1x48xf32>
    %559 = vector.shape_cast %558 : vector<1x48xf32> to vector<1x48xf32>
    %560 = vector.broadcast %559 : vector<1x48xf32> to vector<6x48xf32>
    %561 = arith.select %556, %560, %485 : vector<6x48xi1>, vector<6x48xf32>
    %562 = vector.broadcast %547 : vector<1x1xf32> to vector<1x48xf32>
    %563 = arith.cmpf oeq, %545, %562 : vector<1x48xf32>
    %c48_i32_111 = arith.constant 48 : i32
    %564 = vector.broadcast %c48_i32_111 : i32 to vector<1x48xi32>
    %565 = arith.select %563, %260, %564 : vector<1x48xi1>, vector<1x48xi32>
    %cst_112 = arith.constant dense<2147483647> : vector<1xi32>
    %566 = vector.multi_reduction <minsi>, %565, %cst_112 [1] : vector<1x48xi32> to vector<1xi32>
    %567 = vector.shape_cast %566 : vector<1xi32> to vector<1x1xi32>
    %c3_i32_113 = arith.constant 3 : i32
    %568 = vector.broadcast %c3_i32_113 : i32 to vector<1x6xi32>
    %569 = arith.cmpi eq, %261, %568 : vector<1x6xi32>
    %570 = vector.shape_cast %567 : vector<1x1xi32> to vector<1x1xi32>
    %571 = vector.broadcast %570 : vector<1x1xi32> to vector<1x6xi32>
    %572 = arith.select %569, %571, %496 : vector<1x6xi1>, vector<1x6xi32>
    %573 = vector.broadcast %567 : vector<1x1xi32> to vector<1x48xi32>
    %574 = arith.cmpi eq, %260, %573 : vector<1x48xi32>
    %575 = arith.extui %574 : vector<1x48xi1> to vector<1x48xi32>
    %576 = arith.sitofp %575 : vector<1x48xi32> to vector<1x48xf32>
    %cst_114 = arith.constant dense<0xFF800000> : vector<1xf32>
    %577 = vector.multi_reduction <maximumf>, %543, %cst_114 [1] : vector<1x8xf32> to vector<1xf32>
    %578 = vector.shape_cast %577 : vector<1xf32> to vector<1x1xf32>
    %579 = vector.broadcast %578 : vector<1x1xf32> to vector<1x8xf32>
    %580 = arith.subf %543, %579 : vector<1x8xf32>
    %581 = math.exp %580 : vector<1x8xf32>
    %cst_115 = arith.constant dense<0.000000e+00> : vector<1xf32>
    %582 = vector.multi_reduction <add>, %581, %cst_115 [1] : vector<1x8xf32> to vector<1xf32>
    %583 = vector.shape_cast %582 : vector<1xf32> to vector<1x1xf32>
    %584 = tpu.reciprocal %583 {approx = true} : vector<1x1xf32> -> vector<1x1xf32>
    %cst_116 = arith.constant dense<0.000000e+00> : vector<1x96xf32>
    %585 = tpu.matmul %581, %257, %cst_116 {dimension_numbers = #tpu.dot_dimension_numbers<[1], [0], [0], [1], [0, 0, 1, 1], [], []>} : vector<1x8xf32>, vector<8x96xf32>, vector<1x96xf32> -> vector<1x96xf32>
    %586 = vector.broadcast %584 : vector<1x1xf32> to vector<1x96xf32>
    %587 = arith.mulf %585, %586 : vector<1x96xf32>
    %cst_117 = arith.constant dense<0.000000e+00> : vector<1x96xf32>
    %588 = tpu.matmul %576, %2, %cst_117 {dimension_numbers = #tpu.dot_dimension_numbers<[1], [0], [0], [1], [0, 0, 1, 1], [], []>} : vector<1x48xf32>, vector<48x96xf32>, vector<1x96xf32> -> vector<1x96xf32>
    %589 = arith.addf %588, %587 : vector<1x96xf32>
    %590 = vector.extract_strided_slice %589 {offsets = [0, 0], sizes = [1, 32], strides = [1, 1]} : vector<1x96xf32> to vector<1x32xf32>
    %591 = vector.extract_strided_slice %542 {offsets = [0, 0], sizes = [1, 32], strides = [1, 1]} : vector<1x96xf32> to vector<1x32xf32>
    %592 = arith.addf %590, %591 : vector<1x32xf32>
    %593 = arith.negf %592 : vector<1x32xf32>
    %594 = math.exp %593 : vector<1x32xf32>
    %cst_118 = arith.constant 1.000000e+00 : f32
    %595 = vector.broadcast %cst_118 : f32 to vector<1x32xf32>
    %596 = arith.addf %595, %594 : vector<1x32xf32>
    %597 = arith.divf %595, %596 : vector<1x32xf32>
    %598 = vector.extract_strided_slice %589 {offsets = [0, 32], sizes = [1, 32], strides = [1, 1]} : vector<1x96xf32> to vector<1x32xf32>
    %599 = vector.extract_strided_slice %542 {offsets = [0, 32], sizes = [1, 32], strides = [1, 1]} : vector<1x96xf32> to vector<1x32xf32>
    %600 = arith.addf %598, %599 : vector<1x32xf32>
    %601 = arith.negf %600 : vector<1x32xf32>
    %602 = math.exp %601 : vector<1x32xf32>
    %cst_119 = arith.constant 1.000000e+00 : f32
    %603 = vector.broadcast %cst_119 : f32 to vector<1x32xf32>
    %604 = arith.addf %603, %602 : vector<1x32xf32>
    %605 = arith.divf %603, %604 : vector<1x32xf32>
    %606 = vector.extract_strided_slice %589 {offsets = [0, 64], sizes = [1, 32], strides = [1, 1]} : vector<1x96xf32> to vector<1x32xf32>
    %607 = vector.extract_strided_slice %542 {offsets = [0, 64], sizes = [1, 32], strides = [1, 1]} : vector<1x96xf32> to vector<1x32xf32>
    %608 = arith.mulf %597, %607 : vector<1x32xf32>
    %609 = arith.addf %606, %608 : vector<1x32xf32>
    %610 = math.tanh %609 : vector<1x32xf32>
    %cst_120 = arith.constant 1.000000e+00 : f32
    %611 = vector.broadcast %cst_120 : f32 to vector<1x32xf32>
    %612 = arith.subf %611, %605 : vector<1x32xf32>
    %613 = arith.mulf %612, %610 : vector<1x32xf32>
    %614 = arith.mulf %605, %539 : vector<1x32xf32>
    %615 = arith.addf %613, %614 : vector<1x32xf32>
    %cst_121 = arith.constant dense<0.000000e+00> : vector<1x152xf32>
    %616 = tpu.matmul %615, %259, %cst_121 {dimension_numbers = #tpu.dot_dimension_numbers<[1], [0], [0], [1], [0, 0, 1, 1], [], []>} : vector<1x32xf32>, vector<32x152xf32>, vector<1x152xf32> -> vector<1x152xf32>
    %617 = vector.extract_strided_slice %616 {offsets = [0, 0], sizes = [1, 96], strides = [1, 1]} : vector<1x152xf32> to vector<1x96xf32>
    %618 = arith.addf %617, %7 : vector<1x96xf32>
    %619 = vector.extract_strided_slice %616 {offsets = [0, 144], sizes = [1, 8], strides = [1, 1]} : vector<1x152xf32> to vector<1x8xf32>
    %620 = vector.extract_strided_slice %616 {offsets = [0, 96], sizes = [1, 48], strides = [1, 1]} : vector<1x152xf32> to vector<1x48xf32>
    %621 = arith.addf %620, %9 : vector<1x48xf32>
    %cst_122 = arith.constant dense<0xFF800000> : vector<1xf32>
    %622 = vector.multi_reduction <maximumf>, %621, %cst_122 [1] : vector<1x48xf32> to vector<1xf32>
    %623 = vector.shape_cast %622 : vector<1xf32> to vector<1x1xf32>
    %624 = vector.broadcast %623 : vector<1x1xf32> to vector<1x48xf32>
    %625 = arith.subf %621, %624 : vector<1x48xf32>
    %626 = math.exp %625 : vector<1x48xf32>
    %cst_123 = arith.constant dense<0.000000e+00> : vector<1xf32>
    %627 = vector.multi_reduction <add>, %626, %cst_123 [1] : vector<1x48xf32> to vector<1xf32>
    %628 = vector.shape_cast %627 : vector<1xf32> to vector<1x1xf32>
    %629 = math.log %628 : vector<1x1xf32>
    %630 = arith.addf %623, %629 : vector<1x1xf32>
    %c4_i32 = arith.constant 4 : i32
    %631 = vector.broadcast %c4_i32 : i32 to vector<6x48xi32>
    %632 = arith.cmpi eq, %262, %631 : vector<6x48xi32>
    %633 = vector.broadcast %630 : vector<1x1xf32> to vector<1x48xf32>
    %634 = arith.subf %621, %633 : vector<1x48xf32>
    %635 = vector.shape_cast %634 : vector<1x48xf32> to vector<1x48xf32>
    %636 = vector.broadcast %635 : vector<1x48xf32> to vector<6x48xf32>
    %637 = arith.select %632, %636, %561 : vector<6x48xi1>, vector<6x48xf32>
    %638 = vector.broadcast %623 : vector<1x1xf32> to vector<1x48xf32>
    %639 = arith.cmpf oeq, %621, %638 : vector<1x48xf32>
    %c48_i32_124 = arith.constant 48 : i32
    %640 = vector.broadcast %c48_i32_124 : i32 to vector<1x48xi32>
    %641 = arith.select %639, %260, %640 : vector<1x48xi1>, vector<1x48xi32>
    %cst_125 = arith.constant dense<2147483647> : vector<1xi32>
    %642 = vector.multi_reduction <minsi>, %641, %cst_125 [1] : vector<1x48xi32> to vector<1xi32>
    %643 = vector.shape_cast %642 : vector<1xi32> to vector<1x1xi32>
    %c4_i32_126 = arith.constant 4 : i32
    %644 = vector.broadcast %c4_i32_126 : i32 to vector<1x6xi32>
    %645 = arith.cmpi eq, %261, %644 : vector<1x6xi32>
    %646 = vector.shape_cast %643 : vector<1x1xi32> to vector<1x1xi32>
    %647 = vector.broadcast %646 : vector<1x1xi32> to vector<1x6xi32>
    %648 = arith.select %645, %647, %572 : vector<1x6xi1>, vector<1x6xi32>
    %649 = vector.broadcast %643 : vector<1x1xi32> to vector<1x48xi32>
    %650 = arith.cmpi eq, %260, %649 : vector<1x48xi32>
    %651 = arith.extui %650 : vector<1x48xi1> to vector<1x48xi32>
    %652 = arith.sitofp %651 : vector<1x48xi32> to vector<1x48xf32>
    %cst_127 = arith.constant dense<0xFF800000> : vector<1xf32>
    %653 = vector.multi_reduction <maximumf>, %619, %cst_127 [1] : vector<1x8xf32> to vector<1xf32>
    %654 = vector.shape_cast %653 : vector<1xf32> to vector<1x1xf32>
    %655 = vector.broadcast %654 : vector<1x1xf32> to vector<1x8xf32>
    %656 = arith.subf %619, %655 : vector<1x8xf32>
    %657 = math.exp %656 : vector<1x8xf32>
    %cst_128 = arith.constant dense<0.000000e+00> : vector<1xf32>
    %658 = vector.multi_reduction <add>, %657, %cst_128 [1] : vector<1x8xf32> to vector<1xf32>
    %659 = vector.shape_cast %658 : vector<1xf32> to vector<1x1xf32>
    %660 = tpu.reciprocal %659 {approx = true} : vector<1x1xf32> -> vector<1x1xf32>
    %cst_129 = arith.constant dense<0.000000e+00> : vector<1x96xf32>
    %661 = tpu.matmul %657, %257, %cst_129 {dimension_numbers = #tpu.dot_dimension_numbers<[1], [0], [0], [1], [0, 0, 1, 1], [], []>} : vector<1x8xf32>, vector<8x96xf32>, vector<1x96xf32> -> vector<1x96xf32>
    %662 = vector.broadcast %660 : vector<1x1xf32> to vector<1x96xf32>
    %663 = arith.mulf %661, %662 : vector<1x96xf32>
    %cst_130 = arith.constant dense<0.000000e+00> : vector<1x96xf32>
    %664 = tpu.matmul %652, %2, %cst_130 {dimension_numbers = #tpu.dot_dimension_numbers<[1], [0], [0], [1], [0, 0, 1, 1], [], []>} : vector<1x48xf32>, vector<48x96xf32>, vector<1x96xf32> -> vector<1x96xf32>
    %665 = arith.addf %664, %663 : vector<1x96xf32>
    %666 = vector.extract_strided_slice %665 {offsets = [0, 0], sizes = [1, 32], strides = [1, 1]} : vector<1x96xf32> to vector<1x32xf32>
    %667 = vector.extract_strided_slice %618 {offsets = [0, 0], sizes = [1, 32], strides = [1, 1]} : vector<1x96xf32> to vector<1x32xf32>
    %668 = arith.addf %666, %667 : vector<1x32xf32>
    %669 = arith.negf %668 : vector<1x32xf32>
    %670 = math.exp %669 : vector<1x32xf32>
    %cst_131 = arith.constant 1.000000e+00 : f32
    %671 = vector.broadcast %cst_131 : f32 to vector<1x32xf32>
    %672 = arith.addf %671, %670 : vector<1x32xf32>
    %673 = arith.divf %671, %672 : vector<1x32xf32>
    %674 = vector.extract_strided_slice %665 {offsets = [0, 32], sizes = [1, 32], strides = [1, 1]} : vector<1x96xf32> to vector<1x32xf32>
    %675 = vector.extract_strided_slice %618 {offsets = [0, 32], sizes = [1, 32], strides = [1, 1]} : vector<1x96xf32> to vector<1x32xf32>
    %676 = arith.addf %674, %675 : vector<1x32xf32>
    %677 = arith.negf %676 : vector<1x32xf32>
    %678 = math.exp %677 : vector<1x32xf32>
    %cst_132 = arith.constant 1.000000e+00 : f32
    %679 = vector.broadcast %cst_132 : f32 to vector<1x32xf32>
    %680 = arith.addf %679, %678 : vector<1x32xf32>
    %681 = arith.divf %679, %680 : vector<1x32xf32>
    %682 = vector.extract_strided_slice %665 {offsets = [0, 64], sizes = [1, 32], strides = [1, 1]} : vector<1x96xf32> to vector<1x32xf32>
    %683 = vector.extract_strided_slice %618 {offsets = [0, 64], sizes = [1, 32], strides = [1, 1]} : vector<1x96xf32> to vector<1x32xf32>
    %684 = arith.mulf %673, %683 : vector<1x32xf32>
    %685 = arith.addf %682, %684 : vector<1x32xf32>
    %686 = math.tanh %685 : vector<1x32xf32>
    %cst_133 = arith.constant 1.000000e+00 : f32
    %687 = vector.broadcast %cst_133 : f32 to vector<1x32xf32>
    %688 = arith.subf %687, %681 : vector<1x32xf32>
    %689 = arith.mulf %688, %686 : vector<1x32xf32>
    %690 = arith.mulf %681, %615 : vector<1x32xf32>
    %691 = arith.addf %689, %690 : vector<1x32xf32>
    %cst_134 = arith.constant dense<0.000000e+00> : vector<1x48xf32>
    %692 = tpu.matmul %691, %8, %cst_134 {dimension_numbers = #tpu.dot_dimension_numbers<[1], [0], [0], [1], [0, 0, 1, 1], [], []>} : vector<1x32xf32>, vector<32x48xf32>, vector<1x48xf32> -> vector<1x48xf32>
    %693 = arith.addf %692, %9 : vector<1x48xf32>
    %cst_135 = arith.constant dense<0xFF800000> : vector<1xf32>
    %694 = vector.multi_reduction <maximumf>, %693, %cst_135 [1] : vector<1x48xf32> to vector<1xf32>
    %695 = vector.shape_cast %694 : vector<1xf32> to vector<1x1xf32>
    %696 = vector.broadcast %695 : vector<1x1xf32> to vector<1x48xf32>
    %697 = arith.subf %693, %696 : vector<1x48xf32>
    %698 = math.exp %697 : vector<1x48xf32>
    %cst_136 = arith.constant dense<0.000000e+00> : vector<1xf32>
    %699 = vector.multi_reduction <add>, %698, %cst_136 [1] : vector<1x48xf32> to vector<1xf32>
    %700 = vector.shape_cast %699 : vector<1xf32> to vector<1x1xf32>
    %701 = math.log %700 : vector<1x1xf32>
    %702 = arith.addf %695, %701 : vector<1x1xf32>
    %c5_i32 = arith.constant 5 : i32
    %703 = vector.broadcast %c5_i32 : i32 to vector<6x48xi32>
    %704 = arith.cmpi eq, %262, %703 : vector<6x48xi32>
    %705 = vector.broadcast %702 : vector<1x1xf32> to vector<1x48xf32>
    %706 = arith.subf %693, %705 : vector<1x48xf32>
    %707 = vector.shape_cast %706 : vector<1x48xf32> to vector<1x48xf32>
    %708 = vector.broadcast %707 : vector<1x48xf32> to vector<6x48xf32>
    %709 = arith.select %704, %708, %637 : vector<6x48xi1>, vector<6x48xf32>
    %710 = vector.broadcast %695 : vector<1x1xf32> to vector<1x48xf32>
    %711 = arith.cmpf oeq, %693, %710 : vector<1x48xf32>
    %c48_i32_137 = arith.constant 48 : i32
    %712 = vector.broadcast %c48_i32_137 : i32 to vector<1x48xi32>
    %713 = arith.select %711, %260, %712 : vector<1x48xi1>, vector<1x48xi32>
    %cst_138 = arith.constant dense<2147483647> : vector<1xi32>
    %714 = vector.multi_reduction <minsi>, %713, %cst_138 [1] : vector<1x48xi32> to vector<1xi32>
    %715 = vector.shape_cast %714 : vector<1xi32> to vector<1x1xi32>
    %c5_i32_139 = arith.constant 5 : i32
    %716 = vector.broadcast %c5_i32_139 : i32 to vector<1x6xi32>
    %717 = arith.cmpi eq, %261, %716 : vector<1x6xi32>
    %718 = vector.shape_cast %715 : vector<1x1xi32> to vector<1x1xi32>
    %719 = vector.broadcast %718 : vector<1x1xi32> to vector<1x6xi32>
    %720 = arith.select %717, %719, %648 : vector<1x6xi1>, vector<1x6xi32>
    %c0_140 = arith.constant 0 : index
    %c0_141 = arith.constant 0 : index
    %c0_142 = arith.constant 0 : index
    %721 = vector.load %arg4[%c0_140, %c0_141, %c0_142] : memref<1x6x48xf32, #tpu.memory_space<vmem>>, vector<1x6x48xf32>
    %722 = vector.shape_cast %721 : vector<1x6x48xf32> to vector<6x48xf32>
    %723 = vector.shape_cast %709 : vector<6x48xf32> to vector<1x6x48xf32>
    tpu.vector_store %arg4[%c0_140, %c0_141, %c0_142], %723 {strides = array<i32>} : memref<1x6x48xf32, #tpu.memory_space<vmem>>, vector<1x6x48xf32>,
    %c0_143 = arith.constant 0 : index
    %c0_144 = arith.constant 0 : index
    %c0_145 = arith.constant 0 : index
    %724 = vector.load %arg5[%c0_143, %c0_144, %c0_145] : memref<1x1x6xi32, #tpu.memory_space<vmem>>, vector<1x1x6xi32>
    %725 = vector.shape_cast %724 : vector<1x1x6xi32> to vector<1x6xi32>
    %726 = vector.shape_cast %720 : vector<1x6xi32> to vector<1x1x6xi32>
    tpu.vector_store %arg5[%c0_143, %c0_144, %c0_145], %726 {strides = array<i32>} : memref<1x1x6xi32, #tpu.memory_space<vmem>>, vector<1x1x6xi32>,
    return
  }
  func.func @transform_0(%arg0: i32) -> (i32, i32, i32) {
    %c0_i32 = arith.constant 0 : i32
    %c0_i32_0 = arith.constant 0 : i32
    %c0_i32_1 = arith.constant 0 : i32
    return %arg0, %c0_i32, %c0_i32_0 : i32, i32, i32
  }
  func.func @transform_1(%arg0: i32) -> (i32, i32) {
    %c0_i32 = arith.constant 0 : i32
    %c0_i32_0 = arith.constant 0 : i32
    %c0_i32_1 = arith.constant 0 : i32
    return %c0_i32, %c0_i32_0 : i32, i32
  }
  func.func @transform_2(%arg0: i32) -> (i32, i32) {
    %c0_i32 = arith.constant 0 : i32
    %c0_i32_0 = arith.constant 0 : i32
    %c0_i32_1 = arith.constant 0 : i32
    return %c0_i32, %c0_i32_0 : i32, i32
  }
  func.func @transform_3(%arg0: i32) -> (i32, i32, i32) {
    %c0_i32 = arith.constant 0 : i32
    %c0_i32_0 = arith.constant 0 : i32
    %c0_i32_1 = arith.constant 0 : i32
    return %arg0, %c0_i32, %c0_i32_0 : i32, i32, i32
  }
  func.func @transform_4(%arg0: i32) -> (i32, i32, i32) {
    %c0_i32 = arith.constant 0 : i32
    %c0_i32_0 = arith.constant 0 : i32
    %c0_i32_1 = arith.constant 0 : i32
    return %arg0, %c0_i32, %c0_i32_0 : i32, i32, i32
  }
}

</mosaic_0001>

<llo_original>
// kernel: tpu_custom_call.1
$region0: #{tpu_custom_call.1}
  #allocation0 [shape = 'u32[]', space=smem, size = 0x4, offset = 0x4, fixed_abs, tag = 'smem constant byte address 0x4 - core index']
  #allocation1 [shape = 'u32[144,128]{1,0:T(1,128)}', space=vmem, size = 0x12000, scoped, tag = 'internal scratch']
  #allocation2 [shape = 'f32[8,32]{1,0:T(8,128)}', space=vmem, size = 0x1000, scoped, tag = 'scratch operand']
  %s0 = inlined_call_operand.vmem [shape: f32[2,8,64], index: 0, kind: input, shape index: {}]
  %s1 = inlined_call_operand.vmem [shape: f32[232,96], index: 1, kind: input, shape index: {}]
  %s2 = inlined_call_operand.vmem [shape: f32[40,48], index: 2, kind: input, shape index: {}]
  %s3 = inlined_call_operand.vmem [shape: f32[2,6,48], index: 3, kind: output, shape index: {0}]
  %s4 = inlined_call_operand.hbm [shape: s32[2,1,6], index: 4, kind: output, shape index: {1}]
  %5 = xla_tuple %s3, %s4
  %s6 = sld [smem:[#allocation0]]
  $region53: #{tpu_custom_call.1} parent=0
    _
  %s8 = ssub.s32 1, %s6
  %s9 = scalar_select 0, %s8, %s6
  $region1: #{tpu_custom_call.1} parent=0
    #allocation3 [shape = 'u8[1024]{0}', space=vmem, size = 0x400, scoped, tag = 'output window, operand 1']
    #allocation4 [shape = 's32[2]{0}', space=sflag, size = 0x8, scoped, tag = 'scoped memory for tpu_custom_call.1']
    %10 = vsyncpa [#allocation4], 0
    %s11 = scalar_lea.sflag [#allocation4], 1
    %12 = vsyncpa %s11, 0
    loop: start=0, step=1, limit=4
    $region2: #{tpu_custom_call.1} parent=1 // loop_pre_header
      _
    $region3: #{tpu_custom_call.1} parent=1 // loop_header
      %s14 = sphi 0, %s18
      %p15 = scmp.ge.s32.totalorder %s14, 4
      %s24 = sphi 0, %s26
      %s27 = sphi 0, %s24
      %s28 = sphi 0, %s27
      %s44 = sphi 0, %s28
      %s48 = sphi 0, %s48
      %s50 = sphi 0, %s48
      %s51 = sphi 0, %s50
      %s65 = sphi 0, %s51
      %s69 = sphi 0, %s69
      %s71 = sphi 0, %s69
      %s72 = sphi 0, %s71
      %s86 = sphi 0, %s72
      %s92 = sphi 0, %s94
      %s95 = sphi 0, %s92
      %s96 = sphi 0, %s95
      %s112 = sphi 0, %s96
      %s118 = sphi 0, %s120
      %s121 = sphi 0, %s118
      %s122 = sphi 0, %s121
      %s138 = sphi 0, %s122
    $region4: #{tpu_custom_call.1} parent=1 // loop_header_branch
      %17 = sbr.rel (%p15) target = $region8
    $region5: #{tpu_custom_call.1} parent=1 // loop_body
      %s19 = ssub.s32 %s14, 1
      %s20 = ssub.s32 %s14, 2
      %s21 = sadd.s32 %s14, 1
      %s22 = ssub.s32 %s14, %s21
      %p23 = scmp.eq.s32.totalorder %s22, 0
      %s25 = sadd.s32 %s24, 1
      %s26 = scalar_select %p23, %s24, %s25
      %p29 = pneg %p23
      %p30 = scmp.eq.s32.totalorder %s14, 1
      %p31 = por %p29, %p30
      %p32 = scmp.ne.s32.totalorder %s24, %s27
      %p33 = scmp.eq.s32.totalorder %s14, 0
      %p34 = por %p32, %p33
      %p35 = scmp.ne.s32.totalorder %s24, %s27
      %p36 = scmp.eq.s32.totalorder %s19, 1
      %p37 = por %p35, %p36
      %p38 = scmp.ne.s32.totalorder %s27, %s28
      %p39 = scmp.eq.s32.totalorder %s19, 0
      %p40 = por %p38, %p39
      %p41 = scmp.ne.s32.totalorder %s27, %s28
      %p42 = scmp.eq.s32.totalorder %s20, 1
      %p43 = por %p41, %p42
      %p45 = scmp.ne.s32.totalorder %s28, %s44
      %p46 = scmp.eq.s32.totalorder %s20, 0
      %p47 = por %p45, %p46
      %s49 = sadd.s32 %s48, 1
      %p52 = scmp.eq.s32.totalorder %s14, 1
      %p53 = scmp.ne.s32.totalorder %s48, %s50
      %p54 = scmp.eq.s32.totalorder %s14, 0
      %p55 = por %p53, %p54
      %p56 = scmp.ne.s32.totalorder %s48, %s50
      %p57 = scmp.eq.s32.totalorder %s19, 1
      %p58 = por %p56, %p57
      %p59 = scmp.ne.s32.totalorder %s50, %s51
      %p60 = scmp.eq.s32.totalorder %s19, 0
      %p61 = por %p59, %p60
      %p62 = scmp.ne.s32.totalorder %s50, %s51
      %p63 = scmp.eq.s32.totalorder %s20, 1
      %p64 = por %p62, %p63
      %p66 = scmp.ne.s32.totalorder %s51, %s65
      %p67 = scmp.eq.s32.totalorder %s20, 0
      %p68 = por %p66, %p67
      %s70 = sadd.s32 %s69, 1
      %p73 = scmp.eq.s32.totalorder %s14, 1
      %p74 = scmp.ne.s32.totalorder %s69, %s71
      %p75 = scmp.eq.s32.totalorder %s14, 0
      %p76 = por %p74, %p75
      %p77 = scmp.ne.s32.totalorder %s69, %s71
      %p78 = scmp.eq.s32.totalorder %s19, 1
      %p79 = por %p77, %p78
      %p80 = scmp.ne.s32.totalorder %s71, %s72
      %p81 = scmp.eq.s32.totalorder %s19, 0
      %p82 = por %p80, %p81
      %p83 = scmp.ne.s32.totalorder %s71, %s72
      %p84 = scmp.eq.s32.totalorder %s20, 1
      %p85 = por %p83, %p84
      %p87 = scmp.ne.s32.totalorder %s72, %s86
      %p88 = scmp.eq.s32.totalorder %s20, 0
      %p89 = por %p87, %p88
      %s90 = ssub.s32 %s14, %s21
      %p91 = scmp.eq.s32.totalorder %s90, 0
      %s93 = sadd.s32 %s92, 1
      %s94 = scalar_select %p91, %s92, %s93
      %p97 = pneg %p91
      %p98 = scmp.eq.s32.totalorder %s14, 1
      %p99 = por %p97, %p98
      %p100 = scmp.ne.s32.totalorder %s92, %s95
      %p101 = scmp.eq.s32.totalorder %s14, 0
      %p102 = por %p100, %p101
      %p103 = scmp.ne.s32.totalorder %s92, %s95
      %p104 = scmp.eq.s32.totalorder %s19, 1
      %p105 = por %p103, %p104
      %p106 = scmp.ne.s32.totalorder %s95, %s96
      %p107 = scmp.eq.s32.totalorder %s19, 0
      %p108 = por %p106, %p107
      %p109 = scmp.ne.s32.totalorder %s95, %s96
      %p110 = scmp.eq.s32.totalorder %s20, 1
      %p111 = por %p109, %p110
      %p113 = scmp.ne.s32.totalorder %s96, %s112
      %p114 = scmp.eq.s32.totalorder %s20, 0
      %p115 = por %p113, %p114
      %s116 = ssub.s32 %s14, %s21
      %p117 = scmp.eq.s32.totalorder %s116, 0
      %s119 = sadd.s32 %s118, 1
      %s120 = scalar_select %p117, %s118, %s119
      %p123 = pneg %p117
      %p124 = scmp.eq.s32.totalorder %s14, 1
      %p125 = por %p123, %p124
      %p126 = scmp.ne.s32.totalorder %s118, %s121
      %p127 = scmp.eq.s32.totalorder %s14, 0
      %p128 = por %p126, %p127
      %p129 = scmp.ne.s32.totalorder %s118, %s121
      %p130 = scmp.eq.s32.totalorder %s19, 1
      %p131 = por %p129, %p130
      %p132 = scmp.ne.s32.totalorder %s121, %s122
      %p133 = scmp.eq.s32.totalorder %s19, 0
      %p134 = por %p132, %p133
      %p135 = scmp.ne.s32.totalorder %s121, %s122
      %p136 = scmp.eq.s32.totalorder %s20, 1
      %p137 = por %p135, %p136
      %p139 = scmp.ne.s32.totalorder %s122, %s138
      %p140 = scmp.eq.s32.totalorder %s20, 0
      %p141 = por %p139, %p140
      %p142 = scmp.le.s32.totalorder 1, %s14
      %p143 = scmp.lt.s32.totalorder %s14, 3
      %p144 = pnand %p142, %p143
      %p145 = pneg %p144
      // Predicated region
      $region9: #{tpu_custom_call.1} parent=5 // pred_check
        _
      $region10: #{tpu_custom_call.1} parent=5 // pred_check_branch
        %147 = sbr.rel (%p144) target = $region12
      $region11: #{tpu_custom_call.1} parent=5 // pred_region
        %s148 = ssub.s32 %s14, 1
        // Predicated region
        $region13: #{tpu_custom_call.1} parent=11 // pred_check
          %p149 = pneg %p61
        $region14: #{tpu_custom_call.1} parent=11 // pred_check_branch
          %151 = sbr.rel (%p149) target = $region16
        $region15: #{tpu_custom_call.1} parent=11 // pred_region
          _
        $region16: #{tpu_custom_call.1} parent=11 // pred_fallthru
          _
        // Predicated region
        $region17: #{tpu_custom_call.1} parent=11 // pred_check
          %p152 = pneg %p82
        $region18: #{tpu_custom_call.1} parent=11 // pred_check_branch
          %154 = sbr.rel (%p152) target = $region20
        $region19: #{tpu_custom_call.1} parent=11 // pred_region
          _
        $region20: #{tpu_custom_call.1} parent=11 // pred_fallthru
          _
      $region12: #{tpu_custom_call.1} parent=5 // pred_fallthru
        _
      %p155 = scmp.lt.s32.totalorder %s14, 2
      // Predicated region
      $region21: #{tpu_custom_call.1} parent=5 // pred_check
        %p156 = pneg %p155
      $region22: #{tpu_custom_call.1} parent=5 // pred_check_branch
        %158 = sbr.rel (%p156) target = $region24
      $region23: #{tpu_custom_call.1} parent=5 // pred_region
        // Predicated region
        $region25: #{tpu_custom_call.1} parent=23 // pred_check
          %p159 = pneg %p34
        $region26: #{tpu_custom_call.1} parent=23 // pred_check_branch
          %161 = sbr.rel (%p159) target = $region28
        $region27: #{tpu_custom_call.1} parent=23 // pred_region
          %p162 = scmp.lt.s32.totalorder %s14, 1
          %s163 = scalar_select %p162, %s14, 1
          %s164 = smul.addr %s163, 8
          %s165 = scalar_lea.vmem %s0, %s164
        $region28: #{tpu_custom_call.1} parent=23 // pred_fallthru
          _
      $region24: #{tpu_custom_call.1} parent=5 // pred_fallthru
        _
      %p166 = scmp.le.s32.totalorder 1, %s14
      %p167 = scmp.lt.s32.totalorder %s14, 3
      %p168 = pnand %p166, %p167
      %p169 = pneg %p168
      // Predicated region
      $region29: #{tpu_custom_call.1} parent=5 // pred_check
        _
      $region30: #{tpu_custom_call.1} parent=5 // pred_check_branch
        %171 = sbr.rel (%p168) target = $region32
      $region31: #{tpu_custom_call.1} parent=5 // pred_region
        %s172 = ssub.s32 %s14, 1
        %p173 = scmp.lt.s32.totalorder %s19, 1
        %s174 = scalar_select %p173, %s19, 1
        %s175 = smul.addr %s174, 8
        %s176 = scalar_lea.vmem %s0, %s175
        %p177 = pneg %p40
        %p178 = pneg %p37
        %p179 = pneg %p61
        %p180 = pneg %p58
        %p181 = pneg %p82
        %p182 = pneg %p79
        %p183 = pneg %p108
        %p184 = pneg %p105
        %p185 = scmp.lt.s32.totalorder %s19, 1
        %s186 = scalar_select %p185, %s19, 1
        %s187 = smul.addr %s186, 8
        %s188 = scalar_lea.vmem %s3, %s187
        %p189 = pneg %p134
        %p190 = pneg %p131
        %s191 = sand.u32 %s121, 1
        %s192 = scalar_lea.sflag [#allocation4], %s191
        %s193 = sand.u32 %s121, 1
        %s194 = scalar_lea.vmem [#allocation3], %s193
        %p195 = scmp.lt.s32.totalorder %s19, 1
        %s196 = scalar_select %p195, %s19, 1
        %s197 = smul.addr %s196, 8
        %s198 = scalar_lea.vmem %s0, %s197
        %p199 = scmp.lt.s32.totalorder %s19, 1
        %s200 = scalar_select %p199, %s19, 1
        %s201 = smul.addr %s200, 8
        %s202 = scalar_lea.vmem %s3, %s201
        %v203 = vld [vmem:[%s1] sm:$0xff]
        %v204 = vld [vmem:[%s1 + $0x8] sm:$0xff]
        %v205 = vld [vmem:[%s1 + $0x10] sm:$0xff]
        %v206 = vld [vmem:[%s1 + $0x18] sm:$0xff]
        %v207 = vld [vmem:[%s1 + $0x20] sm:$0xff]
        %v208 = vld [vmem:[%s1 + $0x28] sm:$0xff]
        %v209 = vld [vmem:[%s1 + $0x30] sm:$0xff]
        %v210 = vld [vmem:[%s1 + $0x38] sm:$0xff]
        %v211 = vld [vmem:[%s1 + $0x40] sm:$0xff]
        %v212 = vld [vmem:[%s1 + $0x48] sm:$0xff]
        %v213 = vld [vmem:[%s1 + $0x50] sm:$0xff]
        %v214 = vld [vmem:[%s1 + $0x58] sm:$0xff]
        %v215 = vld [vmem:[%s1 + $0x60] sm:$0xff]
        %v216 = vld [vmem:[%s1 + $0x68] sm:$0xff]
        %v217 = vld [vmem:[%s1 + $0x70] sm:$0xff]
        %v218 = vld [vmem:[%s1 + $0x78] sm:$0xff]
        %v219 = vld [vmem:[%s1 + $0x80] sm:$0xff]
        %v220 = vld [vmem:[%s1 + $0x88] sm:$0xff]
        %v221 = vld [vmem:[%s1 + $0x90] sm:$0xff]
        %v222 = vld [vmem:[%s1 + $0x98] sm:$0xff]
        %v223 = vld [vmem:[%s1 + $0xa0] sm:$0xff]
        %v224 = vld [vmem:[%s1 + $0xa8] sm:$0xff]
        %v225 = vld [vmem:[%s1 + $0xb0] sm:$0xff]
        %v226 = vld [vmem:[%s1 + $0xb8] sm:$0xff]
        %v227 = vld [vmem:[%s1 + $0xc0] sm:$0xff]
        %v228 = vld [vmem:[%s1 + $0xc8] sm:$0xff]
        %v229 = vld [vmem:[%s1 + $0xd0] sm:$0x1]
        %v230 = vld [vmem:[%s1 + $0xd8] sm:$0x1]
        %v231 = vld [vmem:[%s1 + $0xe0] sm:$0x1]
        %v232 = vld [vmem:[%s2] sm:$0xff]
        %v233 = vld [vmem:[%s2 + $0x8] sm:$0xff]
        %v234 = vld [vmem:[%s2 + $0x10] sm:$0xff]
        %v235 = vld [vmem:[%s2 + $0x18] sm:$0xff]
        %v236 = vld [vmem:[%s2 + $0x20] sm:$0x1]
        %v237 = vld [vmem:[%s198] sm:$0xff]
        %v238 = vlaneseq
        %v239 = vshrl.u32 %v238, 7
        %v240 = vsub.s32 0, %v239
        %v241 = vrot.slane %v229, %v240
        %vm242 = vcmask 523264
        %v244 = vsel %vm242, %v237, 0
        %246 = vmatprep.subr.mxu0 0.0
        %247 = vmatpush1.msra.mxu0 %v203
        %248 = vmatprep.subr.mxu0 0.0
        %249 = vmatpush1.msra.mxu0 %v204
        %250 = vmatprep.subr.mxu0 0.0
        %251 = vmatpush1.msra.mxu0 %v205
        %252 = vmatprep.subr.mxu0 0.0
        %253 = vmatpush1.msra.mxu0 %v206
        %254 = vmatprep.subr.mxu0 0.0
        %255 = vmatpush1.msra.mxu0 %v207
        %256 = vmatprep.subr.mxu0 0.0
        %257 = vmatpush1.msra.mxu0 %v208
        %258 = vmatprep.subr.mxu0 0.0
        %259 = vmatpush1.msra.mxu0 %v209
        %260 = vmatprep.subr.mxu0 0.0
        %261 = vmatpush1.msra.mxu0 %v210
        %262 = vmatprep.subr.mxu0 0.0
        %263 = vmatpush1.msra.mxu0 0.0
        %264 = vmatprep.subr.mxu0 0.0
        %265 = vmatpush1.msra.mxu0 0.0
        %266 = vmatprep.subr.mxu0 0.0
        %267 = vmatpush1.msra.mxu0 0.0
        %268 = vmatprep.subr.mxu0 0.0
        %269 = vmatpush1.msra.mxu0 0.0
        %270 = vmatprep.subr.mxu0 0.0
        %271 = vmatpush1.msra.mxu0 0.0
        %272 = vmatprep.subr.mxu0 0.0
        %273 = vmatpush1.msra.mxu0 0.0
        %274 = vmatprep.subr.mxu0 0.0
        %275 = vmatpush1.msra.mxu0 0.0
        %276 = vmatprep.subr.mxu0 0.0
        %277 = vmatpush1.msra.mxu0 0.0
        %278 = vmatprep.subr.mxu0 0.0
        %279 = vmatpush1.msra.mxu0 0.0
        %280 = vmatprep.subr.mxu0 0.0
        %281 = vmatpush1.msra.mxu0 0.0
        %282 = vmatprep.subr.mxu0 0.0
        %283 = vmatpush1.msra.mxu0 0.0
        %284 = vmatprep.subr.mxu0 0.0
        %285 = vmatpush1.msra.mxu0 0.0
        %286 = vmatprep.subr.mxu0 0.0
        %287 = vmatpush1.msra.mxu0 0.0
        %288 = vmatprep.subr.mxu0 0.0
        %289 = vmatpush1.msra.mxu0 0.0
        %290 = vmatprep.subr.mxu0 0.0
        %291 = vmatpush1.msra.mxu0 0.0
        %292 = vmatprep.subr.mxu0 0.0
        %293 = vmatpush1.msra.mxu0 0.0
        %294 = vmatprep.subr.mxu0 0.0
        %295 = vmatpush1.msra.mxu0 0.0
        %296 = vmatprep.subr.mxu0 0.0
        %297 = vmatpush1.msra.mxu0 0.0
        %298 = vmatprep.subr.mxu0 0.0
        %299 = vmatpush1.msra.mxu0 0.0
        %300 = vmatprep.subr.mxu0 0.0
        %301 = vmatpush1.msra.mxu0 0.0
        %302 = vmatprep.subr.mxu0 0.0
        %303 = vmatpush1.msra.mxu0 0.0
        %304 = vmatprep.subr.mxu0 0.0
        %305 = vmatpush1.msra.mxu0 0.0
        %306 = vmatprep.subr.mxu0 0.0
        %307 = vmatpush1.msra.mxu0 0.0
        %308 = vmatprep.subr.mxu0 0.0
        %309 = vmatpush1.msra.mxu0 0.0
        %310 = vmatprep.mubr.f32.mxu0 0.0
        %311 = vmatmul.mubr.f32.gmra.mrb[0].mxu0 %v244
        %v312 = vpop.f32.mrb[0].mxu0
        %v313 = vadd.f32 %v241, %v312
        %v314 = vpop.f32.mrb[0].mxu0
        %315 = vdwg.mxu0
        %vm316 = vcmask 261120
        %v318 = vsel %vm316, 0.0, 0
        %320 = vmatprep.subr.mxu0 0.0
        %321 = vmatpush1.msra.mxu0 %v211
        %322 = vmatprep.subr.mxu0 0.0
        %323 = vmatpush1.msra.mxu0 %v212
        %324 = vmatprep.subr.mxu0 0.0
        %325 = vmatpush1.msra.mxu0 %v213
        %326 = vmatprep.subr.mxu0 0.0
        %327 = vmatpush1.msra.mxu0 %v214
        %328 = vmatprep.subr.mxu0 0.0
        %329 = vmatpush1.msra.mxu0 0.0
        %330 = vmatprep.subr.mxu0 0.0
        %331 = vmatpush1.msra.mxu0 0.0
        %332 = vmatprep.subr.mxu0 0.0
        %333 = vmatpush1.msra.mxu0 0.0
        %334 = vmatprep.subr.mxu0 0.0
        %335 = vmatpush1.msra.mxu0 0.0
        %336 = vmatprep.subr.mxu0 0.0
        %337 = vmatpush1.msra.mxu0 0.0
        %338 = vmatprep.subr.mxu0 0.0
        %339 = vmatpush1.msra.mxu0 0.0
        %340 = vmatprep.subr.mxu0 0.0
        %341 = vmatpush1.msra.mxu0 0.0
        %342 = vmatprep.subr.mxu0 0.0
        %343 = vmatpush1.msra.mxu0 0.0
        %344 = vmatprep.subr.mxu0 0.0
        %345 = vmatpush1.msra.mxu0 0.0
        %346 = vmatprep.subr.mxu0 0.0
        %347 = vmatpush1.msra.mxu0 0.0
        %348 = vmatprep.subr.mxu0 0.0
        %349 = vmatpush1.msra.mxu0 0.0
        %350 = vmatprep.subr.mxu0 0.0
        %351 = vmatpush1.msra.mxu0 0.0
        %352 = vmatprep.subr.mxu0 0.0
        %353 = vmatpush1.msra.mxu0 0.0
        %354 = vmatprep.subr.mxu0 0.0
        %355 = vmatpush1.msra.mxu0 0.0
        %356 = vmatprep.subr.mxu0 0.0
        %357 = vmatpush1.msra.mxu0 0.0
        %358 = vmatprep.subr.mxu0 0.0
        %359 = vmatpush1.msra.mxu0 0.0
        %360 = vmatprep.subr.mxu0 0.0
        %361 = vmatpush1.msra.mxu0 0.0
        %362 = vmatprep.subr.mxu0 0.0
        %363 = vmatpush1.msra.mxu0 0.0
        %364 = vmatprep.subr.mxu0 0.0
        %365 = vmatpush1.msra.mxu0 0.0
        %366 = vmatprep.subr.mxu0 0.0
        %367 = vmatpush1.msra.mxu0 0.0
        %368 = vmatprep.subr.mxu0 0.0
        %369 = vmatpush1.msra.mxu0 0.0
        %370 = vmatprep.subr.mxu0 0.0
        %371 = vmatpush1.msra.mxu0 0.0
        %372 = vmatprep.subr.mxu0 0.0
        %373 = vmatpush1.msra.mxu0 0.0
        %374 = vmatprep.subr.mxu0 0.0
        %375 = vmatpush1.msra.mxu0 0.0
        %376 = vmatprep.subr.mxu0 0.0
        %377 = vmatpush1.msra.mxu0 0.0
        %378 = vmatprep.subr.mxu0 0.0
        %379 = vmatpush1.msra.mxu0 0.0
        %380 = vmatprep.subr.mxu0 0.0
        %381 = vmatpush1.msra.mxu0 0.0
        %382 = vmatprep.subr.mxu0 0.0
        %383 = vmatpush1.msra.mxu0 0.0
        %384 = vmatprep.mubr.f32.mxu0 0.0
        %385 = vmatmul.mubr.f32.gmra.mrb[0].mxu0 %v318
        %v386 = vpop.f32.mrb[0].mxu0
        %v387 = vadd.f32 %v230, %v386
        %v388 = vpop.f32.mrb[0].mxu0
        %389 = vdwg.mxu0
        %v390 = vadd.f32 %v313, %v387
        %v391 = vxor.u32 %v390, 2147483648
        %v392 = vmul.f32 %v391, 1.442695
        %v393 = vpow.pop %v392
        %v394 = vadd.f32 %v393, 1.0
        %v395 = vrcp.pop %v394
        %v396 = vmul.f32 1.0, %v395
        %398 = vrot.lane.b32.xlu0 %v387, 64
        %v399 = vpop.permute.xlu0 %398
        %v401 = vmul.f32 %v396, %v399
        %403 = vrot.lane.b32.xlu0 %v401, 64
        %v404 = vpop.permute.xlu0 %403
        %v406 = vadd.f32 %v313, %v404
        %v407 = vtanh.pop %v406
        %v408 = vsub.f32 1.0, %v396
        %410 = vrot.lane.b32.xlu0 %v407, 96
        %v411 = vpop.permute.xlu0 %410
        %v413 = vmul.f32 %v408, %v411
        %v414 = vmul.f32 %v396, 0.0
        %v415 = vadd.f32 %v413, %v414
        %417 = vrot.lane.b32.xlu0 %v415, 96
        %v418 = vpop.permute.xlu0 %417
        %vm420 = vcmask 253952
        %421 = vst.msk [vmem:[#allocation2] sm:$0x1] %vm420, %v418
        %v422 = vsel %vm316, %v418, 0
        %424 = vmatprep.subr.mxu0 0.0
        %425 = vmatpush1.msra.mxu0 %v211
        %426 = vmatprep.subr.mxu0 0.0
        %427 = vmatpush1.msra.mxu0 %v212
        %428 = vmatprep.subr.mxu0 0.0
        %429 = vmatpush1.msra.mxu0 %v213
        %430 = vmatprep.subr.mxu0 0.0
        %431 = vmatpush1.msra.mxu0 %v214
        %432 = vmatprep.subr.mxu0 0.0
        %433 = vmatpush1.msra.mxu0 0.0
        %434 = vmatprep.subr.mxu0 0.0
        %435 = vmatpush1.msra.mxu0 0.0
        %436 = vmatprep.subr.mxu0 0.0
        %437 = vmatpush1.msra.mxu0 0.0
        %438 = vmatprep.subr.mxu0 0.0
        %439 = vmatpush1.msra.mxu0 0.0
        %440 = vmatprep.subr.mxu0 0.0
        %441 = vmatpush1.msra.mxu0 0.0
        %442 = vmatprep.subr.mxu0 0.0
        %443 = vmatpush1.msra.mxu0 0.0
        %444 = vmatprep.subr.mxu0 0.0
        %445 = vmatpush1.msra.mxu0 0.0
        %446 = vmatprep.subr.mxu0 0.0
        %447 = vmatpush1.msra.mxu0 0.0
        %448 = vmatprep.subr.mxu0 0.0
        %449 = vmatpush1.msra.mxu0 0.0
        %450 = vmatprep.subr.mxu0 0.0
        %451 = vmatpush1.msra.mxu0 0.0
        %452 = vmatprep.subr.mxu0 0.0
        %453 = vmatpush1.msra.mxu0 0.0
        %454 = vmatprep.subr.mxu0 0.0
        %455 = vmatpush1.msra.mxu0 0.0
        %456 = vmatprep.subr.mxu0 0.0
        %457 = vmatpush1.msra.mxu0 0.0
        %458 = vmatprep.subr.mxu0 0.0
        %459 = vmatpush1.msra.mxu0 0.0
        %460 = vmatprep.subr.mxu0 0.0
        %461 = vmatpush1.msra.mxu0 0.0
        %462 = vmatprep.subr.mxu0 0.0
        %463 = vmatpush1.msra.mxu0 0.0
        %464 = vmatprep.subr.mxu0 0.0
        %465 = vmatpush1.msra.mxu0 0.0
        %466 = vmatprep.subr.mxu0 0.0
        %467 = vmatpush1.msra.mxu0 0.0
        %468 = vmatprep.subr.mxu0 0.0
        %469 = vmatpush1.msra.mxu0 0.0
        %470 = vmatprep.subr.mxu0 0.0
        %471 = vmatpush1.msra.mxu0 0.0
        %472 = vmatprep.subr.mxu0 0.0
        %473 = vmatpush1.msra.mxu0 0.0
        %474 = vmatprep.subr.mxu0 0.0
        %475 = vmatpush1.msra.mxu0 0.0
        %476 = vmatprep.subr.mxu0 0.0
        %477 = vmatpush1.msra.mxu0 0.0
        %478 = vmatprep.subr.mxu0 0.0
        %479 = vmatpush1.msra.mxu0 0.0
        %480 = vmatprep.subr.mxu0 0.0
        %481 = vmatpush1.msra.mxu0 0.0
        %482 = vmatprep.subr.mxu0 0.0
        %483 = vmatpush1.msra.mxu0 0.0
        %484 = vmatprep.subr.mxu0 0.0
        %485 = vmatpush1.msra.mxu0 0.0
        %486 = vmatprep.subr.mxu0 0.0
        %487 = vmatpush1.msra.mxu0 0.0
        %488 = vmatprep.mubr.f32.mxu0 0.0
        %489 = vmatmul.mubr.f32.gmra.mrb[0].mxu0 %v422
        %v490 = vpop.f32.mrb[0].mxu0
        %v491 = vadd.f32 %v230, %v490
        %v492 = vpop.f32.mrb[0].mxu0
        %493 = vdwg.mxu0
        %v495 = vrot.slane %v491, 7
        %v497 = vadd.f32 %v313, %v495
        %v498 = vxor.u32 %v497, 2147483648
        %v499 = vmul.f32 %v498, 1.442695
        %v500 = vpow.pop %v499
        %v501 = vadd.f32 %v500, 1.0
        %v502 = vrcp.pop %v501
        %v503 = vmul.f32 1.0, %v502
        %504 = vrot.lane.b32.xlu0 %v495, 64
        %v505 = vpop.permute.xlu0 %504
        %v507 = vmul.f32 %v503, %v505
        %509 = vrot.lane.b32.xlu0 %v507, 64
        %v510 = vpop.permute.xlu0 %509
        %v512 = vadd.f32 %v313, %v510
        %v513 = vtanh.pop %v512
        %v514 = vsub.f32 1.0, %v503
        %516 = vrot.lane.b32.xlu0 %v513, 96
        %v517 = vpop.permute.xlu0 %516
        %v519 = vmul.f32 %v514, %v517
        %v520 = vrot.slane %v415, 7
        %v522 = vmul.f32 %v503, %v520
        %v523 = vadd.f32 %v519, %v522
        %525 = vrot.lane.b32.xlu0 %v523, 96
        %v526 = vpop.permute.xlu0 %525
        %vm528 = vcmask 254977
        %529 = vst.msk [vmem:[#allocation2] sm:$0x2] %vm528, %v526
        %v530 = vrot.slane %v523, 1
        %531 = vrot.lane.b32.xlu0 %v530, 96
        %v532 = vpop.permute.xlu0 %531
        %v533 = vsel %vm316, %v532, 0
        %535 = vmatprep.subr.mxu0 0.0
        %536 = vmatpush1.msra.mxu0 %v211
        %537 = vmatprep.subr.mxu0 0.0
        %538 = vmatpush1.msra.mxu0 %v212
        %539 = vmatprep.subr.mxu0 0.0
        %540 = vmatpush1.msra.mxu0 %v213
        %541 = vmatprep.subr.mxu0 0.0
        %542 = vmatpush1.msra.mxu0 %v214
        %543 = vmatprep.subr.mxu0 0.0
        %544 = vmatpush1.msra.mxu0 0.0
        %545 = vmatprep.subr.mxu0 0.0
        %546 = vmatpush1.msra.mxu0 0.0
        %547 = vmatprep.subr.mxu0 0.0
        %548 = vmatpush1.msra.mxu0 0.0
        %549 = vmatprep.subr.mxu0 0.0
        %550 = vmatpush1.msra.mxu0 0.0
        %551 = vmatprep.subr.mxu0 0.0
        %552 = vmatpush1.msra.mxu0 0.0
        %553 = vmatprep.subr.mxu0 0.0
        %554 = vmatpush1.msra.mxu0 0.0
        %555 = vmatprep.subr.mxu0 0.0
        %556 = vmatpush1.msra.mxu0 0.0
        %557 = vmatprep.subr.mxu0 0.0
        %558 = vmatpush1.msra.mxu0 0.0
        %559 = vmatprep.subr.mxu0 0.0
        %560 = vmatpush1.msra.mxu0 0.0
        %561 = vmatprep.subr.mxu0 0.0
        %562 = vmatpush1.msra.mxu0 0.0
        %563 = vmatprep.subr.mxu0 0.0
        %564 = vmatpush1.msra.mxu0 0.0
        %565 = vmatprep.subr.mxu0 0.0
        %566 = vmatpush1.msra.mxu0 0.0
        %567 = vmatprep.subr.mxu0 0.0
        %568 = vmatpush1.msra.mxu0 0.0
        %569 = vmatprep.subr.mxu0 0.0
        %570 = vmatpush1.msra.mxu0 0.0
        %571 = vmatprep.subr.mxu0 0.0
        %572 = vmatpush1.msra.mxu0 0.0
        %573 = vmatprep.subr.mxu0 0.0
        %574 = vmatpush1.msra.mxu0 0.0
        %575 = vmatprep.subr.mxu0 0.0
        %576 = vmatpush1.msra.mxu0 0.0
        %577 = vmatprep.subr.mxu0 0.0
        %578 = vmatpush1.msra.mxu0 0.0
        %579 = vmatprep.subr.mxu0 0.0
        %580 = vmatpush1.msra.mxu0 0.0
        %581 = vmatprep.subr.mxu0 0.0
        %582 = vmatpush1.msra.mxu0 0.0
        %583 = vmatprep.subr.mxu0 0.0
        %584 = vmatpush1.msra.mxu0 0.0
        %585 = vmatprep.subr.mxu0 0.0
        %586 = vmatpush1.msra.mxu0 0.0
        %587 = vmatprep.subr.mxu0 0.0
        %588 = vmatpush1.msra.mxu0 0.0
        %589 = vmatprep.subr.mxu0 0.0
        %590 = vmatpush1.msra.mxu0 0.0
        %591 = vmatprep.subr.mxu0 0.0
        %592 = vmatpush1.msra.mxu0 0.0
        %593 = vmatprep.subr.mxu0 0.0
        %594 = vmatpush1.msra.mxu0 0.0
        %595 = vmatprep.subr.mxu0 0.0
        %596 = vmatpush1.msra.mxu0 0.0
        %597 = vmatprep.subr.mxu0 0.0
        %598 = vmatpush1.msra.mxu0 0.0
        %599 = vmatprep.mubr.f32.mxu0 0.0
        %600 = vmatmul.mubr.f32.gmra.mrb[0].mxu0 %v533
        %v601 = vpop.f32.mrb[0].mxu0
        %v602 = vadd.f32 %v230, %v601
        %v603 = vpop.f32.mrb[0].mxu0
        %604 = vdwg.mxu0
        %v606 = vrot.slane %v602, 6
        %v608 = vadd.f32 %v313, %v606
        %v609 = vxor.u32 %v608, 2147483648
        %v610 = vmul.f32 %v609, 1.442695
        %v611 = vpow.pop %v610
        %v612 = vadd.f32 %v611, 1.0
        %v613 = vrcp.pop %v612
        %v614 = vmul.f32 1.0, %v613
        %615 = vrot.lane.b32.xlu0 %v606, 64
        %v616 = vpop.permute.xlu0 %615
        %v618 = vmul.f32 %v614, %v616
        %620 = vrot.lane.b32.xlu0 %v618, 64
        %v621 = vpop.permute.xlu0 %620
        %v623 = vadd.f32 %v313, %v621
        %v624 = vtanh.pop %v623
        %v625 = vsub.f32 1.0, %v614
        %627 = vrot.lane.b32.xlu0 %v624, 96
        %v628 = vpop.permute.xlu0 %627
        %v630 = vmul.f32 %v625, %v628
        %v631 = vrot.slane %v523, 7
        %v633 = vmul.f32 %v614, %v631
        %v634 = vadd.f32 %v630, %v633
        %636 = vrot.lane.b32.xlu0 %v634, 96
        %v637 = vpop.permute.xlu0 %636
        %vm639 = vcmask 256002
        %640 = vst.msk [vmem:[#allocation2] sm:$0x4] %vm639, %v637
        %v641 = vrot.slane %v634, 2
        %642 = vrot.lane.b32.xlu0 %v641, 96
        %v643 = vpop.permute.xlu0 %642
        %v644 = vsel %vm316, %v643, 0
        %646 = vmatprep.subr.mxu0 0.0
        %647 = vmatpush1.msra.mxu0 %v211
        %648 = vmatprep.subr.mxu0 0.0
        %649 = vmatpush1.msra.mxu0 %v212
        %650 = vmatprep.subr.mxu0 0.0
        %651 = vmatpush1.msra.mxu0 %v213
        %652 = vmatprep.subr.mxu0 0.0
        %653 = vmatpush1.msra.mxu0 %v214
        %654 = vmatprep.subr.mxu0 0.0
        %655 = vmatpush1.msra.mxu0 0.0
        %656 = vmatprep.subr.mxu0 0.0
        %657 = vmatpush1.msra.mxu0 0.0
        %658 = vmatprep.subr.mxu0 0.0
        %659 = vmatpush1.msra.mxu0 0.0
        %660 = vmatprep.subr.mxu0 0.0
        %661 = vmatpush1.msra.mxu0 0.0
        %662 = vmatprep.subr.mxu0 0.0
        %663 = vmatpush1.msra.mxu0 0.0
        %664 = vmatprep.subr.mxu0 0.0
        %665 = vmatpush1.msra.mxu0 0.0
        %666 = vmatprep.subr.mxu0 0.0
        %667 = vmatpush1.msra.mxu0 0.0
        %668 = vmatprep.subr.mxu0 0.0
        %669 = vmatpush1.msra.mxu0 0.0
        %670 = vmatprep.subr.mxu0 0.0
        %671 = vmatpush1.msra.mxu0 0.0
        %672 = vmatprep.subr.mxu0 0.0
        %673 = vmatpush1.msra.mxu0 0.0
        %674 = vmatprep.subr.mxu0 0.0
        %675 = vmatpush1.msra.mxu0 0.0
        %676 = vmatprep.subr.mxu0 0.0
        %677 = vmatpush1.msra.mxu0 0.0
        %678 = vmatprep.subr.mxu0 0.0
        %679 = vmatpush1.msra.mxu0 0.0
        %680 = vmatprep.subr.mxu0 0.0
        %681 = vmatpush1.msra.mxu0 0.0
        %682 = vmatprep.subr.mxu0 0.0
        %683 = vmatpush1.msra.mxu0 0.0
        %684 = vmatprep.subr.mxu0 0.0
        %685 = vmatpush1.msra.mxu0 0.0
        %686 = vmatprep.subr.mxu0 0.0
        %687 = vmatpush1.msra.mxu0 0.0
        %688 = vmatprep.subr.mxu0 0.0
        %689 = vmatpush1.msra.mxu0 0.0
        %690 = vmatprep.subr.mxu0 0.0
        %691 = vmatpush1.msra.mxu0 0.0
        %692 = vmatprep.subr.mxu0 0.0
        %693 = vmatpush1.msra.mxu0 0.0
        %694 = vmatprep.subr.mxu0 0.0
        %695 = vmatpush1.msra.mxu0 0.0
        %696 = vmatprep.subr.mxu0 0.0
        %697 = vmatpush1.msra.mxu0 0.0
        %698 = vmatprep.subr.mxu0 0.0
        %699 = vmatpush1.msra.mxu0 0.0
        %700 = vmatprep.subr.mxu0 0.0
        %701 = vmatpush1.msra.mxu0 0.0
        %702 = vmatprep.subr.mxu0 0.0
        %703 = vmatpush1.msra.mxu0 0.0
        %704 = vmatprep.subr.mxu0 0.0
        %705 = vmatpush1.msra.mxu0 0.0
        %706 = vmatprep.subr.mxu0 0.0
        %707 = vmatpush1.msra.mxu0 0.0
        %708 = vmatprep.subr.mxu0 0.0
        %709 = vmatpush1.msra.mxu0 0.0
        %710 = vmatprep.mubr.f32.mxu0 0.0
        %711 = vmatmul.mubr.f32.gmra.mrb[0].mxu0 %v644
        %v712 = vpop.f32.mrb[0].mxu0
        %v713 = vadd.f32 %v230, %v712
        %v714 = vpop.f32.mrb[0].mxu0
        %715 = vdwg.mxu0
        %v717 = vrot.slane %v713, 5
        %v719 = vadd.f32 %v313, %v717
        %v720 = vxor.u32 %v719, 2147483648
        %v721 = vmul.f32 %v720, 1.442695
        %v722 = vpow.pop %v721
        %v723 = vadd.f32 %v722, 1.0
        %v724 = vrcp.pop %v723
        %v725 = vmul.f32 1.0, %v724
        %726 = vrot.lane.b32.xlu0 %v717, 64
        %v727 = vpop.permute.xlu0 %726
        %v729 = vmul.f32 %v725, %v727
        %731 = vrot.lane.b32.xlu0 %v729, 64
        %v732 = vpop.permute.xlu0 %731
        %v734 = vadd.f32 %v313, %v732
        %v735 = vtanh.pop %v734
        %v736 = vsub.f32 1.0, %v725
        %738 = vrot.lane.b32.xlu0 %v735, 96
        %v739 = vpop.permute.xlu0 %738
        %v741 = vmul.f32 %v736, %v739
        %v742 = vrot.slane %v634, 7
        %v744 = vmul.f32 %v725, %v742
        %v745 = vadd.f32 %v741, %v744
        %747 = vrot.lane.b32.xlu0 %v745, 96
        %v748 = vpop.permute.xlu0 %747
        %vm750 = vcmask 257027
        %751 = vst.msk [vmem:[#allocation2] sm:$0x8] %vm750, %v748
        %v752 = vrot.slane %v745, 3
        %753 = vrot.lane.b32.xlu0 %v752, 96
        %v754 = vpop.permute.xlu0 %753
        %v755 = vsel %vm316, %v754, 0
        %757 = vmatprep.subr.mxu0 0.0
        %758 = vmatpush1.msra.mxu0 %v211
        %759 = vmatprep.subr.mxu0 0.0
        %760 = vmatpush1.msra.mxu0 %v212
        %761 = vmatprep.subr.mxu0 0.0
        %762 = vmatpush1.msra.mxu0 %v213
        %763 = vmatprep.subr.mxu0 0.0
        %764 = vmatpush1.msra.mxu0 %v214
        %765 = vmatprep.subr.mxu0 0.0
        %766 = vmatpush1.msra.mxu0 0.0
        %767 = vmatprep.subr.mxu0 0.0
        %768 = vmatpush1.msra.mxu0 0.0
        %769 = vmatprep.subr.mxu0 0.0
        %770 = vmatpush1.msra.mxu0 0.0
        %771 = vmatprep.subr.mxu0 0.0
        %772 = vmatpush1.msra.mxu0 0.0
        %773 = vmatprep.subr.mxu0 0.0
        %774 = vmatpush1.msra.mxu0 0.0
        %775 = vmatprep.subr.mxu0 0.0
        %776 = vmatpush1.msra.mxu0 0.0
        %777 = vmatprep.subr.mxu0 0.0
        %778 = vmatpush1.msra.mxu0 0.0
        %779 = vmatprep.subr.mxu0 0.0
        %780 = vmatpush1.msra.mxu0 0.0
        %781 = vmatprep.subr.mxu0 0.0
        %782 = vmatpush1.msra.mxu0 0.0
        %783 = vmatprep.subr.mxu0 0.0
        %784 = vmatpush1.msra.mxu0 0.0
        %785 = vmatprep.subr.mxu0 0.0
        %786 = vmatpush1.msra.mxu0 0.0
        %787 = vmatprep.subr.mxu0 0.0
        %788 = vmatpush1.msra.mxu0 0.0
        %789 = vmatprep.subr.mxu0 0.0
        %790 = vmatpush1.msra.mxu0 0.0
        %791 = vmatprep.subr.mxu0 0.0
        %792 = vmatpush1.msra.mxu0 0.0
        %793 = vmatprep.subr.mxu0 0.0
        %794 = vmatpush1.msra.mxu0 0.0
        %795 = vmatprep.subr.mxu0 0.0
        %796 = vmatpush1.msra.mxu0 0.0
        %797 = vmatprep.subr.mxu0 0.0
        %798 = vmatpush1.msra.mxu0 0.0
        %799 = vmatprep.subr.mxu0 0.0
        %800 = vmatpush1.msra.mxu0 0.0
        %801 = vmatprep.subr.mxu0 0.0
        %802 = vmatpush1.msra.mxu0 0.0
        %803 = vmatprep.subr.mxu0 0.0
        %804 = vmatpush1.msra.mxu0 0.0
        %805 = vmatprep.subr.mxu0 0.0
        %806 = vmatpush1.msra.mxu0 0.0
        %807 = vmatprep.subr.mxu0 0.0
        %808 = vmatpush1.msra.mxu0 0.0
        %809 = vmatprep.subr.mxu0 0.0
        %810 = vmatpush1.msra.mxu0 0.0
        %811 = vmatprep.subr.mxu0 0.0
        %812 = vmatpush1.msra.mxu0 0.0
        %813 = vmatprep.subr.mxu0 0.0
        %814 = vmatpush1.msra.mxu0 0.0
        %815 = vmatprep.subr.mxu0 0.0
        %816 = vmatpush1.msra.mxu0 0.0
        %817 = vmatprep.subr.mxu0 0.0
        %818 = vmatpush1.msra.mxu0 0.0
        %819 = vmatprep.subr.mxu0 0.0
        %820 = vmatpush1.msra.mxu0 0.0
        %821 = vmatprep.mubr.f32.mxu0 0.0
        %822 = vmatmul.mubr.f32.gmra.mrb[0].mxu0 %v755
        %v823 = vpop.f32.mrb[0].mxu0
        %v824 = vadd.f32 %v230, %v823
        %v825 = vpop.f32.mrb[0].mxu0
        %826 = vdwg.mxu0
        %v828 = vrot.slane %v824, 4
        %v830 = vadd.f32 %v313, %v828
        %v831 = vxor.u32 %v830, 2147483648
        %v832 = vmul.f32 %v831, 1.442695
        %v833 = vpow.pop %v832
        %v834 = vadd.f32 %v833, 1.0
        %v835 = vrcp.pop %v834
        %v836 = vmul.f32 1.0, %v835
        %837 = vrot.lane.b32.xlu0 %v828, 64
        %v838 = vpop.permute.xlu0 %837
        %v840 = vmul.f32 %v836, %v838
        %842 = vrot.lane.b32.xlu0 %v840, 64
        %v843 = vpop.permute.xlu0 %842
        %v845 = vadd.f32 %v313, %v843
        %v846 = vtanh.pop %v845
        %v847 = vsub.f32 1.0, %v836
        %849 = vrot.lane.b32.xlu0 %v846, 96
        %v850 = vpop.permute.xlu0 %849
        %v852 = vmul.f32 %v847, %v850
        %v853 = vrot.slane %v745, 7
        %v855 = vmul.f32 %v836, %v853
        %v856 = vadd.f32 %v852, %v855
        %858 = vrot.lane.b32.xlu0 %v856, 96
        %v859 = vpop.permute.xlu0 %858
        %vm861 = vcmask 258052
        %862 = vst.msk [vmem:[#allocation2] sm:$0x10] %vm861, %v859
        %v863 = vrot.slane %v856, 4
        %864 = vrot.lane.b32.xlu0 %v863, 96
        %v865 = vpop.permute.xlu0 %864
        %v866 = vsel %vm316, %v865, 0
        %868 = vmatprep.subr.mxu0 0.0
        %869 = vmatpush1.msra.mxu0 %v211
        %870 = vmatprep.subr.mxu0 0.0
        %871 = vmatpush1.msra.mxu0 %v212
        %872 = vmatprep.subr.mxu0 0.0
        %873 = vmatpush1.msra.mxu0 %v213
        %874 = vmatprep.subr.mxu0 0.0
        %875 = vmatpush1.msra.mxu0 %v214
        %876 = vmatprep.subr.mxu0 0.0
        %877 = vmatpush1.msra.mxu0 0.0
        %878 = vmatprep.subr.mxu0 0.0
        %879 = vmatpush1.msra.mxu0 0.0
        %880 = vmatprep.subr.mxu0 0.0
        %881 = vmatpush1.msra.mxu0 0.0
        %882 = vmatprep.subr.mxu0 0.0
        %883 = vmatpush1.msra.mxu0 0.0
        %884 = vmatprep.subr.mxu0 0.0
        %885 = vmatpush1.msra.mxu0 0.0
        %886 = vmatprep.subr.mxu0 0.0
        %887 = vmatpush1.msra.mxu0 0.0
        %888 = vmatprep.subr.mxu0 0.0
        %889 = vmatpush1.msra.mxu0 0.0
        %890 = vmatprep.subr.mxu0 0.0
        %891 = vmatpush1.msra.mxu0 0.0
        %892 = vmatprep.subr.mxu0 0.0
        %893 = vmatpush1.msra.mxu0 0.0
        %894 = vmatprep.subr.mxu0 0.0
        %895 = vmatpush1.msra.mxu0 0.0
        %896 = vmatprep.subr.mxu0 0.0
        %897 = vmatpush1.msra.mxu0 0.0
        %898 = vmatprep.subr.mxu0 0.0
        %899 = vmatpush1.msra.mxu0 0.0
        %900 = vmatprep.subr.mxu0 0.0
        %901 = vmatpush1.msra.mxu0 0.0
        %902 = vmatprep.subr.mxu0 0.0
        %903 = vmatpush1.msra.mxu0 0.0
        %904 = vmatprep.subr.mxu0 0.0
        %905 = vmatpush1.msra.mxu0 0.0
        %906 = vmatprep.subr.mxu0 0.0
        %907 = vmatpush1.msra.mxu0 0.0
        %908 = vmatprep.subr.mxu0 0.0
        %909 = vmatpush1.msra.mxu0 0.0
        %910 = vmatprep.subr.mxu0 0.0
        %911 = vmatpush1.msra.mxu0 0.0
        %912 = vmatprep.subr.mxu0 0.0
        %913 = vmatpush1.msra.mxu0 0.0
        %914 = vmatprep.subr.mxu0 0.0
        %915 = vmatpush1.msra.mxu0 0.0
        %916 = vmatprep.subr.mxu0 0.0
        %917 = vmatpush1.msra.mxu0 0.0
        %918 = vmatprep.subr.mxu0 0.0
        %919 = vmatpush1.msra.mxu0 0.0
        %920 = vmatprep.subr.mxu0 0.0
        %921 = vmatpush1.msra.mxu0 0.0
        %922 = vmatprep.subr.mxu0 0.0
        %923 = vmatpush1.msra.mxu0 0.0
        %924 = vmatprep.subr.mxu0 0.0
        %925 = vmatpush1.msra.mxu0 0.0
        %926 = vmatprep.subr.mxu0 0.0
        %927 = vmatpush1.msra.mxu0 0.0
        %928 = vmatprep.subr.mxu0 0.0
        %929 = vmatpush1.msra.mxu0 0.0
        %930 = vmatprep.subr.mxu0 0.0
        %931 = vmatpush1.msra.mxu0 0.0
        %932 = vmatprep.mubr.f32.mxu0 0.0
        %933 = vmatmul.mubr.f32.gmra.mrb[0].mxu0 %v866
        %v934 = vpop.f32.mrb[0].mxu0
        %v935 = vadd.f32 %v230, %v934
        %v936 = vpop.f32.mrb[0].mxu0
        %937 = vdwg.mxu0
        %v939 = vrot.slane %v935, 3
        %v941 = vadd.f32 %v313, %v939
        %v942 = vxor.u32 %v941, 2147483648
        %v943 = vmul.f32 %v942, 1.442695
        %v944 = vpow.pop %v943
        %v945 = vadd.f32 %v944, 1.0
        %v946 = vrcp.pop %v945
        %v947 = vmul.f32 1.0, %v946
        %948 = vrot.lane.b32.xlu0 %v939, 64
        %v949 = vpop.permute.xlu0 %948
        %v951 = vmul.f32 %v947, %v949
        %953 = vrot.lane.b32.xlu0 %v951, 64
        %v954 = vpop.permute.xlu0 %953
        %v956 = vadd.f32 %v313, %v954
        %v957 = vtanh.pop %v956
        %v958 = vsub.f32 1.0, %v947
        %960 = vrot.lane.b32.xlu0 %v957, 96
        %v961 = vpop.permute.xlu0 %960
        %v963 = vmul.f32 %v958, %v961
        %v964 = vrot.slane %v856, 7
        %v966 = vmul.f32 %v947, %v964
        %v967 = vadd.f32 %v963, %v966
        %969 = vrot.lane.b32.xlu0 %v967, 96
        %v970 = vpop.permute.xlu0 %969
        %vm972 = vcmask 259077
        %973 = vst.msk [vmem:[#allocation2] sm:$0x20] %vm972, %v970
        %v974 = vrot.slane %v967, 5
        %975 = vrot.lane.b32.xlu0 %v974, 96
        %v976 = vpop.permute.xlu0 %975
        %v977 = vsel %vm316, %v976, 0
        %979 = vmatprep.subr.mxu0 0.0
        %980 = vmatpush1.msra.mxu0 %v211
        %981 = vmatprep.subr.mxu0 0.0
        %982 = vmatpush1.msra.mxu0 %v212
        %983 = vmatprep.subr.mxu0 0.0
        %984 = vmatpush1.msra.mxu0 %v213
        %985 = vmatprep.subr.mxu0 0.0
        %986 = vmatpush1.msra.mxu0 %v214
        %987 = vmatprep.subr.mxu0 0.0
        %988 = vmatpush1.msra.mxu0 0.0
        %989 = vmatprep.subr.mxu0 0.0
        %990 = vmatpush1.msra.mxu0 0.0
        %991 = vmatprep.subr.mxu0 0.0
        %992 = vmatpush1.msra.mxu0 0.0
        %993 = vmatprep.subr.mxu0 0.0
        %994 = vmatpush1.msra.mxu0 0.0
        %995 = vmatprep.subr.mxu0 0.0
        %996 = vmatpush1.msra.mxu0 0.0
        %997 = vmatprep.subr.mxu0 0.0
        %998 = vmatpush1.msra.mxu0 0.0
        %999 = vmatprep.subr.mxu0 0.0
        %1000 = vmatpush1.msra.mxu0 0.0
        %1001 = vmatprep.subr.mxu0 0.0
        %1002 = vmatpush1.msra.mxu0 0.0
        %1003 = vmatprep.subr.mxu0 0.0
        %1004 = vmatpush1.msra.mxu0 0.0
        %1005 = vmatprep.subr.mxu0 0.0
        %1006 = vmatpush1.msra.mxu0 0.0
        %1007 = vmatprep.subr.mxu0 0.0
        %1008 = vmatpush1.msra.mxu0 0.0
        %1009 = vmatprep.subr.mxu0 0.0
        %1010 = vmatpush1.msra.mxu0 0.0
        %1011 = vmatprep.subr.mxu0 0.0
        %1012 = vmatpush1.msra.mxu0 0.0
        %1013 = vmatprep.subr.mxu0 0.0
        %1014 = vmatpush1.msra.mxu0 0.0
        %1015 = vmatprep.subr.mxu0 0.0
        %1016 = vmatpush1.msra.mxu0 0.0
        %1017 = vmatprep.subr.mxu0 0.0
        %1018 = vmatpush1.msra.mxu0 0.0
        %1019 = vmatprep.subr.mxu0 0.0
        %1020 = vmatpush1.msra.mxu0 0.0
        %1021 = vmatprep.subr.mxu0 0.0
        %1022 = vmatpush1.msra.mxu0 0.0
        %1023 = vmatprep.subr.mxu0 0.0
        %1024 = vmatpush1.msra.mxu0 0.0
        %1025 = vmatprep.subr.mxu0 0.0
        %1026 = vmatpush1.msra.mxu0 0.0
        %1027 = vmatprep.subr.mxu0 0.0
        %1028 = vmatpush1.msra.mxu0 0.0
        %1029 = vmatprep.subr.mxu0 0.0
        %1030 = vmatpush1.msra.mxu0 0.0
        %1031 = vmatprep.subr.mxu0 0.0
        %1032 = vmatpush1.msra.mxu0 0.0
        %1033 = vmatprep.subr.mxu0 0.0
        %1034 = vmatpush1.msra.mxu0 0.0
        %1035 = vmatprep.subr.mxu0 0.0
        %1036 = vmatpush1.msra.mxu0 0.0
        %1037 = vmatprep.subr.mxu0 0.0
        %1038 = vmatpush1.msra.mxu0 0.0
        %1039 = vmatprep.subr.mxu0 0.0
        %1040 = vmatpush1.msra.mxu0 0.0
        %1041 = vmatprep.subr.mxu0 0.0
        %1042 = vmatpush1.msra.mxu0 0.0
        %1043 = vmatprep.mubr.f32.mxu0 0.0
        %1044 = vmatmul.mubr.f32.gmra.mrb[0].mxu0 %v977
        %v1045 = vpop.f32.mrb[0].mxu0
        %v1046 = vadd.f32 %v230, %v1045
        %v1047 = vpop.f32.mrb[0].mxu0
        %1048 = vdwg.mxu0
        %v1050 = vrot.slane %v1046, 2
        %v1052 = vadd.f32 %v313, %v1050
        %v1053 = vxor.u32 %v1052, 2147483648
        %v1054 = vmul.f32 %v1053, 1.442695
        %v1055 = vpow.pop %v1054
        %v1056 = vadd.f32 %v1055, 1.0
        %v1057 = vrcp.pop %v1056
        %v1058 = vmul.f32 1.0, %v1057
        %1059 = vrot.lane.b32.xlu0 %v1050, 64
        %v1060 = vpop.permute.xlu0 %1059
        %v1062 = vmul.f32 %v1058, %v1060
        %1064 = vrot.lane.b32.xlu0 %v1062, 64
        %v1065 = vpop.permute.xlu0 %1064
        %v1067 = vadd.f32 %v313, %v1065
        %v1068 = vtanh.pop %v1067
        %v1069 = vsub.f32 1.0, %v1058
        %1071 = vrot.lane.b32.xlu0 %v1068, 96
        %v1072 = vpop.permute.xlu0 %1071
        %v1074 = vmul.f32 %v1069, %v1072
        %v1075 = vrot.slane %v967, 7
        %v1077 = vmul.f32 %v1058, %v1075
        %v1078 = vadd.f32 %v1074, %v1077
        %1080 = vrot.lane.b32.xlu0 %v1078, 96
        %v1081 = vpop.permute.xlu0 %1080
        %vm1083 = vcmask 260102
        %1084 = vst.msk [vmem:[#allocation2] sm:$0x40] %vm1083, %v1081
        %v1085 = vrot.slane %v1078, 6
        %1086 = vrot.lane.b32.xlu0 %v1085, 96
        %v1087 = vpop.permute.xlu0 %1086
        %v1088 = vsel %vm316, %v1087, 0
        %1090 = vmatprep.subr.mxu0 0.0
        %1091 = vmatpush1.msra.mxu0 %v211
        %1092 = vmatprep.subr.mxu0 0.0
        %1093 = vmatpush1.msra.mxu0 %v212
        %1094 = vmatprep.subr.mxu0 0.0
        %1095 = vmatpush1.msra.mxu0 %v213
        %1096 = vmatprep.subr.mxu0 0.0
        %1097 = vmatpush1.msra.mxu0 %v214
        %1098 = vmatprep.subr.mxu0 0.0
        %1099 = vmatpush1.msra.mxu0 0.0
        %1100 = vmatprep.subr.mxu0 0.0
        %1101 = vmatpush1.msra.mxu0 0.0
        %1102 = vmatprep.subr.mxu0 0.0
        %1103 = vmatpush1.msra.mxu0 0.0
        %1104 = vmatprep.subr.mxu0 0.0
        %1105 = vmatpush1.msra.mxu0 0.0
        %1106 = vmatprep.subr.mxu0 0.0
        %1107 = vmatpush1.msra.mxu0 0.0
        %1108 = vmatprep.subr.mxu0 0.0
        %1109 = vmatpush1.msra.mxu0 0.0
        %1110 = vmatprep.subr.mxu0 0.0
        %1111 = vmatpush1.msra.mxu0 0.0
        %1112 = vmatprep.subr.mxu0 0.0
        %1113 = vmatpush1.msra.mxu0 0.0
        %1114 = vmatprep.subr.mxu0 0.0
        %1115 = vmatpush1.msra.mxu0 0.0
        %1116 = vmatprep.subr.mxu0 0.0
        %1117 = vmatpush1.msra.mxu0 0.0
        %1118 = vmatprep.subr.mxu0 0.0
        %1119 = vmatpush1.msra.mxu0 0.0
        %1120 = vmatprep.subr.mxu0 0.0
        %1121 = vmatpush1.msra.mxu0 0.0
        %1122 = vmatprep.subr.mxu0 0.0
        %1123 = vmatpush1.msra.mxu0 0.0
        %1124 = vmatprep.subr.mxu0 0.0
        %1125 = vmatpush1.msra.mxu0 0.0
        %1126 = vmatprep.subr.mxu0 0.0
        %1127 = vmatpush1.msra.mxu0 0.0
        %1128 = vmatprep.subr.mxu0 0.0
        %1129 = vmatpush1.msra.mxu0 0.0
        %1130 = vmatprep.subr.mxu0 0.0
        %1131 = vmatpush1.msra.mxu0 0.0
        %1132 = vmatprep.subr.mxu0 0.0
        %1133 = vmatpush1.msra.mxu0 0.0
        %1134 = vmatprep.subr.mxu0 0.0
        %1135 = vmatpush1.msra.mxu0 0.0
        %1136 = vmatprep.subr.mxu0 0.0
        %1137 = vmatpush1.msra.mxu0 0.0
        %1138 = vmatprep.subr.mxu0 0.0
        %1139 = vmatpush1.msra.mxu0 0.0
        %1140 = vmatprep.subr.mxu0 0.0
        %1141 = vmatpush1.msra.mxu0 0.0
        %1142 = vmatprep.subr.mxu0 0.0
        %1143 = vmatpush1.msra.mxu0 0.0
        %1144 = vmatprep.subr.mxu0 0.0
        %1145 = vmatpush1.msra.mxu0 0.0
        %1146 = vmatprep.subr.mxu0 0.0
        %1147 = vmatpush1.msra.mxu0 0.0
        %1148 = vmatprep.subr.mxu0 0.0
        %1149 = vmatpush1.msra.mxu0 0.0
        %1150 = vmatprep.subr.mxu0 0.0
        %1151 = vmatpush1.msra.mxu0 0.0
        %1152 = vmatprep.subr.mxu0 0.0
        %1153 = vmatpush1.msra.mxu0 0.0
        %1154 = vmatprep.mubr.f32.mxu0 0.0
        %1155 = vmatmul.mubr.f32.gmra.mrb[0].mxu0 %v1088
        %v1156 = vpop.f32.mrb[0].mxu0
        %v1157 = vadd.f32 %v230, %v1156
        %v1158 = vpop.f32.mrb[0].mxu0
        %1159 = vdwg.mxu0
        %v1161 = vrot.slane %v1157, 1
        %v1163 = vadd.f32 %v313, %v1161
        %v1164 = vxor.u32 %v1163, 2147483648
        %v1165 = vmul.f32 %v1164, 1.442695
        %v1166 = vpow.pop %v1165
        %v1167 = vadd.f32 %v1166, 1.0
        %v1168 = vrcp.pop %v1167
        %v1169 = vmul.f32 1.0, %v1168
        %1170 = vrot.lane.b32.xlu0 %v1161, 64
        %v1171 = vpop.permute.xlu0 %1170
        %v1173 = vmul.f32 %v1169, %v1171
        %1175 = vrot.lane.b32.xlu0 %v1173, 64
        %v1176 = vpop.permute.xlu0 %1175
        %v1178 = vadd.f32 %v313, %v1176
        %v1179 = vtanh.pop %v1178
        %v1180 = vsub.f32 1.0, %v1169
        %1182 = vrot.lane.b32.xlu0 %v1179, 96
        %v1183 = vpop.permute.xlu0 %1182
        %v1185 = vmul.f32 %v1180, %v1183
        %v1186 = vrot.slane %v1078, 7
        %v1188 = vmul.f32 %v1169, %v1186
        %v1189 = vadd.f32 %v1185, %v1188
        %1191 = vrot.lane.b32.xlu0 %v1189, 96
        %v1192 = vpop.permute.xlu0 %1191
        %vm1194 = vcmask 261127
        %1195 = vst.msk [vmem:[#allocation2] sm:$0x80] %vm1194, %v1192
        %v1196 = vld [vmem:[#allocation2] sm:$0xff]
        %v1198 = vsel %vm316, %v1196, 0
        %1200 = vmatprep.subr.mxu0 0.0
        %1201 = vmatpush1.msra.mxu0 %v221
        %1202 = vmatprep.subr.mxu0 0.0
        %1203 = vmatpush1.msra.mxu0 %v222
        %1204 = vmatprep.subr.mxu0 0.0
        %1205 = vmatpush1.msra.mxu0 %v223
        %1206 = vmatprep.subr.mxu0 0.0
        %1207 = vmatpush1.msra.mxu0 %v224
        %1208 = vmatprep.subr.mxu0 0.0
        %1209 = vmatpush1.msra.mxu0 0.0
        %1210 = vmatprep.subr.mxu0 0.0
        %1211 = vmatpush1.msra.mxu0 0.0
        %1212 = vmatprep.subr.mxu0 0.0
        %1213 = vmatpush1.msra.mxu0 0.0
        %1214 = vmatprep.subr.mxu0 0.0
        %1215 = vmatpush1.msra.mxu0 0.0
        %1216 = vmatprep.subr.mxu0 0.0
        %1217 = vmatpush1.msra.mxu0 0.0
        %1218 = vmatprep.subr.mxu0 0.0
        %1219 = vmatpush1.msra.mxu0 0.0
        %1220 = vmatprep.subr.mxu0 0.0
        %1221 = vmatpush1.msra.mxu0 0.0
        %1222 = vmatprep.subr.mxu0 0.0
        %1223 = vmatpush1.msra.mxu0 0.0
        %1224 = vmatprep.subr.mxu0 0.0
        %1225 = vmatpush1.msra.mxu0 0.0
        %1226 = vmatprep.subr.mxu0 0.0
        %1227 = vmatpush1.msra.mxu0 0.0
        %1228 = vmatprep.subr.mxu0 0.0
        %1229 = vmatpush1.msra.mxu0 0.0
        %1230 = vmatprep.subr.mxu0 0.0
        %1231 = vmatpush1.msra.mxu0 0.0
        %1232 = vmatprep.subr.mxu0 0.0
        %1233 = vmatpush1.msra.mxu0 0.0
        %1234 = vmatprep.subr.mxu0 0.0
        %1235 = vmatpush1.msra.mxu0 0.0
        %1236 = vmatprep.subr.mxu0 0.0
        %1237 = vmatpush1.msra.mxu0 0.0
        %1238 = vmatprep.subr.mxu0 0.0
        %1239 = vmatpush1.msra.mxu0 0.0
        %1240 = vmatprep.subr.mxu0 0.0
        %1241 = vmatpush1.msra.mxu0 0.0
        %1242 = vmatprep.subr.mxu0 0.0
        %1243 = vmatpush1.msra.mxu0 0.0
        %1244 = vmatprep.subr.mxu0 0.0
        %1245 = vmatpush1.msra.mxu0 0.0
        %1246 = vmatprep.subr.mxu0 0.0
        %1247 = vmatpush1.msra.mxu0 0.0
        %1248 = vmatprep.subr.mxu0 0.0
        %1249 = vmatpush1.msra.mxu0 0.0
        %1250 = vmatprep.subr.mxu0 0.0
        %1251 = vmatpush1.msra.mxu0 0.0
        %1252 = vmatprep.subr.mxu0 0.0
        %1253 = vmatpush1.msra.mxu0 0.0
        %1254 = vmatprep.subr.mxu0 0.0
        %1255 = vmatpush1.msra.mxu0 0.0
        %1256 = vmatprep.subr.mxu0 0.0
        %1257 = vmatpush1.msra.mxu0 0.0
        %1258 = vmatprep.subr.mxu0 0.0
        %1259 = vmatpush1.msra.mxu0 0.0
        %1260 = vmatprep.subr.mxu0 0.0
        %1261 = vmatpush1.msra.mxu0 0.0
        %1262 = vmatprep.subr.mxu0 0.0
        %1263 = vmatpush1.msra.mxu0 0.0
        %1264 = vmatprep.mubr.f32.mxu0 0.0
        %1265 = vmatmul.mubr.f32.gmra.mrb[0].mxu0 %v1198
        %v1266 = vpop.f32.mrb[0].mxu0
        %v1267 = vadd.f32 0.0, %v1266
        %v1268 = vpop.f32.mrb[0].mxu0
        %1269 = vdwg.mxu0
        %1270 = vxpose.xlu0.b32.start [1/16] %v1196, 128
        %1271 = vxpose.xlu0.b32.cont [2/16] 0.0, 128
        %1272 = vxpose.xlu0.b32.cont [3/16] 0.0, 128
        %1273 = vxpose.xlu0.b32.cont [4/16] 0.0, 128
        %1274 = vxpose.xlu0.b32.cont [5/16] 0.0, 128
        %1275 = vxpose.xlu0.b32.cont [6/16] 0.0, 128
        %1276 = vxpose.xlu0.b32.cont [7/16] 0.0, 128
        %1277 = vxpose.xlu0.b32.cont [8/16] 0.0, 128
        %1278 = vxpose.xlu0.b32.cont [9/16] 0.0, 128
        %1279 = vxpose.xlu0.b32.cont [10/16] 0.0, 128
        %1280 = vxpose.xlu0.b32.cont [11/16] 0.0, 128
        %1281 = vxpose.xlu0.b32.cont [12/16] 0.0, 128
        %1282 = vxpose.xlu0.b32.cont [13/16] 0.0, 128
        %1283 = vxpose.xlu0.b32.cont [14/16] 0.0, 128
        %1284 = vxpose.xlu0.b32.cont [15/16] 0.0, 128
        %1285 = vxpose.xlu0.b32.end [16/16] 0.0, 128
        %v1286 = vpop.trf.xlu0
        %v1287 = vpop.trf.xlu0
        %v1288 = vpop.trf.xlu0
        %v1289 = vpop.trf.xlu0
        %v1290 = vpop.trf.xlu0
        %v1291 = vpop.trf.xlu0
        %v1292 = vpop.trf.xlu0
        %v1293 = vpop.trf.xlu0
        %v1294 = vpop.trf.xlu0
        %v1295 = vpop.trf.xlu0
        %v1296 = vpop.trf.xlu0
        %v1297 = vpop.trf.xlu0
        %v1298 = vpop.trf.xlu0
        %v1299 = vpop.trf.xlu0
        %v1300 = vpop.trf.xlu0
        %v1301 = vpop.trf.xlu0
        %1306 = vrot.lane.b32.xlu0 %v232, 96
        %v1307 = vpop.permute.xlu0 %1306
        %1308 = vrot.lane.b32.xlu0 %v233, 96
        %v1309 = vpop.permute.xlu0 %1308
        %1310 = vrot.lane.b32.xlu0 %v234, 96
        %v1311 = vpop.permute.xlu0 %1310
        %1312 = vrot.lane.b32.xlu0 %v235, 96
        %v1313 = vpop.permute.xlu0 %1312
        %1322 = vrot.lane.b32.xlu0 %v1286, 16
        %v1323 = vpop.permute.xlu0 %1322
        %1324 = vrot.lane.b32.xlu0 %v1287, 16
        %v1325 = vpop.permute.xlu0 %1324
        %1326 = vrot.lane.b32.xlu0 %v1288, 16
        %v1327 = vpop.permute.xlu0 %1326
        %1328 = vrot.lane.b32.xlu0 %v1289, 16
        %v1329 = vpop.permute.xlu0 %1328
        %vm1334 = vcmask 785408
        %v1335 = vsel %vm1334, %v225, %v1307
        %v1336 = vsel %vm1334, %v226, %v1309
        %v1337 = vsel %vm1334, %v227, %v1311
        %v1338 = vsel %vm1334, %v228, %v1313
        %vm1339 = vcmask 130048
        %v1340 = vsel %vm1339, %v1307, %v1323
        %v1341 = vsel %vm1339, %v1309, %v1325
        %v1342 = vsel %vm1339, %v1311, %v1327
        %v1343 = vsel %vm1339, %v1313, %v1329
        %v1344 = vlaneseq
        %v1345 = vand.u32 %v1344, 127
        %v1346 = vlaneseq
        %v1347 = vshrl.u32 %v1346, 7
        %vm1348 = vcmp.eq.s32.totalorder %v1345, 1
        %v1349 = vsel %vm1348, 1, 0
        %v1350 = vcvt.s32.f32 %v1349
        %v1351 = vrot.slane %v1189, 7
        %1352 = vrot.lane.b32.xlu0 %v1351, 96
        %v1353 = vpop.permute.xlu0 %1352
        %v1354 = vsel %vm316, %v1353, 0
        %1356 = vmatprep.subr.mxu0 %v1340
        %1357 = vmatpush1.msra.mxu0 %v1335
        %1358 = vmatprep.subr.mxu0 %v1341
        %1359 = vmatpush1.msra.mxu0 %v1336
        %1360 = vmatprep.subr.mxu0 %v1342
        %1361 = vmatpush1.msra.mxu0 %v1337
        %1362 = vmatprep.subr.mxu0 %v1343
        %1363 = vmatpush1.msra.mxu0 %v1338
        %1364 = vmatprep.subr.mxu0 0.0
        %1365 = vmatpush1.msra.mxu0 0.0
        %1366 = vmatprep.subr.mxu0 0.0
        %1367 = vmatpush1.msra.mxu0 0.0
        %1368 = vmatprep.subr.mxu0 0.0
        %1369 = vmatpush1.msra.mxu0 0.0
        %1370 = vmatprep.subr.mxu0 0.0
        %1371 = vmatpush1.msra.mxu0 0.0
        %1372 = vmatprep.subr.mxu0 0.0
        %1373 = vmatpush1.msra.mxu0 0.0
        %1374 = vmatprep.subr.mxu0 0.0
        %1375 = vmatpush1.msra.mxu0 0.0
        %1376 = vmatprep.subr.mxu0 0.0
        %1377 = vmatpush1.msra.mxu0 0.0
        %1378 = vmatprep.subr.mxu0 0.0
        %1379 = vmatpush1.msra.mxu0 0.0
        %1380 = vmatprep.subr.mxu0 0.0
        %1381 = vmatpush1.msra.mxu0 0.0
        %1382 = vmatprep.subr.mxu0 0.0
        %1383 = vmatpush1.msra.mxu0 0.0
        %1384 = vmatprep.subr.mxu0 0.0
        %1385 = vmatpush1.msra.mxu0 0.0
        %1386 = vmatprep.subr.mxu0 0.0
        %1387 = vmatpush1.msra.mxu0 0.0
        %1388 = vmatprep.subr.mxu0 0.0
        %1389 = vmatpush1.msra.mxu0 0.0
        %1390 = vmatprep.subr.mxu0 0.0
        %1391 = vmatpush1.msra.mxu0 0.0
        %1392 = vmatprep.subr.mxu0 0.0
        %1393 = vmatpush1.msra.mxu0 0.0
        %1394 = vmatprep.subr.mxu0 0.0
        %1395 = vmatpush1.msra.mxu0 0.0
        %1396 = vmatprep.subr.mxu0 0.0
        %1397 = vmatpush1.msra.mxu0 0.0
        %1398 = vmatprep.subr.mxu0 0.0
        %1399 = vmatpush1.msra.mxu0 0.0
        %1400 = vmatprep.subr.mxu0 0.0
        %1401 = vmatpush1.msra.mxu0 0.0
        %1402 = vmatprep.subr.mxu0 0.0
        %1403 = vmatpush1.msra.mxu0 0.0
        %1404 = vmatprep.subr.mxu0 0.0
        %1405 = vmatpush1.msra.mxu0 0.0
        %1406 = vmatprep.subr.mxu0 0.0
        %1407 = vmatpush1.msra.mxu0 0.0
        %1408 = vmatprep.subr.mxu0 0.0
        %1409 = vmatpush1.msra.mxu0 0.0
        %1410 = vmatprep.subr.mxu0 0.0
        %1411 = vmatpush1.msra.mxu0 0.0
        %1412 = vmatprep.subr.mxu0 0.0
        %1413 = vmatpush1.msra.mxu0 0.0
        %1414 = vmatprep.subr.mxu0 0.0
        %1415 = vmatpush1.msra.mxu0 0.0
        %1416 = vmatprep.subr.mxu0 0.0
        %1417 = vmatpush1.msra.mxu0 0.0
        %1418 = vmatprep.subr.mxu0 0.0
        %1419 = vmatpush1.msra.mxu0 0.0
        %1420 = vmatprep.mubr.f32.mxu0 0.0
        %1421 = vmatmul.mubr.f32.gmra.mrb[0].mxu0 %v1354
        %v1422 = vpop.f32.mrb[0].mxu0
        %v1423 = vadd.f32 0.0, %v1422
        %v1424 = vpop.f32.mrb[0].mxu0
        %v1425 = vadd.f32 0.0, %v1424
        %1426 = vdwg.mxu0
        %v1427 = vadd.f32 %v1423, %v231
        %vm1428 = vcmask 188544
        %v1429 = vsel %vm1428, %v1425, -inf
        %1430 = vmax.xlane.f32.xlu0 %v1429
        %v1431 = vpop.xlane.xlu0 %1430
        %v1432 = vsub.f32 %v1425, %v1431
        %v1433 = vmul.f32 %v1432, 1.442695
        %v1434 = vpow.pop %v1433
        %1436 = vrot.lane.b32.xlu0 %v1434, 112
        %v1437 = vpop.permute.xlu0 %1436
        %vm1439 = vcmask 57344
        %v1440 = vsel %vm1439, %v1437, 0.0
        %1441 = vadd.xlane.f32.xlu0 %v1440
        %v1442 = vpop.xlane.xlu0 %1441
        %v1443 = vrcp.pop %v1442
        %vm1444 = vcmask 64512
        %v1445 = vsel %vm1444, %v1437, 0
        %1447 = vmatprep.subr.mxu0 0.0
        %1448 = vmatpush1.msra.mxu0 %v1267
        %1449 = vmatprep.subr.mxu0 0.0
        %1450 = vmatpush1.msra.mxu0 0.0
        %1451 = vmatprep.subr.mxu0 0.0
        %1452 = vmatpush1.msra.mxu0 0.0
        %1453 = vmatprep.subr.mxu0 0.0
        %1454 = vmatpush1.msra.mxu0 0.0
        %1455 = vmatprep.subr.mxu0 0.0
        %1456 = vmatpush1.msra.mxu0 0.0
        %1457 = vmatprep.subr.mxu0 0.0
        %1458 = vmatpush1.msra.mxu0 0.0
        %1459 = vmatprep.subr.mxu0 0.0
        %1460 = vmatpush1.msra.mxu0 0.0
        %1461 = vmatprep.subr.mxu0 0.0
        %1462 = vmatpush1.msra.mxu0 0.0
        %1463 = vmatprep.subr.mxu0 0.0
        %1464 = vmatpush1.msra.mxu0 0.0
        %1465 = vmatprep.subr.mxu0 0.0
        %1466 = vmatpush1.msra.mxu0 0.0
        %1467 = vmatprep.subr.mxu0 0.0
        %1468 = vmatpush1.msra.mxu0 0.0
        %1469 = vmatprep.subr.mxu0 0.0
        %1470 = vmatpush1.msra.mxu0 0.0
        %1471 = vmatprep.subr.mxu0 0.0
        %1472 = vmatpush1.msra.mxu0 0.0
        %1473 = vmatprep.subr.mxu0 0.0
        %1474 = vmatpush1.msra.mxu0 0.0
        %1475 = vmatprep.subr.mxu0 0.0
        %1476 = vmatpush1.msra.mxu0 0.0
        %1477 = vmatprep.subr.mxu0 0.0
        %1478 = vmatpush1.msra.mxu0 0.0
        %1479 = vmatprep.subr.mxu0 0.0
        %1480 = vmatpush1.msra.mxu0 0.0
        %1481 = vmatprep.subr.mxu0 0.0
        %1482 = vmatpush1.msra.mxu0 0.0
        %1483 = vmatprep.subr.mxu0 0.0
        %1484 = vmatpush1.msra.mxu0 0.0
        %1485 = vmatprep.subr.mxu0 0.0
        %1486 = vmatpush1.msra.mxu0 0.0
        %1487 = vmatprep.subr.mxu0 0.0
        %1488 = vmatpush1.msra.mxu0 0.0
        %1489 = vmatprep.subr.mxu0 0.0
        %1490 = vmatpush1.msra.mxu0 0.0
        %1491 = vmatprep.subr.mxu0 0.0
        %1492 = vmatpush1.msra.mxu0 0.0
        %1493 = vmatprep.subr.mxu0 0.0
        %1494 = vmatpush1.msra.mxu0 0.0
        %1495 = vmatprep.subr.mxu0 0.0
        %1496 = vmatpush1.msra.mxu0 0.0
        %1497 = vmatprep.subr.mxu0 0.0
        %1498 = vmatpush1.msra.mxu0 0.0
        %1499 = vmatprep.subr.mxu0 0.0
        %1500 = vmatpush1.msra.mxu0 0.0
        %1501 = vmatprep.subr.mxu0 0.0
        %1502 = vmatpush1.msra.mxu0 0.0
        %1503 = vmatprep.subr.mxu0 0.0
        %1504 = vmatpush1.msra.mxu0 0.0
        %1505 = vmatprep.subr.mxu0 0.0
        %1506 = vmatpush1.msra.mxu0 0.0
        %1507 = vmatprep.subr.mxu0 0.0
        %1508 = vmatpush1.msra.mxu0 0.0
        %1509 = vmatprep.subr.mxu0 0.0
        %1510 = vmatpush1.msra.mxu0 0.0
        %1511 = vmatprep.mubr.f32.mxu0 0.0
        %1512 = vmatmul.mubr.f32.gmra.mrb[0].mxu0 %v1445
        %v1513 = vpop.f32.mrb[0].mxu0
        %v1514 = vadd.f32 0.0, %v1513
        %v1515 = vpop.f32.mrb[0].mxu0
        %1516 = vdwg.mxu0
        %v1517 = vmul.f32 %v1514, %v1443
        %vm1518 = vcmask 392192
        %v1520 = vsel %vm1518, %v1350, 0
        %1522 = vmatprep.subr.mxu0 0.0
        %1523 = vmatpush1.msra.mxu0 %v215
        %1524 = vmatprep.subr.mxu0 0.0
        %1525 = vmatpush1.msra.mxu0 %v216
        %1526 = vmatprep.subr.mxu0 0.0
        %1527 = vmatpush1.msra.mxu0 %v217
        %1528 = vmatprep.subr.mxu0 0.0
        %1529 = vmatpush1.msra.mxu0 %v218
        %1530 = vmatprep.subr.mxu0 0.0
        %1531 = vmatpush1.msra.mxu0 %v219
        %1532 = vmatprep.subr.mxu0 0.0
        %1533 = vmatpush1.msra.mxu0 %v220
        %1534 = vmatprep.subr.mxu0 0.0
        %1535 = vmatpush1.msra.mxu0 0.0
        %1536 = vmatprep.subr.mxu0 0.0
        %1537 = vmatpush1.msra.mxu0 0.0
        %1538 = vmatprep.subr.mxu0 0.0
        %1539 = vmatpush1.msra.mxu0 0.0
        %1540 = vmatprep.subr.mxu0 0.0
        %1541 = vmatpush1.msra.mxu0 0.0
        %1542 = vmatprep.subr.mxu0 0.0
        %1543 = vmatpush1.msra.mxu0 0.0
        %1544 = vmatprep.subr.mxu0 0.0
        %1545 = vmatpush1.msra.mxu0 0.0
        %1546 = vmatprep.subr.mxu0 0.0
        %1547 = vmatpush1.msra.mxu0 0.0
        %1548 = vmatprep.subr.mxu0 0.0
        %1549 = vmatpush1.msra.mxu0 0.0
        %1550 = vmatprep.subr.mxu0 0.0
        %1551 = vmatpush1.msra.mxu0 0.0
        %1552 = vmatprep.subr.mxu0 0.0
        %1553 = vmatpush1.msra.mxu0 0.0
        %1554 = vmatprep.subr.mxu0 0.0
        %1555 = vmatpush1.msra.mxu0 0.0
        %1556 = vmatprep.subr.mxu0 0.0
        %1557 = vmatpush1.msra.mxu0 0.0
        %1558 = vmatprep.subr.mxu0 0.0
        %1559 = vmatpush1.msra.mxu0 0.0
        %1560 = vmatprep.subr.mxu0 0.0
        %1561 = vmatpush1.msra.mxu0 0.0
        %1562 = vmatprep.subr.mxu0 0.0
        %1563 = vmatpush1.msra.mxu0 0.0
        %1564 = vmatprep.subr.mxu0 0.0
        %1565 = vmatpush1.msra.mxu0 0.0
        %1566 = vmatprep.subr.mxu0 0.0
        %1567 = vmatpush1.msra.mxu0 0.0
        %1568 = vmatprep.subr.mxu0 0.0
        %1569 = vmatpush1.msra.mxu0 0.0
        %1570 = vmatprep.subr.mxu0 0.0
        %1571 = vmatpush1.msra.mxu0 0.0
        %1572 = vmatprep.subr.mxu0 0.0
        %1573 = vmatpush1.msra.mxu0 0.0
        %1574 = vmatprep.subr.mxu0 0.0
        %1575 = vmatpush1.msra.mxu0 0.0
        %1576 = vmatprep.subr.mxu0 0.0
        %1577 = vmatpush1.msra.mxu0 0.0
        %1578 = vmatprep.subr.mxu0 0.0
        %1579 = vmatpush1.msra.mxu0 0.0
        %1580 = vmatprep.subr.mxu0 0.0
        %1581 = vmatpush1.msra.mxu0 0.0
        %1582 = vmatprep.subr.mxu0 0.0
        %1583 = vmatpush1.msra.mxu0 0.0
        %1584 = vmatprep.subr.mxu0 0.0
        %1585 = vmatpush1.msra.mxu0 0.0
        %1586 = vmatprep.mubr.f32.mxu0 0.0
        %1587 = vmatmul.mubr.f32.gmra.mrb[0].mxu0 %v1520
        %v1588 = vpop.f32.mrb[0].mxu0
        %v1589 = vadd.f32 %v1517, %v1588
        %v1590 = vpop.f32.mrb[0].mxu0
        %1591 = vdwg.mxu0
        %v1592 = vadd.f32 %v1589, %v1427
        %v1593 = vxor.u32 %v1592, 2147483648
        %v1594 = vmul.f32 %v1593, 1.442695
        %v1595 = vpow.pop %v1594
        %v1596 = vadd.f32 %v1595, 1.0
        %v1597 = vrcp.pop %v1596
        %v1598 = vmul.f32 1.0, %v1597
        %1600 = vrot.lane.b32.xlu0 %v1427, 64
        %v1601 = vpop.permute.xlu0 %1600
        %v1603 = vmul.f32 %v1598, %v1601
        %1605 = vrot.lane.b32.xlu0 %v1603, 64
        %v1606 = vpop.permute.xlu0 %1605
        %v1608 = vadd.f32 %v1589, %v1606
        %v1609 = vtanh.pop %v1608
        %v1610 = vsub.f32 1.0, %v1598
        %1612 = vrot.lane.b32.xlu0 %v1609, 96
        %v1613 = vpop.permute.xlu0 %1612
        %v1615 = vmul.f32 %v1610, %v1613
        %v1617 = vmul.f32 %v1598, %v1351
        %v1618 = vadd.f32 %v1615, %v1617
        %1620 = vrot.lane.b32.xlu0 %v1618, 96
        %v1621 = vpop.permute.xlu0 %1620
        %v1622 = vsel %vm316, %v1621, 0
        %1624 = vmatprep.subr.mxu0 %v1340
        %1625 = vmatpush1.msra.mxu0 %v1335
        %1626 = vmatprep.subr.mxu0 %v1341
        %1627 = vmatpush1.msra.mxu0 %v1336
        %1628 = vmatprep.subr.mxu0 %v1342
        %1629 = vmatpush1.msra.mxu0 %v1337
        %1630 = vmatprep.subr.mxu0 %v1343
        %1631 = vmatpush1.msra.mxu0 %v1338
        %1632 = vmatprep.subr.mxu0 0.0
        %1633 = vmatpush1.msra.mxu0 0.0
        %1634 = vmatprep.subr.mxu0 0.0
        %1635 = vmatpush1.msra.mxu0 0.0
        %1636 = vmatprep.subr.mxu0 0.0
        %1637 = vmatpush1.msra.mxu0 0.0
        %1638 = vmatprep.subr.mxu0 0.0
        %1639 = vmatpush1.msra.mxu0 0.0
        %1640 = vmatprep.subr.mxu0 0.0
        %1641 = vmatpush1.msra.mxu0 0.0
        %1642 = vmatprep.subr.mxu0 0.0
        %1643 = vmatpush1.msra.mxu0 0.0
        %1644 = vmatprep.subr.mxu0 0.0
        %1645 = vmatpush1.msra.mxu0 0.0
        %1646 = vmatprep.subr.mxu0 0.0
        %1647 = vmatpush1.msra.mxu0 0.0
        %1648 = vmatprep.subr.mxu0 0.0
        %1649 = vmatpush1.msra.mxu0 0.0
        %1650 = vmatprep.subr.mxu0 0.0
        %1651 = vmatpush1.msra.mxu0 0.0
        %1652 = vmatprep.subr.mxu0 0.0
        %1653 = vmatpush1.msra.mxu0 0.0
        %1654 = vmatprep.subr.mxu0 0.0
        %1655 = vmatpush1.msra.mxu0 0.0
        %1656 = vmatprep.subr.mxu0 0.0
        %1657 = vmatpush1.msra.mxu0 0.0
        %1658 = vmatprep.subr.mxu0 0.0
        %1659 = vmatpush1.msra.mxu0 0.0
        %1660 = vmatprep.subr.mxu0 0.0
        %1661 = vmatpush1.msra.mxu0 0.0
        %1662 = vmatprep.subr.mxu0 0.0
        %1663 = vmatpush1.msra.mxu0 0.0
        %1664 = vmatprep.subr.mxu0 0.0
        %1665 = vmatpush1.msra.mxu0 0.0
        %1666 = vmatprep.subr.mxu0 0.0
        %1667 = vmatpush1.msra.mxu0 0.0
        %1668 = vmatprep.subr.mxu0 0.0
        %1669 = vmatpush1.msra.mxu0 0.0
        %1670 = vmatprep.subr.mxu0 0.0
        %1671 = vmatpush1.msra.mxu0 0.0
        %1672 = vmatprep.subr.mxu0 0.0
        %1673 = vmatpush1.msra.mxu0 0.0
        %1674 = vmatprep.subr.mxu0 0.0
        %1675 = vmatpush1.msra.mxu0 0.0
        %1676 = vmatprep.subr.mxu0 0.0
        %1677 = vmatpush1.msra.mxu0 0.0
        %1678 = vmatprep.subr.mxu0 0.0
        %1679 = vmatpush1.msra.mxu0 0.0
        %1680 = vmatprep.subr.mxu0 0.0
        %1681 = vmatpush1.msra.mxu0 0.0
        %1682 = vmatprep.subr.mxu0 0.0
        %1683 = vmatpush1.msra.mxu0 0.0
        %1684 = vmatprep.subr.mxu0 0.0
        %1685 = vmatpush1.msra.mxu0 0.0
        %1686 = vmatprep.subr.mxu0 0.0
        %1687 = vmatpush1.msra.mxu0 0.0
        %1688 = vmatprep.mubr.f32.mxu0 0.0
        %1689 = vmatmul.mubr.f32.gmra.mrb[0].mxu0 %v1622
        %v1690 = vpop.f32.mrb[0].mxu0
        %v1691 = vadd.f32 0.0, %v1690
        %v1692 = vpop.f32.mrb[0].mxu0
        %v1693 = vadd.f32 0.0, %v1692
        %1694 = vdwg.mxu0
        %v1695 = vadd.f32 %v1691, %v231
        %1697 = vrot.lane.b32.xlu0 %v236, 96
        %v1698 = vpop.permute.xlu0 %1697
        %v1700 = vadd.f32 %v1691, %v1698
        %v1701 = vadd.f32 %v1693, %v1698
        %vm1702 = vcmask 1041152
        %v1703 = vsel %vm1702, %v1700, -inf
        %vm1704 = vcmask 122880
        %v1705 = vsel %vm1704, %v1701, -inf
        %v1706 = vmax.f32 %v1703, %v1705
        %1707 = vmax.xlane.f32.xlu0 %v1706
        %v1708 = vpop.xlane.xlu0 %1707
        %v1709 = vsub.f32 %v1700, %v1708
        %v1710 = vsub.f32 %v1701, %v1708
        %v1711 = vmul.f32 %v1709, 1.442695
        %v1712 = vpow.pop %v1711
        %v1713 = vmul.f32 %v1710, 1.442695
        %v1714 = vpow.pop %v1713
        %1717 = vrot.lane.b32.xlu0 %v1712, 32
        %v1718 = vpop.permute.xlu0 %1717
        %1719 = vrot.lane.b32.xlu0 %v1714, 32
        %v1720 = vpop.permute.xlu0 %1719
        %v1721 = vsel %vm316, %v1718, %v1720
        %vm1723 = vcmask 385024
        %v1724 = vsel %vm1723, %v1721, 0.0
        %1725 = vadd.xlane.f32.xlu0 %v1724
        %v1726 = vpop.xlane.xlu0 %1725
        %v1727 = vlog2.pop %v1726
        %v1728 = vmul.f32 %v1727, 0.6931472
        %v1729 = vadd.f32 %v1708, %v1728
        %vm1730 = vcmp.eq.s32.totalorder %v1347, 0
        %v1731 = vsub.f32 %v1700, %v1729
        %v1732 = vsub.f32 %v1701, %v1729
        %v1733 = vlaneseq
        %v1734 = vshrl.u32 %v1733, 7
        %v1735 = vsub.s32 0, %v1734
        %v1736 = vrot.slane %v1731, %v1735
        %v1737 = vlaneseq
        %v1738 = vshrl.u32 %v1737, 7
        %v1739 = vsub.s32 0, %v1738
        %v1740 = vrot.slane %v1732, %v1739
        %v1741 = vsel %vm1730, %v1736, 0.0
        %v1742 = vsel %vm1730, %v1740, 0.0
        %vm1743 = vcmp.eq.f32.partialorder %v1700, %v1708
        %vm1744 = vcmp.eq.f32.partialorder %v1701, %v1708
        %1745 = vrot.lane.b32.xlu0 %v1345, 96
        %v1746 = vpop.permute.xlu0 %1745
        %v1747 = vsel %vm1743, %v1746, 48
        %v1748 = vsel %vm1744, %v1746, 48
        %v1749 = vsel %vm1702, %v1747, 2147483647
        %v1750 = vsel %vm1704, %v1748, 2147483647
        %vm1751 = vcmp.lt.s32.totalorder %v1749, %v1750
        %v1752 = vsel %vm1751, %v1749, %v1750
        %v1753 = vand.u32 %v1752, 65535
        %v1754 = vshra.s32 %v1752, 16
        %v1755 = vcvt.s32.f32 %v1753
        %v1756 = vcvt.s32.f32 %v1754
        %1757 = vmin.xlane.f32.xlu0 %v1756
        %v1758 = vpop.xlane.xlu0 %1757
        %vm1759 = vcmp.eq.f32.partialorder %v1756, %v1758
        %v1760 = vsel %vm1759, %v1755, inf
        %1761 = vmin.xlane.f32.xlu0 %v1760
        %v1762 = vpop.xlane.xlu0 %1761
        %v1763 = vcvt.f32.s32 %v1762
        %v1764 = vcvt.f32.s32 %v1758
        %v1765 = vshll.u32 %v1764, 16
        %v1766 = vadd.s32 %v1765, %v1763
        %vm1767 = vcmp.eq.s32.totalorder %v1345, 0
        %v1768 = vsel %vm1767, %v1766, 0
        %vm1769 = vcmp.eq.s32.totalorder %v1345, %v1766
        %v1770 = vsel %vm1769, 1, 0
        %v1771 = vcvt.s32.f32 %v1770
        %v1772 = vsel %vm1428, %v1693, -inf
        %1773 = vmax.xlane.f32.xlu0 %v1772
        %v1774 = vpop.xlane.xlu0 %1773
        %v1775 = vsub.f32 %v1693, %v1774
        %v1776 = vmul.f32 %v1775, 1.442695
        %v1777 = vpow.pop %v1776
        %1779 = vrot.lane.b32.xlu0 %v1777, 112
        %v1780 = vpop.permute.xlu0 %1779
        %v1782 = vsel %vm1439, %v1780, 0.0
        %1783 = vadd.xlane.f32.xlu0 %v1782
        %v1784 = vpop.xlane.xlu0 %1783
        %v1785 = vrcp.pop %v1784
        %v1786 = vsel %vm1444, %v1780, 0
        %1788 = vmatprep.subr.mxu0 0.0
        %1789 = vmatpush1.msra.mxu0 %v1267
        %1790 = vmatprep.subr.mxu0 0.0
        %1791 = vmatpush1.msra.mxu0 0.0
        %1792 = vmatprep.subr.mxu0 0.0
        %1793 = vmatpush1.msra.mxu0 0.0
        %1794 = vmatprep.subr.mxu0 0.0
        %1795 = vmatpush1.msra.mxu0 0.0
        %1796 = vmatprep.subr.mxu0 0.0
        %1797 = vmatpush1.msra.mxu0 0.0
        %1798 = vmatprep.subr.mxu0 0.0
        %1799 = vmatpush1.msra.mxu0 0.0
        %1800 = vmatprep.subr.mxu0 0.0
        %1801 = vmatpush1.msra.mxu0 0.0
        %1802 = vmatprep.subr.mxu0 0.0
        %1803 = vmatpush1.msra.mxu0 0.0
        %1804 = vmatprep.subr.mxu0 0.0
        %1805 = vmatpush1.msra.mxu0 0.0
        %1806 = vmatprep.subr.mxu0 0.0
        %1807 = vmatpush1.msra.mxu0 0.0
        %1808 = vmatprep.subr.mxu0 0.0
        %1809 = vmatpush1.msra.mxu0 0.0
        %1810 = vmatprep.subr.mxu0 0.0
        %1811 = vmatpush1.msra.mxu0 0.0
        %1812 = vmatprep.subr.mxu0 0.0
        %1813 = vmatpush1.msra.mxu0 0.0
        %1814 = vmatprep.subr.mxu0 0.0
        %1815 = vmatpush1.msra.mxu0 0.0
        %1816 = vmatprep.subr.mxu0 0.0
        %1817 = vmatpush1.msra.mxu0 0.0
        %1818 = vmatprep.subr.mxu0 0.0
        %1819 = vmatpush1.msra.mxu0 0.0
        %1820 = vmatprep.subr.mxu0 0.0
        %1821 = vmatpush1.msra.mxu0 0.0
        %1822 = vmatprep.subr.mxu0 0.0
        %1823 = vmatpush1.msra.mxu0 0.0
        %1824 = vmatprep.subr.mxu0 0.0
        %1825 = vmatpush1.msra.mxu0 0.0
        %1826 = vmatprep.subr.mxu0 0.0
        %1827 = vmatpush1.msra.mxu0 0.0
        %1828 = vmatprep.subr.mxu0 0.0
        %1829 = vmatpush1.msra.mxu0 0.0
        %1830 = vmatprep.subr.mxu0 0.0
        %1831 = vmatpush1.msra.mxu0 0.0
        %1832 = vmatprep.subr.mxu0 0.0
        %1833 = vmatpush1.msra.mxu0 0.0
        %1834 = vmatprep.subr.mxu0 0.0
        %1835 = vmatpush1.msra.mxu0 0.0
        %1836 = vmatprep.subr.mxu0 0.0
        %1837 = vmatpush1.msra.mxu0 0.0
        %1838 = vmatprep.subr.mxu0 0.0
        %1839 = vmatpush1.msra.mxu0 0.0
        %1840 = vmatprep.subr.mxu0 0.0
        %1841 = vmatpush1.msra.mxu0 0.0
        %1842 = vmatprep.subr.mxu0 0.0
        %1843 = vmatpush1.msra.mxu0 0.0
        %1844 = vmatprep.subr.mxu0 0.0
        %1845 = vmatpush1.msra.mxu0 0.0
        %1846 = vmatprep.subr.mxu0 0.0
        %1847 = vmatpush1.msra.mxu0 0.0
        %1848 = vmatprep.subr.mxu0 0.0
        %1849 = vmatpush1.msra.mxu0 0.0
        %1850 = vmatprep.subr.mxu0 0.0
        %1851 = vmatpush1.msra.mxu0 0.0
        %1852 = vmatprep.mubr.f32.mxu0 0.0
        %1853 = vmatmul.mubr.f32.gmra.mrb[0].mxu0 %v1786
        %v1854 = vpop.f32.mrb[0].mxu0
        %v1855 = vadd.f32 0.0, %v1854
        %v1856 = vpop.f32.mrb[0].mxu0
        %1857 = vdwg.mxu0
        %v1858 = vmul.f32 %v1855, %v1785
        %v1860 = vsel %vm1518, %v1771, 0
        %1862 = vmatprep.subr.mxu0 0.0
        %1863 = vmatpush1.msra.mxu0 %v215
        %1864 = vmatprep.subr.mxu0 0.0
        %1865 = vmatpush1.msra.mxu0 %v216
        %1866 = vmatprep.subr.mxu0 0.0
        %1867 = vmatpush1.msra.mxu0 %v217
        %1868 = vmatprep.subr.mxu0 0.0
        %1869 = vmatpush1.msra.mxu0 %v218
        %1870 = vmatprep.subr.mxu0 0.0
        %1871 = vmatpush1.msra.mxu0 %v219
        %1872 = vmatprep.subr.mxu0 0.0
        %1873 = vmatpush1.msra.mxu0 %v220
        %1874 = vmatprep.subr.mxu0 0.0
        %1875 = vmatpush1.msra.mxu0 0.0
        %1876 = vmatprep.subr.mxu0 0.0
        %1877 = vmatpush1.msra.mxu0 0.0
        %1878 = vmatprep.subr.mxu0 0.0
        %1879 = vmatpush1.msra.mxu0 0.0
        %1880 = vmatprep.subr.mxu0 0.0
        %1881 = vmatpush1.msra.mxu0 0.0
        %1882 = vmatprep.subr.mxu0 0.0
        %1883 = vmatpush1.msra.mxu0 0.0
        %1884 = vmatprep.subr.mxu0 0.0
        %1885 = vmatpush1.msra.mxu0 0.0
        %1886 = vmatprep.subr.mxu0 0.0
        %1887 = vmatpush1.msra.mxu0 0.0
        %1888 = vmatprep.subr.mxu0 0.0
        %1889 = vmatpush1.msra.mxu0 0.0
        %1890 = vmatprep.subr.mxu0 0.0
        %1891 = vmatpush1.msra.mxu0 0.0
        %1892 = vmatprep.subr.mxu0 0.0
        %1893 = vmatpush1.msra.mxu0 0.0
        %1894 = vmatprep.subr.mxu0 0.0
        %1895 = vmatpush1.msra.mxu0 0.0
        %1896 = vmatprep.subr.mxu0 0.0
        %1897 = vmatpush1.msra.mxu0 0.0
        %1898 = vmatprep.subr.mxu0 0.0
        %1899 = vmatpush1.msra.mxu0 0.0
        %1900 = vmatprep.subr.mxu0 0.0
        %1901 = vmatpush1.msra.mxu0 0.0
        %1902 = vmatprep.subr.mxu0 0.0
        %1903 = vmatpush1.msra.mxu0 0.0
        %1904 = vmatprep.subr.mxu0 0.0
        %1905 = vmatpush1.msra.mxu0 0.0
        %1906 = vmatprep.subr.mxu0 0.0
        %1907 = vmatpush1.msra.mxu0 0.0
        %1908 = vmatprep.subr.mxu0 0.0
        %1909 = vmatpush1.msra.mxu0 0.0
        %1910 = vmatprep.subr.mxu0 0.0
        %1911 = vmatpush1.msra.mxu0 0.0
        %1912 = vmatprep.subr.mxu0 0.0
        %1913 = vmatpush1.msra.mxu0 0.0
        %1914 = vmatprep.subr.mxu0 0.0
        %1915 = vmatpush1.msra.mxu0 0.0
        %1916 = vmatprep.subr.mxu0 0.0
        %1917 = vmatpush1.msra.mxu0 0.0
        %1918 = vmatprep.subr.mxu0 0.0
        %1919 = vmatpush1.msra.mxu0 0.0
        %1920 = vmatprep.subr.mxu0 0.0
        %1921 = vmatpush1.msra.mxu0 0.0
        %1922 = vmatprep.subr.mxu0 0.0
        %1923 = vmatpush1.msra.mxu0 0.0
        %1924 = vmatprep.subr.mxu0 0.0
        %1925 = vmatpush1.msra.mxu0 0.0
        %1926 = vmatprep.mubr.f32.mxu0 0.0
        %1927 = vmatmul.mubr.f32.gmra.mrb[0].mxu0 %v1860
        %v1928 = vpop.f32.mrb[0].mxu0
        %v1929 = vadd.f32 %v1858, %v1928
        %v1930 = vpop.f32.mrb[0].mxu0
        %1931 = vdwg.mxu0
        %v1932 = vadd.f32 %v1929, %v1695
        %v1933 = vxor.u32 %v1932, 2147483648
        %v1934 = vmul.f32 %v1933, 1.442695
        %v1935 = vpow.pop %v1934
        %v1936 = vadd.f32 %v1935, 1.0
        %v1937 = vrcp.pop %v1936
        %v1938 = vmul.f32 1.0, %v1937
        %1940 = vrot.lane.b32.xlu0 %v1695, 64
        %v1941 = vpop.permute.xlu0 %1940
        %v1943 = vmul.f32 %v1938, %v1941
        %1945 = vrot.lane.b32.xlu0 %v1943, 64
        %v1946 = vpop.permute.xlu0 %1945
        %v1948 = vadd.f32 %v1929, %v1946
        %v1949 = vtanh.pop %v1948
        %v1950 = vsub.f32 1.0, %v1938
        %1952 = vrot.lane.b32.xlu0 %v1949, 96
        %v1953 = vpop.permute.xlu0 %1952
        %v1955 = vmul.f32 %v1950, %v1953
        %v1956 = vmul.f32 %v1938, %v1618
        %v1957 = vadd.f32 %v1955, %v1956
        %1959 = vrot.lane.b32.xlu0 %v1957, 96
        %v1960 = vpop.permute.xlu0 %1959
        %v1961 = vsel %vm316, %v1960, 0
        %1963 = vmatprep.subr.mxu0 %v1340
        %1964 = vmatpush1.msra.mxu0 %v1335
        %1965 = vmatprep.subr.mxu0 %v1341
        %1966 = vmatpush1.msra.mxu0 %v1336
        %1967 = vmatprep.subr.mxu0 %v1342
        %1968 = vmatpush1.msra.mxu0 %v1337
        %1969 = vmatprep.subr.mxu0 %v1343
        %1970 = vmatpush1.msra.mxu0 %v1338
        %1971 = vmatprep.subr.mxu0 0.0
        %1972 = vmatpush1.msra.mxu0 0.0
        %1973 = vmatprep.subr.mxu0 0.0
        %1974 = vmatpush1.msra.mxu0 0.0
        %1975 = vmatprep.subr.mxu0 0.0
        %1976 = vmatpush1.msra.mxu0 0.0
        %1977 = vmatprep.subr.mxu0 0.0
        %1978 = vmatpush1.msra.mxu0 0.0
        %1979 = vmatprep.subr.mxu0 0.0
        %1980 = vmatpush1.msra.mxu0 0.0
        %1981 = vmatprep.subr.mxu0 0.0
        %1982 = vmatpush1.msra.mxu0 0.0
        %1983 = vmatprep.subr.mxu0 0.0
        %1984 = vmatpush1.msra.mxu0 0.0
        %1985 = vmatprep.subr.mxu0 0.0
        %1986 = vmatpush1.msra.mxu0 0.0
        %1987 = vmatprep.subr.mxu0 0.0
        %1988 = vmatpush1.msra.mxu0 0.0
        %1989 = vmatprep.subr.mxu0 0.0
        %1990 = vmatpush1.msra.mxu0 0.0
        %1991 = vmatprep.subr.mxu0 0.0
        %1992 = vmatpush1.msra.mxu0 0.0
        %1993 = vmatprep.subr.mxu0 0.0
        %1994 = vmatpush1.msra.mxu0 0.0
        %1995 = vmatprep.subr.mxu0 0.0
        %1996 = vmatpush1.msra.mxu0 0.0
        %1997 = vmatprep.subr.mxu0 0.0
        %1998 = vmatpush1.msra.mxu0 0.0
        %1999 = vmatprep.subr.mxu0 0.0
        %2000 = vmatpush1.msra.mxu0 0.0
        %2001 = vmatprep.subr.mxu0 0.0
        %2002 = vmatpush1.msra.mxu0 0.0
        %2003 = vmatprep.subr.mxu0 0.0
        %2004 = vmatpush1.msra.mxu0 0.0
        %2005 = vmatprep.subr.mxu0 0.0
        %2006 = vmatpush1.msra.mxu0 0.0
        %2007 = vmatprep.subr.mxu0 0.0
        %2008 = vmatpush1.msra.mxu0 0.0
        %2009 = vmatprep.subr.mxu0 0.0
        %2010 = vmatpush1.msra.mxu0 0.0
        %2011 = vmatprep.subr.mxu0 0.0
        %2012 = vmatpush1.msra.mxu0 0.0
        %2013 = vmatprep.subr.mxu0 0.0
        %2014 = vmatpush1.msra.mxu0 0.0
        %2015 = vmatprep.subr.mxu0 0.0
        %2016 = vmatpush1.msra.mxu0 0.0
        %2017 = vmatprep.subr.mxu0 0.0
        %2018 = vmatpush1.msra.mxu0 0.0
        %2019 = vmatprep.subr.mxu0 0.0
        %2020 = vmatpush1.msra.mxu0 0.0
        %2021 = vmatprep.subr.mxu0 0.0
        %2022 = vmatpush1.msra.mxu0 0.0
        %2023 = vmatprep.subr.mxu0 0.0
        %2024 = vmatpush1.msra.mxu0 0.0
        %2025 = vmatprep.subr.mxu0 0.0
        %2026 = vmatpush1.msra.mxu0 0.0
        %2027 = vmatprep.mubr.f32.mxu0 0.0
        %2028 = vmatmul.mubr.f32.gmra.mrb[0].mxu0 %v1961
        %v2029 = vpop.f32.mrb[0].mxu0
        %v2030 = vadd.f32 0.0, %v2029
        %v2031 = vpop.f32.mrb[0].mxu0
        %v2032 = vadd.f32 0.0, %v2031
        %2033 = vdwg.mxu0
        %v2034 = vadd.f32 %v2030, %v231
        %v2035 = vadd.f32 %v2030, %v1698
        %v2036 = vadd.f32 %v2032, %v1698
        %v2037 = vsel %vm1702, %v2035, -inf
        %v2038 = vsel %vm1704, %v2036, -inf
        %v2039 = vmax.f32 %v2037, %v2038
        %2040 = vmax.xlane.f32.xlu0 %v2039
        %v2041 = vpop.xlane.xlu0 %2040
        %v2042 = vsub.f32 %v2035, %v2041
        %v2043 = vsub.f32 %v2036, %v2041
        %v2044 = vmul.f32 %v2042, 1.442695
        %v2045 = vpow.pop %v2044
        %v2046 = vmul.f32 %v2043, 1.442695
        %v2047 = vpow.pop %v2046
        %2050 = vrot.lane.b32.xlu0 %v2045, 32
        %v2051 = vpop.permute.xlu0 %2050
        %2052 = vrot.lane.b32.xlu0 %v2047, 32
        %v2053 = vpop.permute.xlu0 %2052
        %v2054 = vsel %vm316, %v2051, %v2053
        %v2056 = vsel %vm1723, %v2054, 0.0
        %2057 = vadd.xlane.f32.xlu0 %v2056
        %v2058 = vpop.xlane.xlu0 %2057
        %v2059 = vlog2.pop %v2058
        %v2060 = vmul.f32 %v2059, 0.6931472
        %v2061 = vadd.f32 %v2041, %v2060
        %vm2062 = vcmp.eq.s32.totalorder %v1347, 1
        %v2063 = vsub.f32 %v2035, %v2061
        %v2064 = vsub.f32 %v2036, %v2061
        %v2065 = vlaneseq
        %v2066 = vshrl.u32 %v2065, 7
        %v2067 = vsub.s32 0, %v2066
        %v2068 = vrot.slane %v2063, %v2067
        %v2069 = vlaneseq
        %v2070 = vshrl.u32 %v2069, 7
        %v2071 = vsub.s32 0, %v2070
        %v2072 = vrot.slane %v2064, %v2071
        %v2073 = vsel %vm2062, %v2068, %v1741
        %v2074 = vsel %vm2062, %v2072, %v1742
        %vm2075 = vcmp.eq.f32.partialorder %v2035, %v2041
        %vm2076 = vcmp.eq.f32.partialorder %v2036, %v2041
        %v2077 = vsel %vm2075, %v1746, 48
        %v2078 = vsel %vm2076, %v1746, 48
        %v2079 = vsel %vm1702, %v2077, 2147483647
        %v2080 = vsel %vm1704, %v2078, 2147483647
        %vm2081 = vcmp.lt.s32.totalorder %v2079, %v2080
        %v2082 = vsel %vm2081, %v2079, %v2080
        %v2083 = vand.u32 %v2082, 65535
        %v2084 = vshra.s32 %v2082, 16
        %v2085 = vcvt.s32.f32 %v2083
        %v2086 = vcvt.s32.f32 %v2084
        %2087 = vmin.xlane.f32.xlu0 %v2086
        %v2088 = vpop.xlane.xlu0 %2087
        %vm2089 = vcmp.eq.f32.partialorder %v2086, %v2088
        %v2090 = vsel %vm2089, %v2085, inf
        %2091 = vmin.xlane.f32.xlu0 %v2090
        %v2092 = vpop.xlane.xlu0 %2091
        %v2093 = vcvt.f32.s32 %v2092
        %v2094 = vcvt.f32.s32 %v2088
        %v2095 = vshll.u32 %v2094, 16
        %v2096 = vadd.s32 %v2095, %v2093
        %v2097 = vsel %vm1348, %v2096, %v1768
        %vm2098 = vcmp.eq.s32.totalorder %v1345, %v2096
        %v2099 = vsel %vm2098, 1, 0
        %v2100 = vcvt.s32.f32 %v2099
        %v2101 = vsel %vm1428, %v2032, -inf
        %2102 = vmax.xlane.f32.xlu0 %v2101
        %v2103 = vpop.xlane.xlu0 %2102
        %v2104 = vsub.f32 %v2032, %v2103
        %v2105 = vmul.f32 %v2104, 1.442695
        %v2106 = vpow.pop %v2105
        %2108 = vrot.lane.b32.xlu0 %v2106, 112
        %v2109 = vpop.permute.xlu0 %2108
        %v2111 = vsel %vm1439, %v2109, 0.0
        %2112 = vadd.xlane.f32.xlu0 %v2111
        %v2113 = vpop.xlane.xlu0 %2112
        %v2114 = vrcp.pop %v2113
        %v2115 = vsel %vm1444, %v2109, 0
        %2117 = vmatprep.subr.mxu0 0.0
        %2118 = vmatpush1.msra.mxu0 %v1267
        %2119 = vmatprep.subr.mxu0 0.0
        %2120 = vmatpush1.msra.mxu0 0.0
        %2121 = vmatprep.subr.mxu0 0.0
        %2122 = vmatpush1.msra.mxu0 0.0
        %2123 = vmatprep.subr.mxu0 0.0
        %2124 = vmatpush1.msra.mxu0 0.0
        %2125 = vmatprep.subr.mxu0 0.0
        %2126 = vmatpush1.msra.mxu0 0.0
        %2127 = vmatprep.subr.mxu0 0.0
        %2128 = vmatpush1.msra.mxu0 0.0
        %2129 = vmatprep.subr.mxu0 0.0
        %2130 = vmatpush1.msra.mxu0 0.0
        %2131 = vmatprep.subr.mxu0 0.0
        %2132 = vmatpush1.msra.mxu0 0.0
        %2133 = vmatprep.subr.mxu0 0.0
        %2134 = vmatpush1.msra.mxu0 0.0
        %2135 = vmatprep.subr.mxu0 0.0
        %2136 = vmatpush1.msra.mxu0 0.0
        %2137 = vmatprep.subr.mxu0 0.0
        %2138 = vmatpush1.msra.mxu0 0.0
        %2139 = vmatprep.subr.mxu0 0.0
        %2140 = vmatpush1.msra.mxu0 0.0
        %2141 = vmatprep.subr.mxu0 0.0
        %2142 = vmatpush1.msra.mxu0 0.0
        %2143 = vmatprep.subr.mxu0 0.0
        %2144 = vmatpush1.msra.mxu0 0.0
        %2145 = vmatprep.subr.mxu0 0.0
        %2146 = vmatpush1.msra.mxu0 0.0
        %2147 = vmatprep.subr.mxu0 0.0
        %2148 = vmatpush1.msra.mxu0 0.0
        %2149 = vmatprep.subr.mxu0 0.0
        %2150 = vmatpush1.msra.mxu0 0.0
        %2151 = vmatprep.subr.mxu0 0.0
        %2152 = vmatpush1.msra.mxu0 0.0
        %2153 = vmatprep.subr.mxu0 0.0
        %2154 = vmatpush1.msra.mxu0 0.0
        %2155 = vmatprep.subr.mxu0 0.0
        %2156 = vmatpush1.msra.mxu0 0.0
        %2157 = vmatprep.subr.mxu0 0.0
        %2158 = vmatpush1.msra.mxu0 0.0
        %2159 = vmatprep.subr.mxu0 0.0
        %2160 = vmatpush1.msra.mxu0 0.0
        %2161 = vmatprep.subr.mxu0 0.0
        %2162 = vmatpush1.msra.mxu0 0.0
        %2163 = vmatprep.subr.mxu0 0.0
        %2164 = vmatpush1.msra.mxu0 0.0
        %2165 = vmatprep.subr.mxu0 0.0
        %2166 = vmatpush1.msra.mxu0 0.0
        %2167 = vmatprep.subr.mxu0 0.0
        %2168 = vmatpush1.msra.mxu0 0.0
        %2169 = vmatprep.subr.mxu0 0.0
        %2170 = vmatpush1.msra.mxu0 0.0
        %2171 = vmatprep.subr.mxu0 0.0
        %2172 = vmatpush1.msra.mxu0 0.0
        %2173 = vmatprep.subr.mxu0 0.0
        %2174 = vmatpush1.msra.mxu0 0.0
        %2175 = vmatprep.subr.mxu0 0.0
        %2176 = vmatpush1.msra.mxu0 0.0
        %2177 = vmatprep.subr.mxu0 0.0
        %2178 = vmatpush1.msra.mxu0 0.0
        %2179 = vmatprep.subr.mxu0 0.0
        %2180 = vmatpush1.msra.mxu0 0.0
        %2181 = vmatprep.mubr.f32.mxu0 0.0
        %2182 = vmatmul.mubr.f32.gmra.mrb[0].mxu0 %v2115
        %v2183 = vpop.f32.mrb[0].mxu0
        %v2184 = vadd.f32 0.0, %v2183
        %v2185 = vpop.f32.mrb[0].mxu0
        %2186 = vdwg.mxu0
        %v2187 = vmul.f32 %v2184, %v2114
        %v2189 = vsel %vm1518, %v2100, 0
        %2191 = vmatprep.subr.mxu0 0.0
        %2192 = vmatpush1.msra.mxu0 %v215
        %2193 = vmatprep.subr.mxu0 0.0
        %2194 = vmatpush1.msra.mxu0 %v216
        %2195 = vmatprep.subr.mxu0 0.0
        %2196 = vmatpush1.msra.mxu0 %v217
        %2197 = vmatprep.subr.mxu0 0.0
        %2198 = vmatpush1.msra.mxu0 %v218
        %2199 = vmatprep.subr.mxu0 0.0
        %2200 = vmatpush1.msra.mxu0 %v219
        %2201 = vmatprep.subr.mxu0 0.0
        %2202 = vmatpush1.msra.mxu0 %v220
        %2203 = vmatprep.subr.mxu0 0.0
        %2204 = vmatpush1.msra.mxu0 0.0
        %2205 = vmatprep.subr.mxu0 0.0
        %2206 = vmatpush1.msra.mxu0 0.0
        %2207 = vmatprep.subr.mxu0 0.0
        %2208 = vmatpush1.msra.mxu0 0.0
        %2209 = vmatprep.subr.mxu0 0.0
        %2210 = vmatpush1.msra.mxu0 0.0
        %2211 = vmatprep.subr.mxu0 0.0
        %2212 = vmatpush1.msra.mxu0 0.0
        %2213 = vmatprep.subr.mxu0 0.0
        %2214 = vmatpush1.msra.mxu0 0.0
        %2215 = vmatprep.subr.mxu0 0.0
        %2216 = vmatpush1.msra.mxu0 0.0
        %2217 = vmatprep.subr.mxu0 0.0
        %2218 = vmatpush1.msra.mxu0 0.0
        %2219 = vmatprep.subr.mxu0 0.0
        %2220 = vmatpush1.msra.mxu0 0.0
        %2221 = vmatprep.subr.mxu0 0.0
        %2222 = vmatpush1.msra.mxu0 0.0
        %2223 = vmatprep.subr.mxu0 0.0
        %2224 = vmatpush1.msra.mxu0 0.0
        %2225 = vmatprep.subr.mxu0 0.0
        %2226 = vmatpush1.msra.mxu0 0.0
        %2227 = vmatprep.subr.mxu0 0.0
        %2228 = vmatpush1.msra.mxu0 0.0
        %2229 = vmatprep.subr.mxu0 0.0
        %2230 = vmatpush1.msra.mxu0 0.0
        %2231 = vmatprep.subr.mxu0 0.0
        %2232 = vmatpush1.msra.mxu0 0.0
        %2233 = vmatprep.subr.mxu0 0.0
        %2234 = vmatpush1.msra.mxu0 0.0
        %2235 = vmatprep.subr.mxu0 0.0
        %2236 = vmatpush1.msra.mxu0 0.0
        %2237 = vmatprep.subr.mxu0 0.0
        %2238 = vmatpush1.msra.mxu0 0.0
        %2239 = vmatprep.subr.mxu0 0.0
        %2240 = vmatpush1.msra.mxu0 0.0
        %2241 = vmatprep.subr.mxu0 0.0
        %2242 = vmatpush1.msra.mxu0 0.0
        %2243 = vmatprep.subr.mxu0 0.0
        %2244 = vmatpush1.msra.mxu0 0.0
        %2245 = vmatprep.subr.mxu0 0.0
        %2246 = vmatpush1.msra.mxu0 0.0
        %2247 = vmatprep.subr.mxu0 0.0
        %2248 = vmatpush1.msra.mxu0 0.0
        %2249 = vmatprep.subr.mxu0 0.0
        %2250 = vmatpush1.msra.mxu0 0.0
        %2251 = vmatprep.subr.mxu0 0.0
        %2252 = vmatpush1.msra.mxu0 0.0
        %2253 = vmatprep.subr.mxu0 0.0
        %2254 = vmatpush1.msra.mxu0 0.0
        %2255 = vmatprep.mubr.f32.mxu0 0.0
        %2256 = vmatmul.mubr.f32.gmra.mrb[0].mxu0 %v2189
        %v2257 = vpop.f32.mrb[0].mxu0
        %v2258 = vadd.f32 %v2187, %v2257
        %v2259 = vpop.f32.mrb[0].mxu0
        %2260 = vdwg.mxu0
        %v2261 = vadd.f32 %v2258, %v2034
        %v2262 = vxor.u32 %v2261, 2147483648
        %v2263 = vmul.f32 %v2262, 1.442695
        %v2264 = vpow.pop %v2263
        %v2265 = vadd.f32 %v2264, 1.0
        %v2266 = vrcp.pop %v2265
        %v2267 = vmul.f32 1.0, %v2266
        %2269 = vrot.lane.b32.xlu0 %v2034, 64
        %v2270 = vpop.permute.xlu0 %2269
        %v2272 = vmul.f32 %v2267, %v2270
        %2274 = vrot.lane.b32.xlu0 %v2272, 64
        %v2275 = vpop.permute.xlu0 %2274
        %v2277 = vadd.f32 %v2258, %v2275
        %v2278 = vtanh.pop %v2277
        %v2279 = vsub.f32 1.0, %v2267
        %2281 = vrot.lane.b32.xlu0 %v2278, 96
        %v2282 = vpop.permute.xlu0 %2281
        %v2284 = vmul.f32 %v2279, %v2282
        %v2285 = vmul.f32 %v2267, %v1957
        %v2286 = vadd.f32 %v2284, %v2285
        %2288 = vrot.lane.b32.xlu0 %v2286, 96
        %v2289 = vpop.permute.xlu0 %2288
        %v2290 = vsel %vm316, %v2289, 0
        %2292 = vmatprep.subr.mxu0 %v1340
        %2293 = vmatpush1.msra.mxu0 %v1335
        %2294 = vmatprep.subr.mxu0 %v1341
        %2295 = vmatpush1.msra.mxu0 %v1336
        %2296 = vmatprep.subr.mxu0 %v1342
        %2297 = vmatpush1.msra.mxu0 %v1337
        %2298 = vmatprep.subr.mxu0 %v1343
        %2299 = vmatpush1.msra.mxu0 %v1338
        %2300 = vmatprep.subr.mxu0 0.0
        %2301 = vmatpush1.msra.mxu0 0.0
        %2302 = vmatprep.subr.mxu0 0.0
        %2303 = vmatpush1.msra.mxu0 0.0
        %2304 = vmatprep.subr.mxu0 0.0
        %2305 = vmatpush1.msra.mxu0 0.0
        %2306 = vmatprep.subr.mxu0 0.0
        %2307 = vmatpush1.msra.mxu0 0.0
        %2308 = vmatprep.subr.mxu0 0.0
        %2309 = vmatpush1.msra.mxu0 0.0
        %2310 = vmatprep.subr.mxu0 0.0
        %2311 = vmatpush1.msra.mxu0 0.0
        %2312 = vmatprep.subr.mxu0 0.0
        %2313 = vmatpush1.msra.mxu0 0.0
        %2314 = vmatprep.subr.mxu0 0.0
        %2315 = vmatpush1.msra.mxu0 0.0
        %2316 = vmatprep.subr.mxu0 0.0
        %2317 = vmatpush1.msra.mxu0 0.0
        %2318 = vmatprep.subr.mxu0 0.0
        %2319 = vmatpush1.msra.mxu0 0.0
        %2320 = vmatprep.subr.mxu0 0.0
        %2321 = vmatpush1.msra.mxu0 0.0
        %2322 = vmatprep.subr.mxu0 0.0
        %2323 = vmatpush1.msra.mxu0 0.0
        %2324 = vmatprep.subr.mxu0 0.0
        %2325 = vmatpush1.msra.mxu0 0.0
        %2326 = vmatprep.subr.mxu0 0.0
        %2327 = vmatpush1.msra.mxu0 0.0
        %2328 = vmatprep.subr.mxu0 0.0
        %2329 = vmatpush1.msra.mxu0 0.0
        %2330 = vmatprep.subr.mxu0 0.0
        %2331 = vmatpush1.msra.mxu0 0.0
        %2332 = vmatprep.subr.mxu0 0.0
        %2333 = vmatpush1.msra.mxu0 0.0
        %2334 = vmatprep.subr.mxu0 0.0
        %2335 = vmatpush1.msra.mxu0 0.0
        %2336 = vmatprep.subr.mxu0 0.0
        %2337 = vmatpush1.msra.mxu0 0.0
        %2338 = vmatprep.subr.mxu0 0.0
        %2339 = vmatpush1.msra.mxu0 0.0
        %2340 = vmatprep.subr.mxu0 0.0
        %2341 = vmatpush1.msra.mxu0 0.0
        %2342 = vmatprep.subr.mxu0 0.0
        %2343 = vmatpush1.msra.mxu0 0.0
        %2344 = vmatprep.subr.mxu0 0.0
        %2345 = vmatpush1.msra.mxu0 0.0
        %2346 = vmatprep.subr.mxu0 0.0
        %2347 = vmatpush1.msra.mxu0 0.0
        %2348 = vmatprep.subr.mxu0 0.0
        %2349 = vmatpush1.msra.mxu0 0.0
        %2350 = vmatprep.subr.mxu0 0.0
        %2351 = vmatpush1.msra.mxu0 0.0
        %2352 = vmatprep.subr.mxu0 0.0
        %2353 = vmatpush1.msra.mxu0 0.0
        %2354 = vmatprep.subr.mxu0 0.0
        %2355 = vmatpush1.msra.mxu0 0.0
        %2356 = vmatprep.mubr.f32.mxu0 0.0
        %2357 = vmatmul.mubr.f32.gmra.mrb[0].mxu0 %v2290
        %v2358 = vpop.f32.mrb[0].mxu0
        %v2359 = vadd.f32 0.0, %v2358
        %v2360 = vpop.f32.mrb[0].mxu0
        %v2361 = vadd.f32 0.0, %v2360
        %2362 = vdwg.mxu0
        %v2363 = vadd.f32 %v2359, %v231
        %v2364 = vadd.f32 %v2359, %v1698
        %v2365 = vadd.f32 %v2361, %v1698
        %v2366 = vsel %vm1702, %v2364, -inf
        %v2367 = vsel %vm1704, %v2365, -inf
        %v2368 = vmax.f32 %v2366, %v2367
        %2369 = vmax.xlane.f32.xlu0 %v2368
        %v2370 = vpop.xlane.xlu0 %2369
        %v2371 = vsub.f32 %v2364, %v2370
        %v2372 = vsub.f32 %v2365, %v2370
        %v2373 = vmul.f32 %v2371, 1.442695
        %v2374 = vpow.pop %v2373
        %v2375 = vmul.f32 %v2372, 1.442695
        %v2376 = vpow.pop %v2375
        %2379 = vrot.lane.b32.xlu0 %v2374, 32
        %v2380 = vpop.permute.xlu0 %2379
        %2381 = vrot.lane.b32.xlu0 %v2376, 32
        %v2382 = vpop.permute.xlu0 %2381
        %v2383 = vsel %vm316, %v2380, %v2382
        %v2385 = vsel %vm1723, %v2383, 0.0
        %2386 = vadd.xlane.f32.xlu0 %v2385
        %v2387 = vpop.xlane.xlu0 %2386
        %v2388 = vlog2.pop %v2387
        %v2389 = vmul.f32 %v2388, 0.6931472
        %v2390 = vadd.f32 %v2370, %v2389
        %vm2391 = vcmp.eq.s32.totalorder %v1347, 2
        %v2392 = vsub.f32 %v2364, %v2390
        %v2393 = vsub.f32 %v2365, %v2390
        %v2394 = vlaneseq
        %v2395 = vshrl.u32 %v2394, 7
        %v2396 = vsub.s32 0, %v2395
        %v2397 = vrot.slane %v2392, %v2396
        %v2398 = vlaneseq
        %v2399 = vshrl.u32 %v2398, 7
        %v2400 = vsub.s32 0, %v2399
        %v2401 = vrot.slane %v2393, %v2400
        %v2402 = vsel %vm2391, %v2397, %v2073
        %v2403 = vsel %vm2391, %v2401, %v2074
        %vm2404 = vcmp.eq.f32.partialorder %v2364, %v2370
        %vm2405 = vcmp.eq.f32.partialorder %v2365, %v2370
        %v2406 = vsel %vm2404, %v1746, 48
        %v2407 = vsel %vm2405, %v1746, 48
        %v2408 = vsel %vm1702, %v2406, 2147483647
        %v2409 = vsel %vm1704, %v2407, 2147483647
        %vm2410 = vcmp.lt.s32.totalorder %v2408, %v2409
        %v2411 = vsel %vm2410, %v2408, %v2409
        %v2412 = vand.u32 %v2411, 65535
        %v2413 = vshra.s32 %v2411, 16
        %v2414 = vcvt.s32.f32 %v2412
        %v2415 = vcvt.s32.f32 %v2413
        %2416 = vmin.xlane.f32.xlu0 %v2415
        %v2417 = vpop.xlane.xlu0 %2416
        %vm2418 = vcmp.eq.f32.partialorder %v2415, %v2417
        %v2419 = vsel %vm2418, %v2414, inf
        %2420 = vmin.xlane.f32.xlu0 %v2419
        %v2421 = vpop.xlane.xlu0 %2420
        %v2422 = vcvt.f32.s32 %v2421
        %v2423 = vcvt.f32.s32 %v2417
        %v2424 = vshll.u32 %v2423, 16
        %v2425 = vadd.s32 %v2424, %v2422
        %vm2426 = vcmp.eq.s32.totalorder %v1345, 2
        %v2427 = vsel %vm2426, %v2425, %v2097
        %vm2428 = vcmp.eq.s32.totalorder %v1345, %v2425
        %v2429 = vsel %vm2428, 1, 0
        %v2430 = vcvt.s32.f32 %v2429
        %v2431 = vsel %vm1428, %v2361, -inf
        %2432 = vmax.xlane.f32.xlu0 %v2431
        %v2433 = vpop.xlane.xlu0 %2432
        %v2434 = vsub.f32 %v2361, %v2433
        %v2435 = vmul.f32 %v2434, 1.442695
        %v2436 = vpow.pop %v2435
        %2438 = vrot.lane.b32.xlu0 %v2436, 112
        %v2439 = vpop.permute.xlu0 %2438
        %v2441 = vsel %vm1439, %v2439, 0.0
        %2442 = vadd.xlane.f32.xlu0 %v2441
        %v2443 = vpop.xlane.xlu0 %2442
        %v2444 = vrcp.pop %v2443
        %v2445 = vsel %vm1444, %v2439, 0
        %2447 = vmatprep.subr.mxu0 0.0
        %2448 = vmatpush1.msra.mxu0 %v1267
        %2449 = vmatprep.subr.mxu0 0.0
        %2450 = vmatpush1.msra.mxu0 0.0
        %2451 = vmatprep.subr.mxu0 0.0
        %2452 = vmatpush1.msra.mxu0 0.0
        %2453 = vmatprep.subr.mxu0 0.0
        %2454 = vmatpush1.msra.mxu0 0.0
        %2455 = vmatprep.subr.mxu0 0.0
        %2456 = vmatpush1.msra.mxu0 0.0
        %2457 = vmatprep.subr.mxu0 0.0
        %2458 = vmatpush1.msra.mxu0 0.0
        %2459 = vmatprep.subr.mxu0 0.0
        %2460 = vmatpush1.msra.mxu0 0.0
        %2461 = vmatprep.subr.mxu0 0.0
        %2462 = vmatpush1.msra.mxu0 0.0
        %2463 = vmatprep.subr.mxu0 0.0
        %2464 = vmatpush1.msra.mxu0 0.0
        %2465 = vmatprep.subr.mxu0 0.0
        %2466 = vmatpush1.msra.mxu0 0.0
        %2467 = vmatprep.subr.mxu0 0.0
        %2468 = vmatpush1.msra.mxu0 0.0
        %2469 = vmatprep.subr.mxu0 0.0
        %2470 = vmatpush1.msra.mxu0 0.0
        %2471 = vmatprep.subr.mxu0 0.0
        %2472 = vmatpush1.msra.mxu0 0.0
        %2473 = vmatprep.subr.mxu0 0.0
        %2474 = vmatpush1.msra.mxu0 0.0
        %2475 = vmatprep.subr.mxu0 0.0
        %2476 = vmatpush1.msra.mxu0 0.0
        %2477 = vmatprep.subr.mxu0 0.0
        %2478 = vmatpush1.msra.mxu0 0.0
        %2479 = vmatprep.subr.mxu0 0.0
        %2480 = vmatpush1.msra.mxu0 0.0
        %2481 = vmatprep.subr.mxu0 0.0
        %2482 = vmatpush1.msra.mxu0 0.0
        %2483 = vmatprep.subr.mxu0 0.0
        %2484 = vmatpush1.msra.mxu0 0.0
        %2485 = vmatprep.subr.mxu0 0.0
        %2486 = vmatpush1.msra.mxu0 0.0
        %2487 = vmatprep.subr.mxu0 0.0
        %2488 = vmatpush1.msra.mxu0 0.0
        %2489 = vmatprep.subr.mxu0 0.0
        %2490 = vmatpush1.msra.mxu0 0.0
        %2491 = vmatprep.subr.mxu0 0.0
        %2492 = vmatpush1.msra.mxu0 0.0
        %2493 = vmatprep.subr.mxu0 0.0
        %2494 = vmatpush1.msra.mxu0 0.0
        %2495 = vmatprep.subr.mxu0 0.0
        %2496 = vmatpush1.msra.mxu0 0.0
        %2497 = vmatprep.subr.mxu0 0.0
        %2498 = vmatpush1.msra.mxu0 0.0
        %2499 = vmatprep.subr.mxu0 0.0
        %2500 = vmatpush1.msra.mxu0 0.0
        %2501 = vmatprep.subr.mxu0 0.0
        %2502 = vmatpush1.msra.mxu0 0.0
        %2503 = vmatprep.subr.mxu0 0.0
        %2504 = vmatpush1.msra.mxu0 0.0
        %2505 = vmatprep.subr.mxu0 0.0
        %2506 = vmatpush1.msra.mxu0 0.0
        %2507 = vmatprep.subr.mxu0 0.0
        %2508 = vmatpush1.msra.mxu0 0.0
        %2509 = vmatprep.subr.mxu0 0.0
        %2510 = vmatpush1.msra.mxu0 0.0
        %2511 = vmatprep.mubr.f32.mxu0 0.0
        %2512 = vmatmul.mubr.f32.gmra.mrb[0].mxu0 %v2445
        %v2513 = vpop.f32.mrb[0].mxu0
        %v2514 = vadd.f32 0.0, %v2513
        %v2515 = vpop.f32.mrb[0].mxu0
        %2516 = vdwg.mxu0
        %v2517 = vmul.f32 %v2514, %v2444
        %v2519 = vsel %vm1518, %v2430, 0
        %2521 = vmatprep.subr.mxu0 0.0
        %2522 = vmatpush1.msra.mxu0 %v215
        %2523 = vmatprep.subr.mxu0 0.0
        %2524 = vmatpush1.msra.mxu0 %v216
        %2525 = vmatprep.subr.mxu0 0.0
        %2526 = vmatpush1.msra.mxu0 %v217
        %2527 = vmatprep.subr.mxu0 0.0
        %2528 = vmatpush1.msra.mxu0 %v218
        %2529 = vmatprep.subr.mxu0 0.0
        %2530 = vmatpush1.msra.mxu0 %v219
        %2531 = vmatprep.subr.mxu0 0.0
        %2532 = vmatpush1.msra.mxu0 %v220
        %2533 = vmatprep.subr.mxu0 0.0
        %2534 = vmatpush1.msra.mxu0 0.0
        %2535 = vmatprep.subr.mxu0 0.0
        %2536 = vmatpush1.msra.mxu0 0.0
        %2537 = vmatprep.subr.mxu0 0.0
        %2538 = vmatpush1.msra.mxu0 0.0
        %2539 = vmatprep.subr.mxu0 0.0
        %2540 = vmatpush1.msra.mxu0 0.0
        %2541 = vmatprep.subr.mxu0 0.0
        %2542 = vmatpush1.msra.mxu0 0.0
        %2543 = vmatprep.subr.mxu0 0.0
        %2544 = vmatpush1.msra.mxu0 0.0
        %2545 = vmatprep.subr.mxu0 0.0
        %2546 = vmatpush1.msra.mxu0 0.0
        %2547 = vmatprep.subr.mxu0 0.0
        %2548 = vmatpush1.msra.mxu0 0.0
        %2549 = vmatprep.subr.mxu0 0.0
        %2550 = vmatpush1.msra.mxu0 0.0
        %2551 = vmatprep.subr.mxu0 0.0
        %2552 = vmatpush1.msra.mxu0 0.0
        %2553 = vmatprep.subr.mxu0 0.0
        %2554 = vmatpush1.msra.mxu0 0.0
        %2555 = vmatprep.subr.mxu0 0.0
        %2556 = vmatpush1.msra.mxu0 0.0
        %2557 = vmatprep.subr.mxu0 0.0
        %2558 = vmatpush1.msra.mxu0 0.0
        %2559 = vmatprep.subr.mxu0 0.0
        %2560 = vmatpush1.msra.mxu0 0.0
        %2561 = vmatprep.subr.mxu0 0.0
        %2562 = vmatpush1.msra.mxu0 0.0
        %2563 = vmatprep.subr.mxu0 0.0
        %2564 = vmatpush1.msra.mxu0 0.0
        %2565 = vmatprep.subr.mxu0 0.0
        %2566 = vmatpush1.msra.mxu0 0.0
        %2567 = vmatprep.subr.mxu0 0.0
        %2568 = vmatpush1.msra.mxu0 0.0
        %2569 = vmatprep.subr.mxu0 0.0
        %2570 = vmatpush1.msra.mxu0 0.0
        %2571 = vmatprep.subr.mxu0 0.0
        %2572 = vmatpush1.msra.mxu0 0.0
        %2573 = vmatprep.subr.mxu0 0.0
        %2574 = vmatpush1.msra.mxu0 0.0
        %2575 = vmatprep.subr.mxu0 0.0
        %2576 = vmatpush1.msra.mxu0 0.0
        %2577 = vmatprep.subr.mxu0 0.0
        %2578 = vmatpush1.msra.mxu0 0.0
        %2579 = vmatprep.subr.mxu0 0.0
        %2580 = vmatpush1.msra.mxu0 0.0
        %2581 = vmatprep.subr.mxu0 0.0
        %2582 = vmatpush1.msra.mxu0 0.0
        %2583 = vmatprep.subr.mxu0 0.0
        %2584 = vmatpush1.msra.mxu0 0.0
        %2585 = vmatprep.mubr.f32.mxu0 0.0
        %2586 = vmatmul.mubr.f32.gmra.mrb[0].mxu0 %v2519
        %v2587 = vpop.f32.mrb[0].mxu0
        %v2588 = vadd.f32 %v2517, %v2587
        %v2589 = vpop.f32.mrb[0].mxu0
        %2590 = vdwg.mxu0
        %v2591 = vadd.f32 %v2588, %v2363
        %v2592 = vxor.u32 %v2591, 2147483648
        %v2593 = vmul.f32 %v2592, 1.442695
        %v2594 = vpow.pop %v2593
        %v2595 = vadd.f32 %v2594, 1.0
        %v2596 = vrcp.pop %v2595
        %v2597 = vmul.f32 1.0, %v2596
        %2599 = vrot.lane.b32.xlu0 %v2363, 64
        %v2600 = vpop.permute.xlu0 %2599
        %v2602 = vmul.f32 %v2597, %v2600
        %2604 = vrot.lane.b32.xlu0 %v2602, 64
        %v2605 = vpop.permute.xlu0 %2604
        %v2607 = vadd.f32 %v2588, %v2605
        %v2608 = vtanh.pop %v2607
        %v2609 = vsub.f32 1.0, %v2597
        %2611 = vrot.lane.b32.xlu0 %v2608, 96
        %v2612 = vpop.permute.xlu0 %2611
        %v2614 = vmul.f32 %v2609, %v2612
        %v2615 = vmul.f32 %v2597, %v2286
        %v2616 = vadd.f32 %v2614, %v2615
        %2618 = vrot.lane.b32.xlu0 %v2616, 96
        %v2619 = vpop.permute.xlu0 %2618
        %v2620 = vsel %vm316, %v2619, 0
        %2622 = vmatprep.subr.mxu0 %v1340
        %2623 = vmatpush1.msra.mxu0 %v1335
        %2624 = vmatprep.subr.mxu0 %v1341
        %2625 = vmatpush1.msra.mxu0 %v1336
        %2626 = vmatprep.subr.mxu0 %v1342
        %2627 = vmatpush1.msra.mxu0 %v1337
        %2628 = vmatprep.subr.mxu0 %v1343
        %2629 = vmatpush1.msra.mxu0 %v1338
        %2630 = vmatprep.subr.mxu0 0.0
        %2631 = vmatpush1.msra.mxu0 0.0
        %2632 = vmatprep.subr.mxu0 0.0
        %2633 = vmatpush1.msra.mxu0 0.0
        %2634 = vmatprep.subr.mxu0 0.0
        %2635 = vmatpush1.msra.mxu0 0.0
        %2636 = vmatprep.subr.mxu0 0.0
        %2637 = vmatpush1.msra.mxu0 0.0
        %2638 = vmatprep.subr.mxu0 0.0
        %2639 = vmatpush1.msra.mxu0 0.0
        %2640 = vmatprep.subr.mxu0 0.0
        %2641 = vmatpush1.msra.mxu0 0.0
        %2642 = vmatprep.subr.mxu0 0.0
        %2643 = vmatpush1.msra.mxu0 0.0
        %2644 = vmatprep.subr.mxu0 0.0
        %2645 = vmatpush1.msra.mxu0 0.0
        %2646 = vmatprep.subr.mxu0 0.0
        %2647 = vmatpush1.msra.mxu0 0.0
        %2648 = vmatprep.subr.mxu0 0.0
        %2649 = vmatpush1.msra.mxu0 0.0
        %2650 = vmatprep.subr.mxu0 0.0
        %2651 = vmatpush1.msra.mxu0 0.0
        %2652 = vmatprep.subr.mxu0 0.0
        %2653 = vmatpush1.msra.mxu0 0.0
        %2654 = vmatprep.subr.mxu0 0.0
        %2655 = vmatpush1.msra.mxu0 0.0
        %2656 = vmatprep.subr.mxu0 0.0
        %2657 = vmatpush1.msra.mxu0 0.0
        %2658 = vmatprep.subr.mxu0 0.0
        %2659 = vmatpush1.msra.mxu0 0.0
        %2660 = vmatprep.subr.mxu0 0.0
        %2661 = vmatpush1.msra.mxu0 0.0
        %2662 = vmatprep.subr.mxu0 0.0
        %2663 = vmatpush1.msra.mxu0 0.0
        %2664 = vmatprep.subr.mxu0 0.0
        %2665 = vmatpush1.msra.mxu0 0.0
        %2666 = vmatprep.subr.mxu0 0.0
        %2667 = vmatpush1.msra.mxu0 0.0
        %2668 = vmatprep.subr.mxu0 0.0
        %2669 = vmatpush1.msra.mxu0 0.0
        %2670 = vmatprep.subr.mxu0 0.0
        %2671 = vmatpush1.msra.mxu0 0.0
        %2672 = vmatprep.subr.mxu0 0.0
        %2673 = vmatpush1.msra.mxu0 0.0
        %2674 = vmatprep.subr.mxu0 0.0
        %2675 = vmatpush1.msra.mxu0 0.0
        %2676 = vmatprep.subr.mxu0 0.0
        %2677 = vmatpush1.msra.mxu0 0.0
        %2678 = vmatprep.subr.mxu0 0.0
        %2679 = vmatpush1.msra.mxu0 0.0
        %2680 = vmatprep.subr.mxu0 0.0
        %2681 = vmatpush1.msra.mxu0 0.0
        %2682 = vmatprep.subr.mxu0 0.0
        %2683 = vmatpush1.msra.mxu0 0.0
        %2684 = vmatprep.subr.mxu0 0.0
        %2685 = vmatpush1.msra.mxu0 0.0
        %2686 = vmatprep.mubr.f32.mxu0 0.0
        %2687 = vmatmul.mubr.f32.gmra.mrb[0].mxu0 %v2620
        %v2688 = vpop.f32.mrb[0].mxu0
        %v2689 = vadd.f32 0.0, %v2688
        %v2690 = vpop.f32.mrb[0].mxu0
        %v2691 = vadd.f32 0.0, %v2690
        %2692 = vdwg.mxu0
        %v2693 = vadd.f32 %v2689, %v231
        %v2694 = vadd.f32 %v2689, %v1698
        %v2695 = vadd.f32 %v2691, %v1698
        %v2696 = vsel %vm1702, %v2694, -inf
        %v2697 = vsel %vm1704, %v2695, -inf
        %v2698 = vmax.f32 %v2696, %v2697
        %2699 = vmax.xlane.f32.xlu0 %v2698
        %v2700 = vpop.xlane.xlu0 %2699
        %v2701 = vsub.f32 %v2694, %v2700
        %v2702 = vsub.f32 %v2695, %v2700
        %v2703 = vmul.f32 %v2701, 1.442695
        %v2704 = vpow.pop %v2703
        %v2705 = vmul.f32 %v2702, 1.442695
        %v2706 = vpow.pop %v2705
        %2709 = vrot.lane.b32.xlu0 %v2704, 32
        %v2710 = vpop.permute.xlu0 %2709
        %2711 = vrot.lane.b32.xlu0 %v2706, 32
        %v2712 = vpop.permute.xlu0 %2711
        %v2713 = vsel %vm316, %v2710, %v2712
        %v2715 = vsel %vm1723, %v2713, 0.0
        %2716 = vadd.xlane.f32.xlu0 %v2715
        %v2717 = vpop.xlane.xlu0 %2716
        %v2718 = vlog2.pop %v2717
        %v2719 = vmul.f32 %v2718, 0.6931472
        %v2720 = vadd.f32 %v2700, %v2719
        %vm2721 = vcmp.eq.s32.totalorder %v1347, 3
        %v2722 = vsub.f32 %v2694, %v2720
        %v2723 = vsub.f32 %v2695, %v2720
        %v2724 = vlaneseq
        %v2725 = vshrl.u32 %v2724, 7
        %v2726 = vsub.s32 0, %v2725
        %v2727 = vrot.slane %v2722, %v2726
        %v2728 = vlaneseq
        %v2729 = vshrl.u32 %v2728, 7
        %v2730 = vsub.s32 0, %v2729
        %v2731 = vrot.slane %v2723, %v2730
        %v2732 = vsel %vm2721, %v2727, %v2402
        %v2733 = vsel %vm2721, %v2731, %v2403
        %vm2734 = vcmp.eq.f32.partialorder %v2694, %v2700
        %vm2735 = vcmp.eq.f32.partialorder %v2695, %v2700
        %v2736 = vsel %vm2734, %v1746, 48
        %v2737 = vsel %vm2735, %v1746, 48
        %v2738 = vsel %vm1702, %v2736, 2147483647
        %v2739 = vsel %vm1704, %v2737, 2147483647
        %vm2740 = vcmp.lt.s32.totalorder %v2738, %v2739
        %v2741 = vsel %vm2740, %v2738, %v2739
        %v2742 = vand.u32 %v2741, 65535
        %v2743 = vshra.s32 %v2741, 16
        %v2744 = vcvt.s32.f32 %v2742
        %v2745 = vcvt.s32.f32 %v2743
        %2746 = vmin.xlane.f32.xlu0 %v2745
        %v2747 = vpop.xlane.xlu0 %2746
        %vm2748 = vcmp.eq.f32.partialorder %v2745, %v2747
        %v2749 = vsel %vm2748, %v2744, inf
        %2750 = vmin.xlane.f32.xlu0 %v2749
        %v2751 = vpop.xlane.xlu0 %2750
        %v2752 = vcvt.f32.s32 %v2751
        %v2753 = vcvt.f32.s32 %v2747
        %v2754 = vshll.u32 %v2753, 16
        %v2755 = vadd.s32 %v2754, %v2752
        %vm2756 = vcmp.eq.s32.totalorder %v1345, 3
        %v2757 = vsel %vm2756, %v2755, %v2427
        %vm2758 = vcmp.eq.s32.totalorder %v1345, %v2755
        %v2759 = vsel %vm2758, 1, 0
        %v2760 = vcvt.s32.f32 %v2759
        %v2761 = vsel %vm1428, %v2691, -inf
        %2762 = vmax.xlane.f32.xlu0 %v2761
        %v2763 = vpop.xlane.xlu0 %2762
        %v2764 = vsub.f32 %v2691, %v2763
        %v2765 = vmul.f32 %v2764, 1.442695
        %v2766 = vpow.pop %v2765
        %2768 = vrot.lane.b32.xlu0 %v2766, 112
        %v2769 = vpop.permute.xlu0 %2768
        %v2771 = vsel %vm1439, %v2769, 0.0
        %2772 = vadd.xlane.f32.xlu0 %v2771
        %v2773 = vpop.xlane.xlu0 %2772
        %v2774 = vrcp.pop %v2773
        %v2775 = vsel %vm1444, %v2769, 0
        %2777 = vmatprep.subr.mxu0 0.0
        %2778 = vmatpush1.msra.mxu0 %v1267
        %2779 = vmatprep.subr.mxu0 0.0
        %2780 = vmatpush1.msra.mxu0 0.0
        %2781 = vmatprep.subr.mxu0 0.0
        %2782 = vmatpush1.msra.mxu0 0.0
        %2783 = vmatprep.subr.mxu0 0.0
        %2784 = vmatpush1.msra.mxu0 0.0
        %2785 = vmatprep.subr.mxu0 0.0
        %2786 = vmatpush1.msra.mxu0 0.0
        %2787 = vmatprep.subr.mxu0 0.0
        %2788 = vmatpush1.msra.mxu0 0.0
        %2789 = vmatprep.subr.mxu0 0.0
        %2790 = vmatpush1.msra.mxu0 0.0
        %2791 = vmatprep.subr.mxu0 0.0
        %2792 = vmatpush1.msra.mxu0 0.0
        %2793 = vmatprep.subr.mxu0 0.0
        %2794 = vmatpush1.msra.mxu0 0.0
        %2795 = vmatprep.subr.mxu0 0.0
        %2796 = vmatpush1.msra.mxu0 0.0
        %2797 = vmatprep.subr.mxu0 0.0
        %2798 = vmatpush1.msra.mxu0 0.0
        %2799 = vmatprep.subr.mxu0 0.0
        %2800 = vmatpush1.msra.mxu0 0.0
        %2801 = vmatprep.subr.mxu0 0.0
        %2802 = vmatpush1.msra.mxu0 0.0
        %2803 = vmatprep.subr.mxu0 0.0
        %2804 = vmatpush1.msra.mxu0 0.0
        %2805 = vmatprep.subr.mxu0 0.0
        %2806 = vmatpush1.msra.mxu0 0.0
        %2807 = vmatprep.subr.mxu0 0.0
        %2808 = vmatpush1.msra.mxu0 0.0
        %2809 = vmatprep.subr.mxu0 0.0
        %2810 = vmatpush1.msra.mxu0 0.0
        %2811 = vmatprep.subr.mxu0 0.0
        %2812 = vmatpush1.msra.mxu0 0.0
        %2813 = vmatprep.subr.mxu0 0.0
        %2814 = vmatpush1.msra.mxu0 0.0
        %2815 = vmatprep.subr.mxu0 0.0
        %2816 = vmatpush1.msra.mxu0 0.0
        %2817 = vmatprep.subr.mxu0 0.0
        %2818 = vmatpush1.msra.mxu0 0.0
        %2819 = vmatprep.subr.mxu0 0.0
        %2820 = vmatpush1.msra.mxu0 0.0
        %2821 = vmatprep.subr.mxu0 0.0
        %2822 = vmatpush1.msra.mxu0 0.0
        %2823 = vmatprep.subr.mxu0 0.0
        %2824 = vmatpush1.msra.mxu0 0.0
        %2825 = vmatprep.subr.mxu0 0.0
        %2826 = vmatpush1.msra.mxu0 0.0
        %2827 = vmatprep.subr.mxu0 0.0
        %2828 = vmatpush1.msra.mxu0 0.0
        %2829 = vmatprep.subr.mxu0 0.0
        %2830 = vmatpush1.msra.mxu0 0.0
        %2831 = vmatprep.subr.mxu0 0.0
        %2832 = vmatpush1.msra.mxu0 0.0
        %2833 = vmatprep.subr.mxu0 0.0
        %2834 = vmatpush1.msra.mxu0 0.0
        %2835 = vmatprep.subr.mxu0 0.0
        %2836 = vmatpush1.msra.mxu0 0.0
        %2837 = vmatprep.subr.mxu0 0.0
        %2838 = vmatpush1.msra.mxu0 0.0
        %2839 = vmatprep.subr.mxu0 0.0
        %2840 = vmatpush1.msra.mxu0 0.0
        %2841 = vmatprep.mubr.f32.mxu0 0.0
        %2842 = vmatmul.mubr.f32.gmra.mrb[0].mxu0 %v2775
        %v2843 = vpop.f32.mrb[0].mxu0
        %v2844 = vadd.f32 0.0, %v2843
        %v2845 = vpop.f32.mrb[0].mxu0
        %2846 = vdwg.mxu0
        %v2847 = vmul.f32 %v2844, %v2774
        %v2849 = vsel %vm1518, %v2760, 0
        %2851 = vmatprep.subr.mxu0 0.0
        %2852 = vmatpush1.msra.mxu0 %v215
        %2853 = vmatprep.subr.mxu0 0.0
        %2854 = vmatpush1.msra.mxu0 %v216
        %2855 = vmatprep.subr.mxu0 0.0
        %2856 = vmatpush1.msra.mxu0 %v217
        %2857 = vmatprep.subr.mxu0 0.0
        %2858 = vmatpush1.msra.mxu0 %v218
        %2859 = vmatprep.subr.mxu0 0.0
        %2860 = vmatpush1.msra.mxu0 %v219
        %2861 = vmatprep.subr.mxu0 0.0
        %2862 = vmatpush1.msra.mxu0 %v220
        %2863 = vmatprep.subr.mxu0 0.0
        %2864 = vmatpush1.msra.mxu0 0.0
        %2865 = vmatprep.subr.mxu0 0.0
        %2866 = vmatpush1.msra.mxu0 0.0
        %2867 = vmatprep.subr.mxu0 0.0
        %2868 = vmatpush1.msra.mxu0 0.0
        %2869 = vmatprep.subr.mxu0 0.0
        %2870 = vmatpush1.msra.mxu0 0.0
        %2871 = vmatprep.subr.mxu0 0.0
        %2872 = vmatpush1.msra.mxu0 0.0
        %2873 = vmatprep.subr.mxu0 0.0
        %2874 = vmatpush1.msra.mxu0 0.0
        %2875 = vmatprep.subr.mxu0 0.0
        %2876 = vmatpush1.msra.mxu0 0.0
        %2877 = vmatprep.subr.mxu0 0.0
        %2878 = vmatpush1.msra.mxu0 0.0
        %2879 = vmatprep.subr.mxu0 0.0
        %2880 = vmatpush1.msra.mxu0 0.0
        %2881 = vmatprep.subr.mxu0 0.0
        %2882 = vmatpush1.msra.mxu0 0.0
        %2883 = vmatprep.subr.mxu0 0.0
        %2884 = vmatpush1.msra.mxu0 0.0
        %2885 = vmatprep.subr.mxu0 0.0
        %2886 = vmatpush1.msra.mxu0 0.0
        %2887 = vmatprep.subr.mxu0 0.0
        %2888 = vmatpush1.msra.mxu0 0.0
        %2889 = vmatprep.subr.mxu0 0.0
        %2890 = vmatpush1.msra.mxu0 0.0
        %2891 = vmatprep.subr.mxu0 0.0
        %2892 = vmatpush1.msra.mxu0 0.0
        %2893 = vmatprep.subr.mxu0 0.0
        %2894 = vmatpush1.msra.mxu0 0.0
        %2895 = vmatprep.subr.mxu0 0.0
        %2896 = vmatpush1.msra.mxu0 0.0
        %2897 = vmatprep.subr.mxu0 0.0
        %2898 = vmatpush1.msra.mxu0 0.0
        %2899 = vmatprep.subr.mxu0 0.0
        %2900 = vmatpush1.msra.mxu0 0.0
        %2901 = vmatprep.subr.mxu0 0.0
        %2902 = vmatpush1.msra.mxu0 0.0
        %2903 = vmatprep.subr.mxu0 0.0
        %2904 = vmatpush1.msra.mxu0 0.0
        %2905 = vmatprep.subr.mxu0 0.0
        %2906 = vmatpush1.msra.mxu0 0.0
        %2907 = vmatprep.subr.mxu0 0.0
        %2908 = vmatpush1.msra.mxu0 0.0
        %2909 = vmatprep.subr.mxu0 0.0
        %2910 = vmatpush1.msra.mxu0 0.0
        %2911 = vmatprep.subr.mxu0 0.0
        %2912 = vmatpush1.msra.mxu0 0.0
        %2913 = vmatprep.subr.mxu0 0.0
        %2914 = vmatpush1.msra.mxu0 0.0
        %2915 = vmatprep.mubr.f32.mxu0 0.0
        %2916 = vmatmul.mubr.f32.gmra.mrb[0].mxu0 %v2849
        %v2917 = vpop.f32.mrb[0].mxu0
        %v2918 = vadd.f32 %v2847, %v2917
        %v2919 = vpop.f32.mrb[0].mxu0
        %2920 = vdwg.mxu0
        %v2921 = vadd.f32 %v2918, %v2693
        %v2922 = vxor.u32 %v2921, 2147483648
        %v2923 = vmul.f32 %v2922, 1.442695
        %v2924 = vpow.pop %v2923
        %v2925 = vadd.f32 %v2924, 1.0
        %v2926 = vrcp.pop %v2925
        %v2927 = vmul.f32 1.0, %v2926
        %2929 = vrot.lane.b32.xlu0 %v2693, 64
        %v2930 = vpop.permute.xlu0 %2929
        %v2932 = vmul.f32 %v2927, %v2930
        %2934 = vrot.lane.b32.xlu0 %v2932, 64
        %v2935 = vpop.permute.xlu0 %2934
        %v2937 = vadd.f32 %v2918, %v2935
        %v2938 = vtanh.pop %v2937
        %v2939 = vsub.f32 1.0, %v2927
        %2941 = vrot.lane.b32.xlu0 %v2938, 96
        %v2942 = vpop.permute.xlu0 %2941
        %v2944 = vmul.f32 %v2939, %v2942
        %v2945 = vmul.f32 %v2927, %v2616
        %v2946 = vadd.f32 %v2944, %v2945
        %2948 = vrot.lane.b32.xlu0 %v2946, 96
        %v2949 = vpop.permute.xlu0 %2948
        %v2950 = vsel %vm316, %v2949, 0
        %2952 = vmatprep.subr.mxu0 %v1340
        %2953 = vmatpush1.msra.mxu0 %v1335
        %2954 = vmatprep.subr.mxu0 %v1341
        %2955 = vmatpush1.msra.mxu0 %v1336
        %2956 = vmatprep.subr.mxu0 %v1342
        %2957 = vmatpush1.msra.mxu0 %v1337
        %2958 = vmatprep.subr.mxu0 %v1343
        %2959 = vmatpush1.msra.mxu0 %v1338
        %2960 = vmatprep.subr.mxu0 0.0
        %2961 = vmatpush1.msra.mxu0 0.0
        %2962 = vmatprep.subr.mxu0 0.0
        %2963 = vmatpush1.msra.mxu0 0.0
        %2964 = vmatprep.subr.mxu0 0.0
        %2965 = vmatpush1.msra.mxu0 0.0
        %2966 = vmatprep.subr.mxu0 0.0
        %2967 = vmatpush1.msra.mxu0 0.0
        %2968 = vmatprep.subr.mxu0 0.0
        %2969 = vmatpush1.msra.mxu0 0.0
        %2970 = vmatprep.subr.mxu0 0.0
        %2971 = vmatpush1.msra.mxu0 0.0
        %2972 = vmatprep.subr.mxu0 0.0
        %2973 = vmatpush1.msra.mxu0 0.0
        %2974 = vmatprep.subr.mxu0 0.0
        %2975 = vmatpush1.msra.mxu0 0.0
        %2976 = vmatprep.subr.mxu0 0.0
        %2977 = vmatpush1.msra.mxu0 0.0
        %2978 = vmatprep.subr.mxu0 0.0
        %2979 = vmatpush1.msra.mxu0 0.0
        %2980 = vmatprep.subr.mxu0 0.0
        %2981 = vmatpush1.msra.mxu0 0.0
        %2982 = vmatprep.subr.mxu0 0.0
        %2983 = vmatpush1.msra.mxu0 0.0
        %2984 = vmatprep.subr.mxu0 0.0
        %2985 = vmatpush1.msra.mxu0 0.0
        %2986 = vmatprep.subr.mxu0 0.0
        %2987 = vmatpush1.msra.mxu0 0.0
        %2988 = vmatprep.subr.mxu0 0.0
        %2989 = vmatpush1.msra.mxu0 0.0
        %2990 = vmatprep.subr.mxu0 0.0
        %2991 = vmatpush1.msra.mxu0 0.0
        %2992 = vmatprep.subr.mxu0 0.0
        %2993 = vmatpush1.msra.mxu0 0.0
        %2994 = vmatprep.subr.mxu0 0.0
        %2995 = vmatpush1.msra.mxu0 0.0
        %2996 = vmatprep.subr.mxu0 0.0
        %2997 = vmatpush1.msra.mxu0 0.0
        %2998 = vmatprep.subr.mxu0 0.0
        %2999 = vmatpush1.msra.mxu0 0.0
        %3000 = vmatprep.subr.mxu0 0.0
        %3001 = vmatpush1.msra.mxu0 0.0
        %3002 = vmatprep.subr.mxu0 0.0
        %3003 = vmatpush1.msra.mxu0 0.0
        %3004 = vmatprep.subr.mxu0 0.0
        %3005 = vmatpush1.msra.mxu0 0.0
        %3006 = vmatprep.subr.mxu0 0.0
        %3007 = vmatpush1.msra.mxu0 0.0
        %3008 = vmatprep.subr.mxu0 0.0
        %3009 = vmatpush1.msra.mxu0 0.0
        %3010 = vmatprep.subr.mxu0 0.0
        %3011 = vmatpush1.msra.mxu0 0.0
        %3012 = vmatprep.subr.mxu0 0.0
        %3013 = vmatpush1.msra.mxu0 0.0
        %3014 = vmatprep.subr.mxu0 0.0
        %3015 = vmatpush1.msra.mxu0 0.0
        %3016 = vmatprep.mubr.f32.mxu0 0.0
        %3017 = vmatmul.mubr.f32.gmra.mrb[0].mxu0 %v2950
        %v3018 = vpop.f32.mrb[0].mxu0
        %v3019 = vadd.f32 0.0, %v3018
        %v3020 = vpop.f32.mrb[0].mxu0
        %v3021 = vadd.f32 0.0, %v3020
        %3022 = vdwg.mxu0
        %v3023 = vadd.f32 %v3019, %v231
        %v3024 = vadd.f32 %v3019, %v1698
        %v3025 = vadd.f32 %v3021, %v1698
        %v3026 = vsel %vm1702, %v3024, -inf
        %v3027 = vsel %vm1704, %v3025, -inf
        %v3028 = vmax.f32 %v3026, %v3027
        %3029 = vmax.xlane.f32.xlu0 %v3028
        %v3030 = vpop.xlane.xlu0 %3029
        %v3031 = vsub.f32 %v3024, %v3030
        %v3032 = vsub.f32 %v3025, %v3030
        %v3033 = vmul.f32 %v3031, 1.442695
        %v3034 = vpow.pop %v3033
        %v3035 = vmul.f32 %v3032, 1.442695
        %v3036 = vpow.pop %v3035
        %3039 = vrot.lane.b32.xlu0 %v3034, 32
        %v3040 = vpop.permute.xlu0 %3039
        %3041 = vrot.lane.b32.xlu0 %v3036, 32
        %v3042 = vpop.permute.xlu0 %3041
        %v3043 = vsel %vm316, %v3040, %v3042
        %v3045 = vsel %vm1723, %v3043, 0.0
        %3046 = vadd.xlane.f32.xlu0 %v3045
        %v3047 = vpop.xlane.xlu0 %3046
        %v3048 = vlog2.pop %v3047
        %v3049 = vmul.f32 %v3048, 0.6931472
        %v3050 = vadd.f32 %v3030, %v3049
        %vm3051 = vcmp.eq.s32.totalorder %v1347, 4
        %v3052 = vsub.f32 %v3024, %v3050
        %v3053 = vsub.f32 %v3025, %v3050
        %v3054 = vlaneseq
        %v3055 = vshrl.u32 %v3054, 7
        %v3056 = vsub.s32 0, %v3055
        %v3057 = vrot.slane %v3052, %v3056
        %v3058 = vlaneseq
        %v3059 = vshrl.u32 %v3058, 7
        %v3060 = vsub.s32 0, %v3059
        %v3061 = vrot.slane %v3053, %v3060
        %v3062 = vsel %vm3051, %v3057, %v2732
        %v3063 = vsel %vm3051, %v3061, %v2733
        %vm3064 = vcmp.eq.f32.partialorder %v3024, %v3030
        %vm3065 = vcmp.eq.f32.partialorder %v3025, %v3030
        %v3066 = vsel %vm3064, %v1746, 48
        %v3067 = vsel %vm3065, %v1746, 48
        %v3068 = vsel %vm1702, %v3066, 2147483647
        %v3069 = vsel %vm1704, %v3067, 2147483647
        %vm3070 = vcmp.lt.s32.totalorder %v3068, %v3069
        %v3071 = vsel %vm3070, %v3068, %v3069
        %v3072 = vand.u32 %v3071, 65535
        %v3073 = vshra.s32 %v3071, 16
        %v3074 = vcvt.s32.f32 %v3072
        %v3075 = vcvt.s32.f32 %v3073
        %3076 = vmin.xlane.f32.xlu0 %v3075
        %v3077 = vpop.xlane.xlu0 %3076
        %vm3078 = vcmp.eq.f32.partialorder %v3075, %v3077
        %v3079 = vsel %vm3078, %v3074, inf
        %3080 = vmin.xlane.f32.xlu0 %v3079
        %v3081 = vpop.xlane.xlu0 %3080
        %v3082 = vcvt.f32.s32 %v3081
        %v3083 = vcvt.f32.s32 %v3077
        %v3084 = vshll.u32 %v3083, 16
        %v3085 = vadd.s32 %v3084, %v3082
        %vm3086 = vcmp.eq.s32.totalorder %v1345, 4
        %v3087 = vsel %vm3086, %v3085, %v2757
        %vm3088 = vcmp.eq.s32.totalorder %v1345, %v3085
        %v3089 = vsel %vm3088, 1, 0
        %v3090 = vcvt.s32.f32 %v3089
        %v3091 = vsel %vm1428, %v3021, -inf
        %3092 = vmax.xlane.f32.xlu0 %v3091
        %v3093 = vpop.xlane.xlu0 %3092
        %v3094 = vsub.f32 %v3021, %v3093
        %v3095 = vmul.f32 %v3094, 1.442695
        %v3096 = vpow.pop %v3095
        %3098 = vrot.lane.b32.xlu0 %v3096, 112
        %v3099 = vpop.permute.xlu0 %3098
        %v3101 = vsel %vm1439, %v3099, 0.0
        %3102 = vadd.xlane.f32.xlu0 %v3101
        %v3103 = vpop.xlane.xlu0 %3102
        %v3104 = vrcp.pop %v3103
        %v3105 = vsel %vm1444, %v3099, 0
        %3107 = vmatprep.subr.mxu0 0.0
        %3108 = vmatpush1.msra.mxu0 %v1267
        %3109 = vmatprep.subr.mxu0 0.0
        %3110 = vmatpush1.msra.mxu0 0.0
        %3111 = vmatprep.subr.mxu0 0.0
        %3112 = vmatpush1.msra.mxu0 0.0
        %3113 = vmatprep.subr.mxu0 0.0
        %3114 = vmatpush1.msra.mxu0 0.0
        %3115 = vmatprep.subr.mxu0 0.0
        %3116 = vmatpush1.msra.mxu0 0.0
        %3117 = vmatprep.subr.mxu0 0.0
        %3118 = vmatpush1.msra.mxu0 0.0
        %3119 = vmatprep.subr.mxu0 0.0
        %3120 = vmatpush1.msra.mxu0 0.0
        %3121 = vmatprep.subr.mxu0 0.0
        %3122 = vmatpush1.msra.mxu0 0.0
        %3123 = vmatprep.subr.mxu0 0.0
        %3124 = vmatpush1.msra.mxu0 0.0
        %3125 = vmatprep.subr.mxu0 0.0
        %3126 = vmatpush1.msra.mxu0 0.0
        %3127 = vmatprep.subr.mxu0 0.0
        %3128 = vmatpush1.msra.mxu0 0.0
        %3129 = vmatprep.subr.mxu0 0.0
        %3130 = vmatpush1.msra.mxu0 0.0
        %3131 = vmatprep.subr.mxu0 0.0
        %3132 = vmatpush1.msra.mxu0 0.0
        %3133 = vmatprep.subr.mxu0 0.0
        %3134 = vmatpush1.msra.mxu0 0.0
        %3135 = vmatprep.subr.mxu0 0.0
        %3136 = vmatpush1.msra.mxu0 0.0
        %3137 = vmatprep.subr.mxu0 0.0
        %3138 = vmatpush1.msra.mxu0 0.0
        %3139 = vmatprep.subr.mxu0 0.0
        %3140 = vmatpush1.msra.mxu0 0.0
        %3141 = vmatprep.subr.mxu0 0.0
        %3142 = vmatpush1.msra.mxu0 0.0
        %3143 = vmatprep.subr.mxu0 0.0
        %3144 = vmatpush1.msra.mxu0 0.0
        %3145 = vmatprep.subr.mxu0 0.0
        %3146 = vmatpush1.msra.mxu0 0.0
        %3147 = vmatprep.subr.mxu0 0.0
        %3148 = vmatpush1.msra.mxu0 0.0
        %3149 = vmatprep.subr.mxu0 0.0
        %3150 = vmatpush1.msra.mxu0 0.0
        %3151 = vmatprep.subr.mxu0 0.0
        %3152 = vmatpush1.msra.mxu0 0.0
        %3153 = vmatprep.subr.mxu0 0.0
        %3154 = vmatpush1.msra.mxu0 0.0
        %3155 = vmatprep.subr.mxu0 0.0
        %3156 = vmatpush1.msra.mxu0 0.0
        %3157 = vmatprep.subr.mxu0 0.0
        %3158 = vmatpush1.msra.mxu0 0.0
        %3159 = vmatprep.subr.mxu0 0.0
        %3160 = vmatpush1.msra.mxu0 0.0
        %3161 = vmatprep.subr.mxu0 0.0
        %3162 = vmatpush1.msra.mxu0 0.0
        %3163 = vmatprep.subr.mxu0 0.0
        %3164 = vmatpush1.msra.mxu0 0.0
        %3165 = vmatprep.subr.mxu0 0.0
        %3166 = vmatpush1.msra.mxu0 0.0
        %3167 = vmatprep.subr.mxu0 0.0
        %3168 = vmatpush1.msra.mxu0 0.0
        %3169 = vmatprep.subr.mxu0 0.0
        %3170 = vmatpush1.msra.mxu0 0.0
        %3171 = vmatprep.mubr.f32.mxu0 0.0
        %3172 = vmatmul.mubr.f32.gmra.mrb[0].mxu0 %v3105
        %v3173 = vpop.f32.mrb[0].mxu0
        %v3174 = vadd.f32 0.0, %v3173
        %v3175 = vpop.f32.mrb[0].mxu0
        %3176 = vdwg.mxu0
        %v3177 = vmul.f32 %v3174, %v3104
        %v3179 = vsel %vm1518, %v3090, 0
        %3181 = vmatprep.subr.mxu0 0.0
        %3182 = vmatpush1.msra.mxu0 %v215
        %3183 = vmatprep.subr.mxu0 0.0
        %3184 = vmatpush1.msra.mxu0 %v216
        %3185 = vmatprep.subr.mxu0 0.0
        %3186 = vmatpush1.msra.mxu0 %v217
        %3187 = vmatprep.subr.mxu0 0.0
        %3188 = vmatpush1.msra.mxu0 %v218
        %3189 = vmatprep.subr.mxu0 0.0
        %3190 = vmatpush1.msra.mxu0 %v219
        %3191 = vmatprep.subr.mxu0 0.0
        %3192 = vmatpush1.msra.mxu0 %v220
        %3193 = vmatprep.subr.mxu0 0.0
        %3194 = vmatpush1.msra.mxu0 0.0
        %3195 = vmatprep.subr.mxu0 0.0
        %3196 = vmatpush1.msra.mxu0 0.0
        %3197 = vmatprep.subr.mxu0 0.0
        %3198 = vmatpush1.msra.mxu0 0.0
        %3199 = vmatprep.subr.mxu0 0.0
        %3200 = vmatpush1.msra.mxu0 0.0
        %3201 = vmatprep.subr.mxu0 0.0
        %3202 = vmatpush1.msra.mxu0 0.0
        %3203 = vmatprep.subr.mxu0 0.0
        %3204 = vmatpush1.msra.mxu0 0.0
        %3205 = vmatprep.subr.mxu0 0.0
        %3206 = vmatpush1.msra.mxu0 0.0
        %3207 = vmatprep.subr.mxu0 0.0
        %3208 = vmatpush1.msra.mxu0 0.0
        %3209 = vmatprep.subr.mxu0 0.0
        %3210 = vmatpush1.msra.mxu0 0.0
        %3211 = vmatprep.subr.mxu0 0.0
        %3212 = vmatpush1.msra.mxu0 0.0
        %3213 = vmatprep.subr.mxu0 0.0
        %3214 = vmatpush1.msra.mxu0 0.0
        %3215 = vmatprep.subr.mxu0 0.0
        %3216 = vmatpush1.msra.mxu0 0.0
        %3217 = vmatprep.subr.mxu0 0.0
        %3218 = vmatpush1.msra.mxu0 0.0
        %3219 = vmatprep.subr.mxu0 0.0
        %3220 = vmatpush1.msra.mxu0 0.0
        %3221 = vmatprep.subr.mxu0 0.0
        %3222 = vmatpush1.msra.mxu0 0.0
        %3223 = vmatprep.subr.mxu0 0.0
        %3224 = vmatpush1.msra.mxu0 0.0
        %3225 = vmatprep.subr.mxu0 0.0
        %3226 = vmatpush1.msra.mxu0 0.0
        %3227 = vmatprep.subr.mxu0 0.0
        %3228 = vmatpush1.msra.mxu0 0.0
        %3229 = vmatprep.subr.mxu0 0.0
        %3230 = vmatpush1.msra.mxu0 0.0
        %3231 = vmatprep.subr.mxu0 0.0
        %3232 = vmatpush1.msra.mxu0 0.0
        %3233 = vmatprep.subr.mxu0 0.0
        %3234 = vmatpush1.msra.mxu0 0.0
        %3235 = vmatprep.subr.mxu0 0.0
        %3236 = vmatpush1.msra.mxu0 0.0
        %3237 = vmatprep.subr.mxu0 0.0
        %3238 = vmatpush1.msra.mxu0 0.0
        %3239 = vmatprep.subr.mxu0 0.0
        %3240 = vmatpush1.msra.mxu0 0.0
        %3241 = vmatprep.subr.mxu0 0.0
        %3242 = vmatpush1.msra.mxu0 0.0
        %3243 = vmatprep.subr.mxu0 0.0
        %3244 = vmatpush1.msra.mxu0 0.0
        %3245 = vmatprep.mubr.f32.mxu0 0.0
        %3246 = vmatmul.mubr.f32.gmra.mrb[0].mxu0 %v3179
        %v3247 = vpop.f32.mrb[0].mxu0
        %v3248 = vadd.f32 %v3177, %v3247
        %v3249 = vpop.f32.mrb[0].mxu0
        %3250 = vdwg.mxu0
        %v3251 = vadd.f32 %v3248, %v3023
        %v3252 = vxor.u32 %v3251, 2147483648
        %v3253 = vmul.f32 %v3252, 1.442695
        %v3254 = vpow.pop %v3253
        %v3255 = vadd.f32 %v3254, 1.0
        %v3256 = vrcp.pop %v3255
        %v3257 = vmul.f32 1.0, %v3256
        %3259 = vrot.lane.b32.xlu0 %v3023, 64
        %v3260 = vpop.permute.xlu0 %3259
        %v3262 = vmul.f32 %v3257, %v3260
        %3264 = vrot.lane.b32.xlu0 %v3262, 64
        %v3265 = vpop.permute.xlu0 %3264
        %v3267 = vadd.f32 %v3248, %v3265
        %v3268 = vtanh.pop %v3267
        %v3269 = vsub.f32 1.0, %v3257
        %3271 = vrot.lane.b32.xlu0 %v3268, 96
        %v3272 = vpop.permute.xlu0 %3271
        %v3274 = vmul.f32 %v3269, %v3272
        %v3275 = vmul.f32 %v3257, %v2946
        %v3276 = vadd.f32 %v3274, %v3275
        %3278 = vrot.lane.b32.xlu0 %v3276, 96
        %v3279 = vpop.permute.xlu0 %3278
        %v3280 = vsel %vm316, %v3279, 0
        %3282 = vmatprep.subr.mxu0 0.0
        %3283 = vmatpush1.msra.mxu0 %v232
        %3284 = vmatprep.subr.mxu0 0.0
        %3285 = vmatpush1.msra.mxu0 %v233
        %3286 = vmatprep.subr.mxu0 0.0
        %3287 = vmatpush1.msra.mxu0 %v234
        %3288 = vmatprep.subr.mxu0 0.0
        %3289 = vmatpush1.msra.mxu0 %v235
        %3290 = vmatprep.subr.mxu0 0.0
        %3291 = vmatpush1.msra.mxu0 0.0
        %3292 = vmatprep.subr.mxu0 0.0
        %3293 = vmatpush1.msra.mxu0 0.0
        %3294 = vmatprep.subr.mxu0 0.0
        %3295 = vmatpush1.msra.mxu0 0.0
        %3296 = vmatprep.subr.mxu0 0.0
        %3297 = vmatpush1.msra.mxu0 0.0
        %3298 = vmatprep.subr.mxu0 0.0
        %3299 = vmatpush1.msra.mxu0 0.0
        %3300 = vmatprep.subr.mxu0 0.0
        %3301 = vmatpush1.msra.mxu0 0.0
        %3302 = vmatprep.subr.mxu0 0.0
        %3303 = vmatpush1.msra.mxu0 0.0
        %3304 = vmatprep.subr.mxu0 0.0
        %3305 = vmatpush1.msra.mxu0 0.0
        %3306 = vmatprep.subr.mxu0 0.0
        %3307 = vmatpush1.msra.mxu0 0.0
        %3308 = vmatprep.subr.mxu0 0.0
        %3309 = vmatpush1.msra.mxu0 0.0
        %3310 = vmatprep.subr.mxu0 0.0
        %3311 = vmatpush1.msra.mxu0 0.0
        %3312 = vmatprep.subr.mxu0 0.0
        %3313 = vmatpush1.msra.mxu0 0.0
        %3314 = vmatprep.subr.mxu0 0.0
        %3315 = vmatpush1.msra.mxu0 0.0
        %3316 = vmatprep.subr.mxu0 0.0
        %3317 = vmatpush1.msra.mxu0 0.0
        %3318 = vmatprep.subr.mxu0 0.0
        %3319 = vmatpush1.msra.mxu0 0.0
        %3320 = vmatprep.subr.mxu0 0.0
        %3321 = vmatpush1.msra.mxu0 0.0
        %3322 = vmatprep.subr.mxu0 0.0
        %3323 = vmatpush1.msra.mxu0 0.0
        %3324 = vmatprep.subr.mxu0 0.0
        %3325 = vmatpush1.msra.mxu0 0.0
        %3326 = vmatprep.subr.mxu0 0.0
        %3327 = vmatpush1.msra.mxu0 0.0
        %3328 = vmatprep.subr.mxu0 0.0
        %3329 = vmatpush1.msra.mxu0 0.0
        %3330 = vmatprep.subr.mxu0 0.0
        %3331 = vmatpush1.msra.mxu0 0.0
        %3332 = vmatprep.subr.mxu0 0.0
        %3333 = vmatpush1.msra.mxu0 0.0
        %3334 = vmatprep.subr.mxu0 0.0
        %3335 = vmatpush1.msra.mxu0 0.0
        %3336 = vmatprep.subr.mxu0 0.0
        %3337 = vmatpush1.msra.mxu0 0.0
        %3338 = vmatprep.subr.mxu0 0.0
        %3339 = vmatpush1.msra.mxu0 0.0
        %3340 = vmatprep.subr.mxu0 0.0
        %3341 = vmatpush1.msra.mxu0 0.0
        %3342 = vmatprep.subr.mxu0 0.0
        %3343 = vmatpush1.msra.mxu0 0.0
        %3344 = vmatprep.subr.mxu0 0.0
        %3345 = vmatpush1.msra.mxu0 0.0
        %3346 = vmatprep.mubr.f32.mxu0 0.0
        %3347 = vmatmul.mubr.f32.gmra.mrb[0].mxu0 %v3280
        %v3348 = vpop.f32.mrb[0].mxu0
        %v3349 = vadd.f32 %v236, %v3348
        %v3350 = vpop.f32.mrb[0].mxu0
        %3351 = vdwg.mxu0
        %v3352 = vsel %vm1723, %v3349, -inf
        %3353 = vmax.xlane.f32.xlu0 %v3352
        %v3354 = vpop.xlane.xlu0 %3353
        %v3355 = vsub.f32 %v3349, %v3354
        %v3356 = vmul.f32 %v3355, 1.442695
        %v3357 = vpow.pop %v3356
        %v3358 = vsel %vm1723, %v3357, 0.0
        %3359 = vadd.xlane.f32.xlu0 %v3358
        %v3360 = vpop.xlane.xlu0 %3359
        %v3361 = vlog2.pop %v3360
        %v3362 = vmul.f32 %v3361, 0.6931472
        %v3363 = vadd.f32 %v3354, %v3362
        %vm3364 = vcmp.eq.s32.totalorder %v1347, 5
        %v3365 = vsub.f32 %v3349, %v3363
        %v3366 = vlaneseq
        %v3367 = vshrl.u32 %v3366, 7
        %v3368 = vsub.s32 0, %v3367
        %v3369 = vrot.slane %v3365, %v3368
        %3372 = vrot.lane.b32.xlu0 %v3062, 32
        %v3373 = vpop.permute.xlu0 %3372
        %3374 = vrot.lane.b32.xlu0 %v3063, 32
        %v3375 = vpop.permute.xlu0 %3374
        %v3376 = vsel %vm316, %v3373, %v3375
        %v3378 = vsel %vm3364, %v3369, %v3376
        %vm3379 = vcmp.eq.f32.partialorder %v3349, %v3354
        %v3380 = vsel %vm3379, %v1345, 48
        %v3381 = vsel %vm1723, %v3380, 2147483647
        %v3382 = vand.u32 %v3381, 65535
        %v3383 = vshra.s32 %v3381, 16
        %v3384 = vcvt.s32.f32 %v3382
        %v3385 = vcvt.s32.f32 %v3383
        %3386 = vmin.xlane.f32.xlu0 %v3385
        %v3387 = vpop.xlane.xlu0 %3386
        %vm3388 = vcmp.eq.f32.partialorder %v3385, %v3387
        %v3389 = vsel %vm3388, %v3384, inf
        %3390 = vmin.xlane.f32.xlu0 %v3389
        %v3391 = vpop.xlane.xlu0 %3390
        %v3392 = vcvt.f32.s32 %v3391
        %v3393 = vcvt.f32.s32 %v3387
        %v3394 = vshll.u32 %v3393, 16
        %v3395 = vadd.s32 %v3394, %v3392
        %vm3396 = vcmp.eq.s32.totalorder %v1345, 5
        %v3397 = vsel %vm3396, %v3395, %v3087
        %vm3398 = vcmask 390144
        %3399 = vst.msk [vmem:[%s202] sm:$0x3f] %vm3398, %v3378
        %vm3400 = vcmask 40960
        %3401 = vst.msk [vmem:[%s194] sm:$0x1] %vm3400, %v3397
        %p3402 = scmp.lt.s32.totalorder %s19, 1
        %s3403 = scalar_select %p3402, %s19, 1
        %s3404 = smul.addr %s3403, 8
        %s3405 = scalar_lea.vmem %s3, %s3404
        %s3406 = sand.u32 %s121, 1
        %s3407 = scalar_lea.sflag [#allocation4], %s3406
        %s3408 = sand.u32 %s121, 1
        %s3409 = scalar_lea.vmem [#allocation3], %s3408
        // Predicated region
        $region33: #{tpu_custom_call.1} parent=31 // pred_check
          %p3410 = pneg %p105
        $region34: #{tpu_custom_call.1} parent=31 // pred_check_branch
          %3412 = sbr.rel (%p3410) target = $region36
        $region35: #{tpu_custom_call.1} parent=31 // pred_region
          _
        $region36: #{tpu_custom_call.1} parent=31 // pred_fallthru
          _
        // Predicated region
        $region37: #{tpu_custom_call.1} parent=31 // pred_check
          %p3413 = pneg %p131
        $region38: #{tpu_custom_call.1} parent=31 // pred_check_branch
          %3415 = sbr.rel (%p3413) target = $region40
        $region39: #{tpu_custom_call.1} parent=31 // pred_region
          %s3417 = ssub.s32 16, 16
          %3418 = vsyncadd %s3407, %s3417
          %s3419 = smul.addr %s19, 16
          %s3420 = scalar_lea.hbm %s4, %s3419
          %s3422 = sshll.u32 %s3409, 4
          %s3423 = int_to_ptr.vmem [resolvable:$true] %s3422
          %3425 = dma.vmem_to_hbm [thread:$0]  %s3423, 16, %s3420, %s3407
        $region40: #{tpu_custom_call.1} parent=31 // pred_fallthru
          _
      $region32: #{tpu_custom_call.1} parent=5 // pred_fallthru
        _
      %p3426 = scmp.le.s32.totalorder 2, %s14
      // Predicated region
      $region41: #{tpu_custom_call.1} parent=5 // pred_check
        %p3427 = pneg %p3426
      $region42: #{tpu_custom_call.1} parent=5 // pred_check_branch
        %3429 = sbr.rel (%p3427) target = $region44
      $region43: #{tpu_custom_call.1} parent=5 // pred_region
        %s3430 = ssub.s32 %s14, 2
        // Predicated region
        $region45: #{tpu_custom_call.1} parent=43 // pred_check
          %p3431 = pneg %p111
        $region46: #{tpu_custom_call.1} parent=43 // pred_check_branch
          %3433 = sbr.rel (%p3431) target = $region48
        $region47: #{tpu_custom_call.1} parent=43 // pred_region
          %p3434 = scmp.lt.s32.totalorder %s20, 1
          %s3435 = scalar_select %p3434, %s20, 1
          %s3436 = smul.addr %s3435, 8
          %s3437 = scalar_lea.vmem %s3, %s3436
        $region48: #{tpu_custom_call.1} parent=43 // pred_fallthru
          _
        // Predicated region
        $region49: #{tpu_custom_call.1} parent=43 // pred_check
          %p3438 = pneg %p137
        $region50: #{tpu_custom_call.1} parent=43 // pred_check_branch
          %3440 = sbr.rel (%p3438) target = $region52
        $region51: #{tpu_custom_call.1} parent=43 // pred_region
          %s3441 = sand.u32 %s122, 1
          %s3442 = scalar_lea.sflag [#allocation4], %s3441
          %s3443 = sand.u32 %s122, 1
          %s3444 = scalar_lea.vmem [#allocation3], %s3443
          %3445 = dma.done %s3442, 16
        $region52: #{tpu_custom_call.1} parent=43 // pred_fallthru
          _
      $region44: #{tpu_custom_call.1} parent=5 // pred_fallthru
        _
    $region6: #{tpu_custom_call.1} parent=1 // loop_footer
      %s18 = sadd.s32 1, %s14
    $region7: #{tpu_custom_call.1} parent=1 // loop_footer_branch
      %13 = sbr.rel target = $region3
    $region8: #{tpu_custom_call.1} parent=1 // loop_exit
      _
    %3446 = vsyncpa [#allocation4], 1
    %s3447 = scalar_lea.sflag [#allocation4], 1
    %3448 = vsyncpa %s3447, 1

</llo_original>
